<compile_context>
chip_gen: v7x
topology: tpu7x:2x2x1
jax: 0.10.0
libtpu: 0.0.40
codegen_flags: <defaults>
</compile_context>

<pallas_src>
import functools

import jax
import jax.numpy as jnp
from jax.experimental import pallas as pl
from jax.experimental.pallas import tpu as pltpu


def vm():
    # whole-array block resident in VMEM
    return pl.BlockSpec(memory_space=pltpu.MemorySpace.VMEM)


# --------------------------------------------------------------------------
# Fused conv (im2col matmul) + ReLU + global-average-pool.
# patches2d: (N*HW, 9C) bf16, conv_w: (9C, F) bf16, conv_b: (1, F) f32
# Tiled over frames; each grid step handles TILE_FRAMES frames.
# --------------------------------------------------------------------------
def _conv_relu_gap_kernel(p_ref, w_ref, b_ref, o_ref, *, frames_per_block, hw):
    y = jnp.dot(p_ref[...], w_ref[...], preferred_element_type=jnp.float32)
    y = jnp.maximum(y + b_ref[...], 0.0)                     # (frames*hw, F) f32
    means = [
        jnp.mean(y[n * hw:(n + 1) * hw, :], axis=0, keepdims=True)
        for n in range(frames_per_block)
    ]
    o_ref[...] = jnp.concatenate(means, axis=0)              # (frames, F) lane-dense


def conv_relu_gap(patches2d, conv_w, conv_b, *, n_frames, hw, tile_frames):
    rows, k = patches2d.shape
    feat = conv_w.shape[1]
    assert rows == n_frames * hw and n_frames % tile_frames == 0
    return pl.pallas_call(
        functools.partial(_conv_relu_gap_kernel,
                          frames_per_block=tile_frames, hw=hw),
        out_shape=jax.ShapeDtypeStruct((n_frames, feat), jnp.float32),
        grid=(n_frames // tile_frames,),
        in_specs=[
            pl.BlockSpec((tile_frames * hw, k), lambda i: (i, 0)),
            pl.BlockSpec((k, feat), lambda i: (0, 0)),
            pl.BlockSpec((1, feat), lambda i: (0, 0)),
        ],
        out_specs=pl.BlockSpec((tile_frames, feat), lambda i: (i, 0)),
        compiler_params=pltpu.CompilerParams(
            dimension_semantics=("parallel",)),
    )(patches2d, conv_w, conv_b)


# --------------------------------------------------------------------------
# Fused Encoder.final (Linear + BatchNorm1d, batch stats) + LSTM input-gate
# projection: out = BN(x @ enc_w + enc_b) @ W_ih_comb + b_comb.
# W_ih_comb / b_comb are gate-interleaved (fwd/bwd) -> (latent, 8H).
# --------------------------------------------------------------------------
def _enc_gates_kernel(x_ref, w_ref, b_ref, g_ref, be_ref, wih_ref, bih_ref,
                      o_ref, *, eps):
    z = jnp.dot(x_ref[...], w_ref[...], preferred_element_type=jnp.float32) + b_ref[...]
    mean = jnp.mean(z, axis=0, keepdims=True)
    var = jnp.mean((z - mean) ** 2, axis=0, keepdims=True)   # biased variance
    z = (z - mean) * jax.lax.rsqrt(var + eps) * g_ref[...] + be_ref[...]
    o_ref[...] = (
        jnp.dot(z, wih_ref[...], preferred_element_type=jnp.float32) + bih_ref[...]
    )


def enc_gates(feats, enc_w, enc_b, gamma, beta, w_ih_comb, b_comb, eps=1e-5):
    n = feats.shape[0]
    g8 = w_ih_comb.shape[1]
    return pl.pallas_call(
        functools.partial(_enc_gates_kernel, eps=eps),
        out_shape=jax.ShapeDtypeStruct((n, g8), jnp.float32),
        in_specs=[vm()] * 7,
        out_specs=vm(),
    )(feats, enc_w, enc_b.reshape(1, -1), gamma.reshape(1, -1),
      beta.reshape(1, -1), w_ih_comb, b_comb)


# --------------------------------------------------------------------------
# Bidirectional LSTM, both directions in one call, one grid step, in-kernel
# fori_loop over time. Gate layout (interleaved): [i_f,i_b,f_f,f_b,g_f,g_b,o_f,o_b]
# xg: (T, B, 8H) with bwd columns already fed the time-reversed sequence.
# whh: (2H, 8H) block-diagonal recurrence weights. out: (T, B, 2H).
# --------------------------------------------------------------------------
def _bilstm_kernel(xg_ref, whh_ref, out_ref, *, hidden_dim, seq_len):
    Hd = hidden_dim
    B = xg_ref.shape[1]
    whh = whh_ref[...]                                       # hoisted out of the loop

    def step(t, carry):
        h, c = carry
        gates = xg_ref[t] + jnp.dot(h, whh, preferred_element_type=jnp.float32)
        i = jax.nn.sigmoid(gates[:, 0:2 * Hd])
        f = jax.nn.sigmoid(gates[:, 2 * Hd:4 * Hd])
        g = jnp.tanh(gates[:, 4 * Hd:6 * Hd])
        o = jax.nn.sigmoid(gates[:, 6 * Hd:8 * Hd])
        c = f * c + i * g
        h = o * jnp.tanh(c)
        out_ref[t] = h
        return (h, c)

    init = (jnp.zeros((B, 2 * Hd), jnp.float32),
            jnp.zeros((B, 2 * Hd), jnp.float32))
    jax.lax.fori_loop(0, seq_len, step, init, unroll=True)


def bilstm(xg, whh_block, hidden_dim):
    T, B, _ = xg.shape
    return pl.pallas_call(
        functools.partial(_bilstm_kernel, hidden_dim=hidden_dim, seq_len=T),
        out_shape=jax.ShapeDtypeStruct((T, B, 2 * hidden_dim), jnp.float32),
        in_specs=[vm(), vm()],
        out_specs=vm(),
    )(xg, whh_block)


# --------------------------------------------------------------------------
# Fused attention: score projection + softmax over T + weighted sum.
# x: (B, T, D), att_w: (1,1,D), att_b: (1,1)  ->  (B, D)
# --------------------------------------------------------------------------
def _attention_kernel(x_ref, w_ref, b_ref, o_ref):
    x = x_ref[...]
    s = jnp.sum(x * w_ref[...], axis=-1) + b_ref[...]        # (B, T)
    s = s - jnp.max(s, axis=-1, keepdims=True)
    e = jnp.exp(s)
    w = e / jnp.sum(e, axis=-1, keepdims=True)
    o_ref[...] = jnp.sum(w[:, :, None] * x, axis=1)


def attention_pool(x, att_w, att_b):
    B, T, D = x.shape
    return pl.pallas_call(
        _attention_kernel,
        out_shape=jax.ShapeDtypeStruct((B, D), jnp.float32),
        in_specs=[vm(), vm(), vm()],
        out_specs=vm(),
    )(x, att_w, att_b)


# --------------------------------------------------------------------------
# Fused process_layers: Linear(2H,H) + BN(H) + ReLU + Linear(H,2H)
# --------------------------------------------------------------------------
def _process_kernel(x_ref, w1_ref, b1_ref, g_ref, be_ref, w2_ref, b2_ref,
                    o_ref, *, eps):
    y = jnp.dot(x_ref[...], w1_ref[...], preferred_element_type=jnp.float32) + b1_ref[...]
    mean = jnp.mean(y, axis=0, keepdims=True)
    var = jnp.mean((y - mean) ** 2, axis=0, keepdims=True)
    y = (y - mean) * jax.lax.rsqrt(var + eps) * g_ref[...] + be_ref[...]
    y = jnp.maximum(y, 0.0)
    o_ref[...] = (
        jnp.dot(y, w2_ref[...], preferred_element_type=jnp.float32) + b2_ref[...]
    )


def process_head(x, w1, b1, gamma, beta, w2, b2, eps=1e-5):
    B = x.shape[0]
    out_dim = w2.shape[1]
    return pl.pallas_call(
        functools.partial(_process_kernel, eps=eps),
        out_shape=jax.ShapeDtypeStruct((B, out_dim), jnp.float32),
        in_specs=[vm()] * 7,
        out_specs=vm(),
    )(x, w1, b1.reshape(1, -1), gamma.reshape(1, -1), beta.reshape(1, -1),
      w2, b2.reshape(1, -1))


# --------------------------------------------------------------------------
# Gate-interleaving helper: (K,4H)x2 -> (K,8H) cols [i_f,i_b,f_f,f_b,g_f,g_b,o_f,o_b]
# --------------------------------------------------------------------------
def _gate_interleave(wf, wb, hidden):
    k = wf.shape[0]
    return jnp.stack(
        [wf.reshape(k, 4, hidden), wb.reshape(k, 4, hidden)], axis=2
    ).reshape(k, 8 * hidden)


# --------------------------------------------------------------------------
# Parameter initialization (deterministic, PyTorch-like uniform fan-in init)
# --------------------------------------------------------------------------
def init_params(key, c, latent_dim, hidden_dim, feat_dim):
    ks = jax.random.split(key, 10)

    def dense_init(k, fan_in, fan_out):
        kw, kb = jax.random.split(k)
        scale = 1.0 / jnp.sqrt(jnp.float32(fan_in))
        w = jax.random.uniform(kw, (fan_in, fan_out), jnp.float32, -scale, scale)
        b = jax.random.uniform(kb, (fan_out,), jnp.float32, -scale, scale)
        return w, b

    p = {}
    # feature-extractor stand-in: 3x3 conv (c -> feat_dim), im2col layout (9*c, feat_dim)
    p["conv_w"], p["conv_b"] = dense_init(ks[0], 9 * c, feat_dim)
    # Encoder.final: Linear(feat_dim, latent_dim) + BatchNorm1d(latent_dim)
    p["enc_w"], p["enc_b"] = dense_init(ks[1], feat_dim, latent_dim)
    p["enc_gamma"] = jnp.ones((latent_dim,), jnp.float32)
    p["enc_beta"] = jnp.zeros((latent_dim,), jnp.float32)
    # Bidirectional single-layer LSTM(latent_dim -> hidden_dim), gate order [i,f,g,o]
    for i, d in enumerate(("fwd", "bwd")):
        kih, khh = jax.random.split(ks[2 + i])
        p[f"w_ih_{d}"], p[f"b_ih_{d}"] = dense_init(kih, latent_dim, 4 * hidden_dim)
        p[f"w_hh_{d}"], p[f"b_hh_{d}"] = dense_init(khh, hidden_dim, 4 * hidden_dim)
    # attention_layer: Linear(2*hidden_dim, 1)
    p["att_w"], p["att_b"] = dense_init(ks[4], 2 * hidden_dim, 1)
    # process_layers: Linear(2H, H) + BN(H) + ReLU + Linear(H, 2H)
    p["p1_w"], p["p1_b"] = dense_init(ks[5], 2 * hidden_dim, hidden_dim)
    p["p1_gamma"] = jnp.ones((hidden_dim,), jnp.float32)
    p["p1_beta"] = jnp.zeros((hidden_dim,), jnp.float32)
    p["p2_w"], p["p2_b"] = dense_init(ks[6], hidden_dim, 2 * hidden_dim)
    return p


# --------------------------------------------------------------------------
# Full ConvLSTM forward pass
# --------------------------------------------------------------------------
def conv_lstm_forward(x, params, hidden_dim):
    B, T, C, H, W = x.shape
    N = B * T
    Hd = hidden_dim

    # ---- im2col for the stand-in 3x3 conv (bf16 MXU operand, f32 accumulate) ----
    # TODO(synk): build the im2col patches inside the conv kernel to avoid the
    # 9x-inflated HBM intermediate at large resolutions.
    xh = jnp.transpose(x.reshape(N, C, H, W), (0, 2, 3, 1))          # NCHW -> NHWC
    xp = jnp.pad(xh, ((0, 0), (1, 1), (1, 1), (0, 0)))               # SAME padding
    patches = jnp.concatenate(
        [xp[:, kh:kh + H, kw:kw + W, :] for kh in range(3) for kw in range(3)],
        axis=-1)                                                     # (N,H,W,9C)
    patches2d = patches.reshape(N * H * W, 9 * C).astype(jnp.bfloat16)

    tile_frames = min(8, N)
    feats = conv_relu_gap(patches2d,
                          params["conv_w"].astype(jnp.bfloat16),
                          params["conv_b"].reshape(1, -1),
                          n_frames=N, hw=H * W, tile_frames=tile_frames)  # (N, F)

    # ---- fused Encoder.final + LSTM input projection ----
    w_ih_comb = _gate_interleave(params["w_ih_fwd"], params["w_ih_bwd"], Hd)
    b_comb = _gate_interleave(
        (params["b_ih_fwd"] + params["b_hh_fwd"])[None, :],
        (params["b_ih_bwd"] + params["b_hh_bwd"])[None, :], Hd)      # (1, 8H)
    xg_all = enc_gates(feats, params["enc_w"], params["enc_b"],
                       params["enc_gamma"], params["enc_beta"],
                       w_ih_comb, b_comb)                            # (N, 8H)

    # rearrange to (T, B, 8H); bwd gate columns receive the time-reversed sequence
    xg4 = xg_all.reshape(B, T, 4, 2, Hd)
    xg = jnp.stack([xg4[:, :, :, 0, :], xg4[:, ::-1, :, 1, :]], axis=3)
    xg = xg.reshape(B, T, 8 * Hd).transpose(1, 0, 2)                 # (T, B, 8H)

    zero_hh = jnp.zeros_like(params["w_hh_fwd"])
    whh_block = jnp.concatenate(
        [_gate_interleave(params["w_hh_fwd"], zero_hh, Hd),
         _gate_interleave(zero_hh, params["w_hh_bwd"], Hd)], axis=0)  # (2H, 8H)

    out_tb = bilstm(xg, whh_block, Hd)                               # (T, B, 2H)
    h_f = out_tb[:, :, :Hd]
    h_b = out_tb[::-1, :, Hd:]                                       # undo time reversal
    lstm_out = jnp.concatenate([h_f, h_b], axis=-1).transpose(1, 0, 2)  # (B, T, 2H)

    # ---- fused attention over the sequence ----
    ctx = attention_pool(lstm_out,
                         params["att_w"].reshape(1, 1, 2 * Hd),
                         params["att_b"].reshape(1, 1))              # (B, 2H)

    # ---- fused process_layers head ----
    y = process_head(ctx, params["p1_w"], params["p1_b"],
                     params["p1_gamma"], params["p1_beta"],
                     params["p2_w"], params["p2_b"])
    return y                                                         # (B, 2H)


if __name__ == "__main__":
    B, T, C, H, W = 2, 8, 3, 16, 16
    LATENT, HIDDEN, FEAT = 32, 32, 128

    key = jax.random.PRNGKey(0)
    kx, kp = jax.random.split(key)
    x = jax.random.normal(kx, (B, T, C, H, W), jnp.float32)
    params = init_params(kp, C, LATENT, HIDDEN, FEAT)

    fwd = jax.jit(functools.partial(conv_lstm_forward, hidden_dim=HIDDEN))
    out = fwd(x, params)
    jax.block_until_ready(out)
    assert out.shape == (B, 2 * HIDDEN), out.shape
    assert bool(jnp.all(jnp.isfinite(out)))
    print("KERNEL_OK")
</pallas_src>

<mosaic_0001>
module attributes {stable_mosaic.version = 11 : i64} {
  func.func @_conv_relu_gap_kernel(%arg0: i32, %arg1: memref<2048x27xbf16, #tpu.memory_space<vmem>>, %arg2: memref<27x128xbf16, #tpu.memory_space<vmem>>, %arg3: memref<1x128xf32, #tpu.memory_space<vmem>>, %arg4: memref<8x128xf32, #tpu.memory_space<vmem>>) attributes {dimension_semantics = [#tpu.dimension_semantics<parallel>], iteration_bounds = array<i64: 2>, scalar_prefetch = 0 : i64, scratch_operands = 0 : i64, tpu.core_type = #tpu.core_type<tc>, window_params = [{transform_indices = @transform_0, window_bounds = array<i64: 2048, 27>}, {pipeline_mode = #tpu.pipeline_mode<synchronous>, transform_indices = @transform_1, window_bounds = array<i64: 27, 128>}, {pipeline_mode = #tpu.pipeline_mode<synchronous>, transform_indices = @transform_2, window_bounds = array<i64: 1, 128>}, {transform_indices = @transform_3, window_bounds = array<i64: 8, 128>}]} {
    %c0 = arith.constant 0 : index
    %c0_0 = arith.constant 0 : index
    %0 = vector.load %arg1[%c0, %c0_0] : memref<2048x27xbf16, #tpu.memory_space<vmem>>, vector<2048x27xbf16>
    %c0_1 = arith.constant 0 : index
    %c0_2 = arith.constant 0 : index
    %1 = vector.load %arg2[%c0_1, %c0_2] : memref<27x128xbf16, #tpu.memory_space<vmem>>, vector<27x128xbf16>
    %cst = arith.constant dense<0.000000e+00> : vector<2048x128xf32>
    %2 = tpu.matmul %0, %1, %cst {dimension_numbers = #tpu.dot_dimension_numbers<[1], [0], [0], [1], [0, 0, 1, 1], [], []>} : vector<2048x27xbf16>, vector<27x128xbf16>, vector<2048x128xf32> -> vector<2048x128xf32>
    %c0_3 = arith.constant 0 : index
    %c0_4 = arith.constant 0 : index
    %3 = vector.load %arg3[%c0_3, %c0_4] : memref<1x128xf32, #tpu.memory_space<vmem>>, vector<1x128xf32>
    %4 = vector.broadcast %3 : vector<1x128xf32> to vector<2048x128xf32>
    %5 = arith.addf %2, %4 : vector<2048x128xf32>
    %cst_5 = arith.constant 0.000000e+00 : f32
    %6 = vector.broadcast %cst_5 : f32 to vector<2048x128xf32>
    %7 = arith.maximumf %5, %6 : vector<2048x128xf32>
    %8 = vector.extract_strided_slice %7 {offsets = [0, 0], sizes = [256, 128], strides = [1, 1]} : vector<2048x128xf32> to vector<256x128xf32>
    %cst_6 = arith.constant dense<0.000000e+00> : vector<128xf32>
    %9 = vector.multi_reduction <add>, %8, %cst_6 [0] : vector<256x128xf32> to vector<128xf32>
    %10 = vector.shape_cast %9 : vector<128xf32> to vector<1x128xf32>
    %cst_7 = arith.constant 2.560000e+02 : f32
    %11 = vector.broadcast %cst_7 : f32 to vector<1x128xf32>
    %12 = arith.divf %10, %11 : vector<1x128xf32>
    %13 = vector.extract_strided_slice %7 {offsets = [256, 0], sizes = [256, 128], strides = [1, 1]} : vector<2048x128xf32> to vector<256x128xf32>
    %cst_8 = arith.constant dense<0.000000e+00> : vector<128xf32>
    %14 = vector.multi_reduction <add>, %13, %cst_8 [0] : vector<256x128xf32> to vector<128xf32>
    %15 = vector.shape_cast %14 : vector<128xf32> to vector<1x128xf32>
    %cst_9 = arith.constant 2.560000e+02 : f32
    %16 = vector.broadcast %cst_9 : f32 to vector<1x128xf32>
    %17 = arith.divf %15, %16 : vector<1x128xf32>
    %18 = vector.extract_strided_slice %7 {offsets = [512, 0], sizes = [256, 128], strides = [1, 1]} : vector<2048x128xf32> to vector<256x128xf32>
    %cst_10 = arith.constant dense<0.000000e+00> : vector<128xf32>
    %19 = vector.multi_reduction <add>, %18, %cst_10 [0] : vector<256x128xf32> to vector<128xf32>
    %20 = vector.shape_cast %19 : vector<128xf32> to vector<1x128xf32>
    %cst_11 = arith.constant 2.560000e+02 : f32
    %21 = vector.broadcast %cst_11 : f32 to vector<1x128xf32>
    %22 = arith.divf %20, %21 : vector<1x128xf32>
    %23 = vector.extract_strided_slice %7 {offsets = [768, 0], sizes = [256, 128], strides = [1, 1]} : vector<2048x128xf32> to vector<256x128xf32>
    %cst_12 = arith.constant dense<0.000000e+00> : vector<128xf32>
    %24 = vector.multi_reduction <add>, %23, %cst_12 [0] : vector<256x128xf32> to vector<128xf32>
    %25 = vector.shape_cast %24 : vector<128xf32> to vector<1x128xf32>
    %cst_13 = arith.constant 2.560000e+02 : f32
    %26 = vector.broadcast %cst_13 : f32 to vector<1x128xf32>
    %27 = arith.divf %25, %26 : vector<1x128xf32>
    %28 = vector.extract_strided_slice %7 {offsets = [1024, 0], sizes = [256, 128], strides = [1, 1]} : vector<2048x128xf32> to vector<256x128xf32>
    %cst_14 = arith.constant dense<0.000000e+00> : vector<128xf32>
    %29 = vector.multi_reduction <add>, %28, %cst_14 [0] : vector<256x128xf32> to vector<128xf32>
    %30 = vector.shape_cast %29 : vector<128xf32> to vector<1x128xf32>
    %cst_15 = arith.constant 2.560000e+02 : f32
    %31 = vector.broadcast %cst_15 : f32 to vector<1x128xf32>
    %32 = arith.divf %30, %31 : vector<1x128xf32>
    %33 = vector.extract_strided_slice %7 {offsets = [1280, 0], sizes = [256, 128], strides = [1, 1]} : vector<2048x128xf32> to vector<256x128xf32>
    %cst_16 = arith.constant dense<0.000000e+00> : vector<128xf32>
    %34 = vector.multi_reduction <add>, %33, %cst_16 [0] : vector<256x128xf32> to vector<128xf32>
    %35 = vector.shape_cast %34 : vector<128xf32> to vector<1x128xf32>
    %cst_17 = arith.constant 2.560000e+02 : f32
    %36 = vector.broadcast %cst_17 : f32 to vector<1x128xf32>
    %37 = arith.divf %35, %36 : vector<1x128xf32>
    %38 = vector.extract_strided_slice %7 {offsets = [1536, 0], sizes = [256, 128], strides = [1, 1]} : vector<2048x128xf32> to vector<256x128xf32>
    %cst_18 = arith.constant dense<0.000000e+00> : vector<128xf32>
    %39 = vector.multi_reduction <add>, %38, %cst_18 [0] : vector<256x128xf32> to vector<128xf32>
    %40 = vector.shape_cast %39 : vector<128xf32> to vector<1x128xf32>
    %cst_19 = arith.constant 2.560000e+02 : f32
    %41 = vector.broadcast %cst_19 : f32 to vector<1x128xf32>
    %42 = arith.divf %40, %41 : vector<1x128xf32>
    %43 = vector.extract_strided_slice %7 {offsets = [1792, 0], sizes = [256, 128], strides = [1, 1]} : vector<2048x128xf32> to vector<256x128xf32>
    %cst_20 = arith.constant dense<0.000000e+00> : vector<128xf32>
    %44 = vector.multi_reduction <add>, %43, %cst_20 [0] : vector<256x128xf32> to vector<128xf32>
    %45 = vector.shape_cast %44 : vector<128xf32> to vector<1x128xf32>
    %cst_21 = arith.constant 2.560000e+02 : f32
    %46 = vector.broadcast %cst_21 : f32 to vector<1x128xf32>
    %47 = arith.divf %45, %46 : vector<1x128xf32>
    %48 = tpu.concatenate %12, %17, %22, %27, %32, %37, %42, %47 in 0 : vector<1x128xf32>, vector<1x128xf32>, vector<1x128xf32>, vector<1x128xf32>, vector<1x128xf32>, vector<1x128xf32>, vector<1x128xf32>, vector<1x128xf32> -> vector<8x128xf32>
    %c0_22 = arith.constant 0 : index
    %c0_23 = arith.constant 0 : index
    %49 = vector.load %arg4[%c0_22, %c0_23] : memref<8x128xf32, #tpu.memory_space<vmem>>, vector<8x128xf32>
    tpu.vector_store %arg4[%c0_22, %c0_23], %48 {strides = array<i32>} : memref<8x128xf32, #tpu.memory_space<vmem>>, vector<8x128xf32>,
    return
  }
  func.func @transform_0(%arg0: i32) -> (i32, i32) {
    %c0_i32 = arith.constant 0 : i32
    %c0_i32_0 = arith.constant 0 : i32
    return %arg0, %c0_i32 : i32, i32
  }
  func.func @transform_1(%arg0: i32) -> (i32, i32) {
    %c0_i32 = arith.constant 0 : i32
    %c0_i32_0 = arith.constant 0 : i32
    %c0_i32_1 = arith.constant 0 : i32
    return %c0_i32, %c0_i32_0 : i32, i32
  }
  func.func @transform_2(%arg0: i32) -> (i32, i32) {
    %c0_i32 = arith.constant 0 : i32
    %c0_i32_0 = arith.constant 0 : i32
    %c0_i32_1 = arith.constant 0 : i32
    return %c0_i32, %c0_i32_0 : i32, i32
  }
  func.func @transform_3(%arg0: i32) -> (i32, i32) {
    %c0_i32 = arith.constant 0 : i32
    %c0_i32_0 = arith.constant 0 : i32
    return %arg0, %c0_i32 : i32, i32
  }
}

module attributes {stable_mosaic.version = 11 : i64} {
  func.func @_enc_gates_kernel(%arg0: memref<16x128xf32, #tpu.memory_space<vmem>>, %arg1: memref<128x32xf32, #tpu.memory_space<vmem>>, %arg2: memref<1x32xf32, #tpu.memory_space<vmem>>, %arg3: memref<1x32xf32, #tpu.memory_space<vmem>>, %arg4: memref<1x32xf32, #tpu.memory_space<vmem>>, %arg5: memref<32x256xf32, #tpu.memory_space<vmem>>, %arg6: memref<1x256xf32, #tpu.memory_space<vmem>>, %arg7: memref<16x256xf32, #tpu.memory_space<vmem>>) attributes {dimension_semantics = [], scalar_prefetch = 0 : i64, scratch_operands = 0 : i64, tpu.core_type = #tpu.core_type<tc>} {
    %c0 = arith.constant 0 : index
    %c0_0 = arith.constant 0 : index
    %0 = vector.load %arg0[%c0, %c0_0] : memref<16x128xf32, #tpu.memory_space<vmem>>, vector<16x128xf32>
    %c0_1 = arith.constant 0 : index
    %c0_2 = arith.constant 0 : index
    %1 = vector.load %arg1[%c0_1, %c0_2] : memref<128x32xf32, #tpu.memory_space<vmem>>, vector<128x32xf32>
    %cst = arith.constant dense<0.000000e+00> : vector<16x32xf32>
    %2 = tpu.matmul %0, %1, %cst {dimension_numbers = #tpu.dot_dimension_numbers<[1], [0], [0], [1], [0, 0, 1, 1], [], []>} : vector<16x128xf32>, vector<128x32xf32>, vector<16x32xf32> -> vector<16x32xf32>
    %c0_3 = arith.constant 0 : index
    %c0_4 = arith.constant 0 : index
    %3 = vector.load %arg2[%c0_3, %c0_4] : memref<1x32xf32, #tpu.memory_space<vmem>>, vector<1x32xf32>
    %4 = vector.broadcast %3 : vector<1x32xf32> to vector<16x32xf32>
    %5 = arith.addf %2, %4 : vector<16x32xf32>
    %cst_5 = arith.constant dense<0.000000e+00> : vector<32xf32>
    %6 = vector.multi_reduction <add>, %5, %cst_5 [0] : vector<16x32xf32> to vector<32xf32>
    %7 = vector.shape_cast %6 : vector<32xf32> to vector<1x32xf32>
    %cst_6 = arith.constant 1.600000e+01 : f32
    %8 = vector.broadcast %cst_6 : f32 to vector<1x32xf32>
    %9 = arith.divf %7, %8 : vector<1x32xf32>
    %10 = vector.broadcast %9 : vector<1x32xf32> to vector<16x32xf32>
    %11 = arith.subf %5, %10 : vector<16x32xf32>
    %12 = arith.mulf %11, %11 : vector<16x32xf32>
    %cst_7 = arith.constant dense<0.000000e+00> : vector<32xf32>
    %13 = vector.multi_reduction <add>, %12, %cst_7 [0] : vector<16x32xf32> to vector<32xf32>
    %14 = vector.shape_cast %13 : vector<32xf32> to vector<1x32xf32>
    %cst_8 = arith.constant 1.600000e+01 : f32
    %15 = vector.broadcast %cst_8 : f32 to vector<1x32xf32>
    %16 = arith.divf %14, %15 : vector<1x32xf32>
    %17 = vector.broadcast %9 : vector<1x32xf32> to vector<16x32xf32>
    %18 = arith.subf %5, %17 : vector<16x32xf32>
    %cst_9 = arith.constant 9.99999974E-6 : f32
    %19 = vector.broadcast %cst_9 : f32 to vector<1x32xf32>
    %20 = arith.addf %16, %19 : vector<1x32xf32>
    %21 = math.rsqrt %20 : vector<1x32xf32>
    %22 = vector.broadcast %21 : vector<1x32xf32> to vector<16x32xf32>
    %23 = arith.mulf %18, %22 : vector<16x32xf32>
    %c0_10 = arith.constant 0 : index
    %c0_11 = arith.constant 0 : index
    %24 = vector.load %arg3[%c0_10, %c0_11] : memref<1x32xf32, #tpu.memory_space<vmem>>, vector<1x32xf32>
    %25 = vector.broadcast %24 : vector<1x32xf32> to vector<16x32xf32>
    %26 = arith.mulf %23, %25 : vector<16x32xf32>
    %c0_12 = arith.constant 0 : index
    %c0_13 = arith.constant 0 : index
    %27 = vector.load %arg4[%c0_12, %c0_13] : memref<1x32xf32, #tpu.memory_space<vmem>>, vector<1x32xf32>
    %28 = vector.broadcast %27 : vector<1x32xf32> to vector<16x32xf32>
    %29 = arith.addf %26, %28 : vector<16x32xf32>
    %c0_14 = arith.constant 0 : index
    %c0_15 = arith.constant 0 : index
    %30 = vector.load %arg5[%c0_14, %c0_15] : memref<32x256xf32, #tpu.memory_space<vmem>>, vector<32x256xf32>
    %cst_16 = arith.constant dense<0.000000e+00> : vector<16x256xf32>
    %31 = tpu.matmul %29, %30, %cst_16 {dimension_numbers = #tpu.dot_dimension_numbers<[1], [0], [0], [1], [0, 0, 1, 1], [], []>} : vector<16x32xf32>, vector<32x256xf32>, vector<16x256xf32> -> vector<16x256xf32>
    %c0_17 = arith.constant 0 : index
    %c0_18 = arith.constant 0 : index
    %32 = vector.load %arg6[%c0_17, %c0_18] : memref<1x256xf32, #tpu.memory_space<vmem>>, vector<1x256xf32>
    %33 = vector.broadcast %32 : vector<1x256xf32> to vector<16x256xf32>
    %34 = arith.addf %31, %33 : vector<16x256xf32>
    %c0_19 = arith.constant 0 : index
    %c0_20 = arith.constant 0 : index
    %35 = vector.load %arg7[%c0_19, %c0_20] : memref<16x256xf32, #tpu.memory_space<vmem>>, vector<16x256xf32>
    tpu.vector_store %arg7[%c0_19, %c0_20], %34 {strides = array<i32>} : memref<16x256xf32, #tpu.memory_space<vmem>>, vector<16x256xf32>,
    return
  }
}

module attributes {stable_mosaic.version = 11 : i64} {
  func.func @_bilstm_kernel(%arg0: memref<8x2x256xf32, #tpu.memory_space<vmem>>, %arg1: memref<64x256xf32, #tpu.memory_space<vmem>>, %arg2: memref<8x2x64xf32, #tpu.memory_space<vmem>>) attributes {dimension_semantics = [], scalar_prefetch = 0 : i64, scratch_operands = 0 : i64, tpu.core_type = #tpu.core_type<tc>} {
    %c0 = arith.constant 0 : index
    %c0_0 = arith.constant 0 : index
    %0 = vector.load %arg1[%c0, %c0_0] : memref<64x256xf32, #tpu.memory_space<vmem>>, vector<64x256xf32>
    %cst = arith.constant 0.000000e+00 : f32
    %1 = vector.broadcast %cst : f32 to vector<2x64xf32>
    %cst_1 = arith.constant 0.000000e+00 : f32
    %2 = vector.broadcast %cst_1 : f32 to vector<2x64xf32>
    %c0_i32 = arith.constant 0 : i32
    %3 = arith.index_cast %c0_i32 : i32 to index
    %c0_2 = arith.constant 0 : index
    %c0_3 = arith.constant 0 : index
    %4 = vector.load %arg0[%3, %c0_2, %c0_3] : memref<8x2x256xf32, #tpu.memory_space<vmem>>, vector<1x2x256xf32>
    %5 = vector.shape_cast %4 : vector<1x2x256xf32> to vector<2x256xf32>
    %cst_4 = arith.constant dense<0.000000e+00> : vector<2x256xf32>
    %6 = tpu.matmul %1, %0, %cst_4 {dimension_numbers = #tpu.dot_dimension_numbers<[1], [0], [0], [1], [0, 0, 1, 1], [], []>} : vector<2x64xf32>, vector<64x256xf32>, vector<2x256xf32> -> vector<2x256xf32>
    %7 = arith.addf %5, %6 : vector<2x256xf32>
    %8 = vector.extract_strided_slice %7 {offsets = [0, 0], sizes = [2, 64], strides = [1, 1]} : vector<2x256xf32> to vector<2x64xf32>
    %9 = arith.negf %8 : vector<2x64xf32>
    %10 = math.exp %9 : vector<2x64xf32>
    %cst_5 = arith.constant 1.000000e+00 : f32
    %11 = vector.broadcast %cst_5 : f32 to vector<2x64xf32>
    %12 = arith.addf %11, %10 : vector<2x64xf32>
    %13 = arith.divf %11, %12 : vector<2x64xf32>
    %14 = vector.extract_strided_slice %7 {offsets = [0, 64], sizes = [2, 64], strides = [1, 1]} : vector<2x256xf32> to vector<2x64xf32>
    %15 = arith.negf %14 : vector<2x64xf32>
    %16 = math.exp %15 : vector<2x64xf32>
    %cst_6 = arith.constant 1.000000e+00 : f32
    %17 = vector.broadcast %cst_6 : f32 to vector<2x64xf32>
    %18 = arith.addf %17, %16 : vector<2x64xf32>
    %19 = arith.divf %17, %18 : vector<2x64xf32>
    %20 = vector.extract_strided_slice %7 {offsets = [0, 128], sizes = [2, 64], strides = [1, 1]} : vector<2x256xf32> to vector<2x64xf32>
    %21 = math.tanh %20 : vector<2x64xf32>
    %22 = vector.extract_strided_slice %7 {offsets = [0, 192], sizes = [2, 64], strides = [1, 1]} : vector<2x256xf32> to vector<2x64xf32>
    %23 = arith.negf %22 : vector<2x64xf32>
    %24 = math.exp %23 : vector<2x64xf32>
    %cst_7 = arith.constant 1.000000e+00 : f32
    %25 = vector.broadcast %cst_7 : f32 to vector<2x64xf32>
    %26 = arith.addf %25, %24 : vector<2x64xf32>
    %27 = arith.divf %25, %26 : vector<2x64xf32>
    %28 = arith.mulf %19, %2 : vector<2x64xf32>
    %29 = arith.mulf %13, %21 : vector<2x64xf32>
    %30 = arith.addf %28, %29 : vector<2x64xf32>
    %31 = math.tanh %30 : vector<2x64xf32>
    %32 = arith.mulf %27, %31 : vector<2x64xf32>
    %33 = arith.index_cast %c0_i32 : i32 to index
    %c0_8 = arith.constant 0 : index
    %c0_9 = arith.constant 0 : index
    %34 = vector.load %arg2[%33, %c0_8, %c0_9] : memref<8x2x64xf32, #tpu.memory_space<vmem>>, vector<1x2x64xf32>
    %35 = vector.shape_cast %34 : vector<1x2x64xf32> to vector<2x64xf32>
    %36 = vector.shape_cast %32 : vector<2x64xf32> to vector<1x2x64xf32>
    tpu.vector_store %arg2[%33, %c0_8, %c0_9], %36 {strides = array<i32>} : memref<8x2x64xf32, #tpu.memory_space<vmem>>, vector<1x2x64xf32>,
    %c1_i32 = arith.constant 1 : i32
    %37 = arith.index_cast %c1_i32 : i32 to index
    %c0_10 = arith.constant 0 : index
    %c0_11 = arith.constant 0 : index
    %38 = vector.load %arg0[%37, %c0_10, %c0_11] : memref<8x2x256xf32, #tpu.memory_space<vmem>>, vector<1x2x256xf32>
    %39 = vector.shape_cast %38 : vector<1x2x256xf32> to vector<2x256xf32>
    %cst_12 = arith.constant dense<0.000000e+00> : vector<2x256xf32>
    %40 = tpu.matmul %32, %0, %cst_12 {dimension_numbers = #tpu.dot_dimension_numbers<[1], [0], [0], [1], [0, 0, 1, 1], [], []>} : vector<2x64xf32>, vector<64x256xf32>, vector<2x256xf32> -> vector<2x256xf32>
    %41 = arith.addf %39, %40 : vector<2x256xf32>
    %42 = vector.extract_strided_slice %41 {offsets = [0, 0], sizes = [2, 64], strides = [1, 1]} : vector<2x256xf32> to vector<2x64xf32>
    %43 = arith.negf %42 : vector<2x64xf32>
    %44 = math.exp %43 : vector<2x64xf32>
    %cst_13 = arith.constant 1.000000e+00 : f32
    %45 = vector.broadcast %cst_13 : f32 to vector<2x64xf32>
    %46 = arith.addf %45, %44 : vector<2x64xf32>
    %47 = arith.divf %45, %46 : vector<2x64xf32>
    %48 = vector.extract_strided_slice %41 {offsets = [0, 64], sizes = [2, 64], strides = [1, 1]} : vector<2x256xf32> to vector<2x64xf32>
    %49 = arith.negf %48 : vector<2x64xf32>
    %50 = math.exp %49 : vector<2x64xf32>
    %cst_14 = arith.constant 1.000000e+00 : f32
    %51 = vector.broadcast %cst_14 : f32 to vector<2x64xf32>
    %52 = arith.addf %51, %50 : vector<2x64xf32>
    %53 = arith.divf %51, %52 : vector<2x64xf32>
    %54 = vector.extract_strided_slice %41 {offsets = [0, 128], sizes = [2, 64], strides = [1, 1]} : vector<2x256xf32> to vector<2x64xf32>
    %55 = math.tanh %54 : vector<2x64xf32>
    %56 = vector.extract_strided_slice %41 {offsets = [0, 192], sizes = [2, 64], strides = [1, 1]} : vector<2x256xf32> to vector<2x64xf32>
    %57 = arith.negf %56 : vector<2x64xf32>
    %58 = math.exp %57 : vector<2x64xf32>
    %cst_15 = arith.constant 1.000000e+00 : f32
    %59 = vector.broadcast %cst_15 : f32 to vector<2x64xf32>
    %60 = arith.addf %59, %58 : vector<2x64xf32>
    %61 = arith.divf %59, %60 : vector<2x64xf32>
    %62 = arith.mulf %53, %30 : vector<2x64xf32>
    %63 = arith.mulf %47, %55 : vector<2x64xf32>
    %64 = arith.addf %62, %63 : vector<2x64xf32>
    %65 = math.tanh %64 : vector<2x64xf32>
    %66 = arith.mulf %61, %65 : vector<2x64xf32>
    %67 = arith.index_cast %c1_i32 : i32 to index
    %c0_16 = arith.constant 0 : index
    %c0_17 = arith.constant 0 : index
    %68 = vector.load %arg2[%67, %c0_16, %c0_17] : memref<8x2x64xf32, #tpu.memory_space<vmem>>, vector<1x2x64xf32>
    %69 = vector.shape_cast %68 : vector<1x2x64xf32> to vector<2x64xf32>
    %70 = vector.shape_cast %66 : vector<2x64xf32> to vector<1x2x64xf32>
    tpu.vector_store %arg2[%67, %c0_16, %c0_17], %70 {strides = array<i32>} : memref<8x2x64xf32, #tpu.memory_space<vmem>>, vector<1x2x64xf32>,
    %c2_i32 = arith.constant 2 : i32
    %71 = arith.index_cast %c2_i32 : i32 to index
    %c0_18 = arith.constant 0 : index
    %c0_19 = arith.constant 0 : index
    %72 = vector.load %arg0[%71, %c0_18, %c0_19] : memref<8x2x256xf32, #tpu.memory_space<vmem>>, vector<1x2x256xf32>
    %73 = vector.shape_cast %72 : vector<1x2x256xf32> to vector<2x256xf32>
    %cst_20 = arith.constant dense<0.000000e+00> : vector<2x256xf32>
    %74 = tpu.matmul %66, %0, %cst_20 {dimension_numbers = #tpu.dot_dimension_numbers<[1], [0], [0], [1], [0, 0, 1, 1], [], []>} : vector<2x64xf32>, vector<64x256xf32>, vector<2x256xf32> -> vector<2x256xf32>
    %75 = arith.addf %73, %74 : vector<2x256xf32>
    %76 = vector.extract_strided_slice %75 {offsets = [0, 0], sizes = [2, 64], strides = [1, 1]} : vector<2x256xf32> to vector<2x64xf32>
    %77 = arith.negf %76 : vector<2x64xf32>
    %78 = math.exp %77 : vector<2x64xf32>
    %cst_21 = arith.constant 1.000000e+00 : f32
    %79 = vector.broadcast %cst_21 : f32 to vector<2x64xf32>
    %80 = arith.addf %79, %78 : vector<2x64xf32>
    %81 = arith.divf %79, %80 : vector<2x64xf32>
    %82 = vector.extract_strided_slice %75 {offsets = [0, 64], sizes = [2, 64], strides = [1, 1]} : vector<2x256xf32> to vector<2x64xf32>
    %83 = arith.negf %82 : vector<2x64xf32>
    %84 = math.exp %83 : vector<2x64xf32>
    %cst_22 = arith.constant 1.000000e+00 : f32
    %85 = vector.broadcast %cst_22 : f32 to vector<2x64xf32>
    %86 = arith.addf %85, %84 : vector<2x64xf32>
    %87 = arith.divf %85, %86 : vector<2x64xf32>
    %88 = vector.extract_strided_slice %75 {offsets = [0, 128], sizes = [2, 64], strides = [1, 1]} : vector<2x256xf32> to vector<2x64xf32>
    %89 = math.tanh %88 : vector<2x64xf32>
    %90 = vector.extract_strided_slice %75 {offsets = [0, 192], sizes = [2, 64], strides = [1, 1]} : vector<2x256xf32> to vector<2x64xf32>
    %91 = arith.negf %90 : vector<2x64xf32>
    %92 = math.exp %91 : vector<2x64xf32>
    %cst_23 = arith.constant 1.000000e+00 : f32
    %93 = vector.broadcast %cst_23 : f32 to vector<2x64xf32>
    %94 = arith.addf %93, %92 : vector<2x64xf32>
    %95 = arith.divf %93, %94 : vector<2x64xf32>
    %96 = arith.mulf %87, %64 : vector<2x64xf32>
    %97 = arith.mulf %81, %89 : vector<2x64xf32>
    %98 = arith.addf %96, %97 : vector<2x64xf32>
    %99 = math.tanh %98 : vector<2x64xf32>
    %100 = arith.mulf %95, %99 : vector<2x64xf32>
    %101 = arith.index_cast %c2_i32 : i32 to index
    %c0_24 = arith.constant 0 : index
    %c0_25 = arith.constant 0 : index
    %102 = vector.load %arg2[%101, %c0_24, %c0_25] : memref<8x2x64xf32, #tpu.memory_space<vmem>>, vector<1x2x64xf32>
    %103 = vector.shape_cast %102 : vector<1x2x64xf32> to vector<2x64xf32>
    %104 = vector.shape_cast %100 : vector<2x64xf32> to vector<1x2x64xf32>
    tpu.vector_store %arg2[%101, %c0_24, %c0_25], %104 {strides = array<i32>} : memref<8x2x64xf32, #tpu.memory_space<vmem>>, vector<1x2x64xf32>,
    %c3_i32 = arith.constant 3 : i32
    %105 = arith.index_cast %c3_i32 : i32 to index
    %c0_26 = arith.constant 0 : index
    %c0_27 = arith.constant 0 : index
    %106 = vector.load %arg0[%105, %c0_26, %c0_27] : memref<8x2x256xf32, #tpu.memory_space<vmem>>, vector<1x2x256xf32>
    %107 = vector.shape_cast %106 : vector<1x2x256xf32> to vector<2x256xf32>
    %cst_28 = arith.constant dense<0.000000e+00> : vector<2x256xf32>
    %108 = tpu.matmul %100, %0, %cst_28 {dimension_numbers = #tpu.dot_dimension_numbers<[1], [0], [0], [1], [0, 0, 1, 1], [], []>} : vector<2x64xf32>, vector<64x256xf32>, vector<2x256xf32> -> vector<2x256xf32>
    %109 = arith.addf %107, %108 : vector<2x256xf32>
    %110 = vector.extract_strided_slice %109 {offsets = [0, 0], sizes = [2, 64], strides = [1, 1]} : vector<2x256xf32> to vector<2x64xf32>
    %111 = arith.negf %110 : vector<2x64xf32>
    %112 = math.exp %111 : vector<2x64xf32>
    %cst_29 = arith.constant 1.000000e+00 : f32
    %113 = vector.broadcast %cst_29 : f32 to vector<2x64xf32>
    %114 = arith.addf %113, %112 : vector<2x64xf32>
    %115 = arith.divf %113, %114 : vector<2x64xf32>
    %116 = vector.extract_strided_slice %109 {offsets = [0, 64], sizes = [2, 64], strides = [1, 1]} : vector<2x256xf32> to vector<2x64xf32>
    %117 = arith.negf %116 : vector<2x64xf32>
    %118 = math.exp %117 : vector<2x64xf32>
    %cst_30 = arith.constant 1.000000e+00 : f32
    %119 = vector.broadcast %cst_30 : f32 to vector<2x64xf32>
    %120 = arith.addf %119, %118 : vector<2x64xf32>
    %121 = arith.divf %119, %120 : vector<2x64xf32>
    %122 = vector.extract_strided_slice %109 {offsets = [0, 128], sizes = [2, 64], strides = [1, 1]} : vector<2x256xf32> to vector<2x64xf32>
    %123 = math.tanh %122 : vector<2x64xf32>
    %124 = vector.extract_strided_slice %109 {offsets = [0, 192], sizes = [2, 64], strides = [1, 1]} : vector<2x256xf32> to vector<2x64xf32>
    %125 = arith.negf %124 : vector<2x64xf32>
    %126 = math.exp %125 : vector<2x64xf32>
    %cst_31 = arith.constant 1.000000e+00 : f32
    %127 = vector.broadcast %cst_31 : f32 to vector<2x64xf32>
    %128 = arith.addf %127, %126 : vector<2x64xf32>
    %129 = arith.divf %127, %128 : vector<2x64xf32>
    %130 = arith.mulf %121, %98 : vector<2x64xf32>
    %131 = arith.mulf %115, %123 : vector<2x64xf32>
    %132 = arith.addf %130, %131 : vector<2x64xf32>
    %133 = math.tanh %132 : vector<2x64xf32>
    %134 = arith.mulf %129, %133 : vector<2x64xf32>
    %135 = arith.index_cast %c3_i32 : i32 to index
    %c0_32 = arith.constant 0 : index
    %c0_33 = arith.constant 0 : index
    %136 = vector.load %arg2[%135, %c0_32, %c0_33] : memref<8x2x64xf32, #tpu.memory_space<vmem>>, vector<1x2x64xf32>
    %137 = vector.shape_cast %136 : vector<1x2x64xf32> to vector<2x64xf32>
    %138 = vector.shape_cast %134 : vector<2x64xf32> to vector<1x2x64xf32>
    tpu.vector_store %arg2[%135, %c0_32, %c0_33], %138 {strides = array<i32>} : memref<8x2x64xf32, #tpu.memory_space<vmem>>, vector<1x2x64xf32>,
    %c4_i32 = arith.constant 4 : i32
    %139 = arith.index_cast %c4_i32 : i32 to index
    %c0_34 = arith.constant 0 : index
    %c0_35 = arith.constant 0 : index
    %140 = vector.load %arg0[%139, %c0_34, %c0_35] : memref<8x2x256xf32, #tpu.memory_space<vmem>>, vector<1x2x256xf32>
    %141 = vector.shape_cast %140 : vector<1x2x256xf32> to vector<2x256xf32>
    %cst_36 = arith.constant dense<0.000000e+00> : vector<2x256xf32>
    %142 = tpu.matmul %134, %0, %cst_36 {dimension_numbers = #tpu.dot_dimension_numbers<[1], [0], [0], [1], [0, 0, 1, 1], [], []>} : vector<2x64xf32>, vector<64x256xf32>, vector<2x256xf32> -> vector<2x256xf32>
    %143 = arith.addf %141, %142 : vector<2x256xf32>
    %144 = vector.extract_strided_slice %143 {offsets = [0, 0], sizes = [2, 64], strides = [1, 1]} : vector<2x256xf32> to vector<2x64xf32>
    %145 = arith.negf %144 : vector<2x64xf32>
    %146 = math.exp %145 : vector<2x64xf32>
    %cst_37 = arith.constant 1.000000e+00 : f32
    %147 = vector.broadcast %cst_37 : f32 to vector<2x64xf32>
    %148 = arith.addf %147, %146 : vector<2x64xf32>
    %149 = arith.divf %147, %148 : vector<2x64xf32>
    %150 = vector.extract_strided_slice %143 {offsets = [0, 64], sizes = [2, 64], strides = [1, 1]} : vector<2x256xf32> to vector<2x64xf32>
    %151 = arith.negf %150 : vector<2x64xf32>
    %152 = math.exp %151 : vector<2x64xf32>
    %cst_38 = arith.constant 1.000000e+00 : f32
    %153 = vector.broadcast %cst_38 : f32 to vector<2x64xf32>
    %154 = arith.addf %153, %152 : vector<2x64xf32>
    %155 = arith.divf %153, %154 : vector<2x64xf32>
    %156 = vector.extract_strided_slice %143 {offsets = [0, 128], sizes = [2, 64], strides = [1, 1]} : vector<2x256xf32> to vector<2x64xf32>
    %157 = math.tanh %156 : vector<2x64xf32>
    %158 = vector.extract_strided_slice %143 {offsets = [0, 192], sizes = [2, 64], strides = [1, 1]} : vector<2x256xf32> to vector<2x64xf32>
    %159 = arith.negf %158 : vector<2x64xf32>
    %160 = math.exp %159 : vector<2x64xf32>
    %cst_39 = arith.constant 1.000000e+00 : f32
    %161 = vector.broadcast %cst_39 : f32 to vector<2x64xf32>
    %162 = arith.addf %161, %160 : vector<2x64xf32>
    %163 = arith.divf %161, %162 : vector<2x64xf32>
    %164 = arith.mulf %155, %132 : vector<2x64xf32>
    %165 = arith.mulf %149, %157 : vector<2x64xf32>
    %166 = arith.addf %164, %165 : vector<2x64xf32>
    %167 = math.tanh %166 : vector<2x64xf32>
    %168 = arith.mulf %163, %167 : vector<2x64xf32>
    %169 = arith.index_cast %c4_i32 : i32 to index
    %c0_40 = arith.constant 0 : index
    %c0_41 = arith.constant 0 : index
    %170 = vector.load %arg2[%169, %c0_40, %c0_41] : memref<8x2x64xf32, #tpu.memory_space<vmem>>, vector<1x2x64xf32>
    %171 = vector.shape_cast %170 : vector<1x2x64xf32> to vector<2x64xf32>
    %172 = vector.shape_cast %168 : vector<2x64xf32> to vector<1x2x64xf32>
    tpu.vector_store %arg2[%169, %c0_40, %c0_41], %172 {strides = array<i32>} : memref<8x2x64xf32, #tpu.memory_space<vmem>>, vector<1x2x64xf32>,
    %c5_i32 = arith.constant 5 : i32
    %173 = arith.index_cast %c5_i32 : i32 to index
    %c0_42 = arith.constant 0 : index
    %c0_43 = arith.constant 0 : index
    %174 = vector.load %arg0[%173, %c0_42, %c0_43] : memref<8x2x256xf32, #tpu.memory_space<vmem>>, vector<1x2x256xf32>
    %175 = vector.shape_cast %174 : vector<1x2x256xf32> to vector<2x256xf32>
    %cst_44 = arith.constant dense<0.000000e+00> : vector<2x256xf32>
    %176 = tpu.matmul %168, %0, %cst_44 {dimension_numbers = #tpu.dot_dimension_numbers<[1], [0], [0], [1], [0, 0, 1, 1], [], []>} : vector<2x64xf32>, vector<64x256xf32>, vector<2x256xf32> -> vector<2x256xf32>
    %177 = arith.addf %175, %176 : vector<2x256xf32>
    %178 = vector.extract_strided_slice %177 {offsets = [0, 0], sizes = [2, 64], strides = [1, 1]} : vector<2x256xf32> to vector<2x64xf32>
    %179 = arith.negf %178 : vector<2x64xf32>
    %180 = math.exp %179 : vector<2x64xf32>
    %cst_45 = arith.constant 1.000000e+00 : f32
    %181 = vector.broadcast %cst_45 : f32 to vector<2x64xf32>
    %182 = arith.addf %181, %180 : vector<2x64xf32>
    %183 = arith.divf %181, %182 : vector<2x64xf32>
    %184 = vector.extract_strided_slice %177 {offsets = [0, 64], sizes = [2, 64], strides = [1, 1]} : vector<2x256xf32> to vector<2x64xf32>
    %185 = arith.negf %184 : vector<2x64xf32>
    %186 = math.exp %185 : vector<2x64xf32>
    %cst_46 = arith.constant 1.000000e+00 : f32
    %187 = vector.broadcast %cst_46 : f32 to vector<2x64xf32>
    %188 = arith.addf %187, %186 : vector<2x64xf32>
    %189 = arith.divf %187, %188 : vector<2x64xf32>
    %190 = vector.extract_strided_slice %177 {offsets = [0, 128], sizes = [2, 64], strides = [1, 1]} : vector<2x256xf32> to vector<2x64xf32>
    %191 = math.tanh %190 : vector<2x64xf32>
    %192 = vector.extract_strided_slice %177 {offsets = [0, 192], sizes = [2, 64], strides = [1, 1]} : vector<2x256xf32> to vector<2x64xf32>
    %193 = arith.negf %192 : vector<2x64xf32>
    %194 = math.exp %193 : vector<2x64xf32>
    %cst_47 = arith.constant 1.000000e+00 : f32
    %195 = vector.broadcast %cst_47 : f32 to vector<2x64xf32>
    %196 = arith.addf %195, %194 : vector<2x64xf32>
    %197 = arith.divf %195, %196 : vector<2x64xf32>
    %198 = arith.mulf %189, %166 : vector<2x64xf32>
    %199 = arith.mulf %183, %191 : vector<2x64xf32>
    %200 = arith.addf %198, %199 : vector<2x64xf32>
    %201 = math.tanh %200 : vector<2x64xf32>
    %202 = arith.mulf %197, %201 : vector<2x64xf32>
    %203 = arith.index_cast %c5_i32 : i32 to index
    %c0_48 = arith.constant 0 : index
    %c0_49 = arith.constant 0 : index
    %204 = vector.load %arg2[%203, %c0_48, %c0_49] : memref<8x2x64xf32, #tpu.memory_space<vmem>>, vector<1x2x64xf32>
    %205 = vector.shape_cast %204 : vector<1x2x64xf32> to vector<2x64xf32>
    %206 = vector.shape_cast %202 : vector<2x64xf32> to vector<1x2x64xf32>
    tpu.vector_store %arg2[%203, %c0_48, %c0_49], %206 {strides = array<i32>} : memref<8x2x64xf32, #tpu.memory_space<vmem>>, vector<1x2x64xf32>,
    %c6_i32 = arith.constant 6 : i32
    %207 = arith.index_cast %c6_i32 : i32 to index
    %c0_50 = arith.constant 0 : index
    %c0_51 = arith.constant 0 : index
    %208 = vector.load %arg0[%207, %c0_50, %c0_51] : memref<8x2x256xf32, #tpu.memory_space<vmem>>, vector<1x2x256xf32>
    %209 = vector.shape_cast %208 : vector<1x2x256xf32> to vector<2x256xf32>
    %cst_52 = arith.constant dense<0.000000e+00> : vector<2x256xf32>
    %210 = tpu.matmul %202, %0, %cst_52 {dimension_numbers = #tpu.dot_dimension_numbers<[1], [0], [0], [1], [0, 0, 1, 1], [], []>} : vector<2x64xf32>, vector<64x256xf32>, vector<2x256xf32> -> vector<2x256xf32>
    %211 = arith.addf %209, %210 : vector<2x256xf32>
    %212 = vector.extract_strided_slice %211 {offsets = [0, 0], sizes = [2, 64], strides = [1, 1]} : vector<2x256xf32> to vector<2x64xf32>
    %213 = arith.negf %212 : vector<2x64xf32>
    %214 = math.exp %213 : vector<2x64xf32>
    %cst_53 = arith.constant 1.000000e+00 : f32
    %215 = vector.broadcast %cst_53 : f32 to vector<2x64xf32>
    %216 = arith.addf %215, %214 : vector<2x64xf32>
    %217 = arith.divf %215, %216 : vector<2x64xf32>
    %218 = vector.extract_strided_slice %211 {offsets = [0, 64], sizes = [2, 64], strides = [1, 1]} : vector<2x256xf32> to vector<2x64xf32>
    %219 = arith.negf %218 : vector<2x64xf32>
    %220 = math.exp %219 : vector<2x64xf32>
    %cst_54 = arith.constant 1.000000e+00 : f32
    %221 = vector.broadcast %cst_54 : f32 to vector<2x64xf32>
    %222 = arith.addf %221, %220 : vector<2x64xf32>
    %223 = arith.divf %221, %222 : vector<2x64xf32>
    %224 = vector.extract_strided_slice %211 {offsets = [0, 128], sizes = [2, 64], strides = [1, 1]} : vector<2x256xf32> to vector<2x64xf32>
    %225 = math.tanh %224 : vector<2x64xf32>
    %226 = vector.extract_strided_slice %211 {offsets = [0, 192], sizes = [2, 64], strides = [1, 1]} : vector<2x256xf32> to vector<2x64xf32>
    %227 = arith.negf %226 : vector<2x64xf32>
    %228 = math.exp %227 : vector<2x64xf32>
    %cst_55 = arith.constant 1.000000e+00 : f32
    %229 = vector.broadcast %cst_55 : f32 to vector<2x64xf32>
    %230 = arith.addf %229, %228 : vector<2x64xf32>
    %231 = arith.divf %229, %230 : vector<2x64xf32>
    %232 = arith.mulf %223, %200 : vector<2x64xf32>
    %233 = arith.mulf %217, %225 : vector<2x64xf32>
    %234 = arith.addf %232, %233 : vector<2x64xf32>
    %235 = math.tanh %234 : vector<2x64xf32>
    %236 = arith.mulf %231, %235 : vector<2x64xf32>
    %237 = arith.index_cast %c6_i32 : i32 to index
    %c0_56 = arith.constant 0 : index
    %c0_57 = arith.constant 0 : index
    %238 = vector.load %arg2[%237, %c0_56, %c0_57] : memref<8x2x64xf32, #tpu.memory_space<vmem>>, vector<1x2x64xf32>
    %239 = vector.shape_cast %238 : vector<1x2x64xf32> to vector<2x64xf32>
    %240 = vector.shape_cast %236 : vector<2x64xf32> to vector<1x2x64xf32>
    tpu.vector_store %arg2[%237, %c0_56, %c0_57], %240 {strides = array<i32>} : memref<8x2x64xf32, #tpu.memory_space<vmem>>, vector<1x2x64xf32>,
    %c7_i32 = arith.constant 7 : i32
    %241 = arith.index_cast %c7_i32 : i32 to index
    %c0_58 = arith.constant 0 : index
    %c0_59 = arith.constant 0 : index
    %242 = vector.load %arg0[%241, %c0_58, %c0_59] : memref<8x2x256xf32, #tpu.memory_space<vmem>>, vector<1x2x256xf32>
    %243 = vector.shape_cast %242 : vector<1x2x256xf32> to vector<2x256xf32>
    %cst_60 = arith.constant dense<0.000000e+00> : vector<2x256xf32>
    %244 = tpu.matmul %236, %0, %cst_60 {dimension_numbers = #tpu.dot_dimension_numbers<[1], [0], [0], [1], [0, 0, 1, 1], [], []>} : vector<2x64xf32>, vector<64x256xf32>, vector<2x256xf32> -> vector<2x256xf32>
    %245 = arith.addf %243, %244 : vector<2x256xf32>
    %246 = vector.extract_strided_slice %245 {offsets = [0, 0], sizes = [2, 64], strides = [1, 1]} : vector<2x256xf32> to vector<2x64xf32>
    %247 = arith.negf %246 : vector<2x64xf32>
    %248 = math.exp %247 : vector<2x64xf32>
    %cst_61 = arith.constant 1.000000e+00 : f32
    %249 = vector.broadcast %cst_61 : f32 to vector<2x64xf32>
    %250 = arith.addf %249, %248 : vector<2x64xf32>
    %251 = arith.divf %249, %250 : vector<2x64xf32>
    %252 = vector.extract_strided_slice %245 {offsets = [0, 64], sizes = [2, 64], strides = [1, 1]} : vector<2x256xf32> to vector<2x64xf32>
    %253 = arith.negf %252 : vector<2x64xf32>
    %254 = math.exp %253 : vector<2x64xf32>
    %cst_62 = arith.constant 1.000000e+00 : f32
    %255 = vector.broadcast %cst_62 : f32 to vector<2x64xf32>
    %256 = arith.addf %255, %254 : vector<2x64xf32>
    %257 = arith.divf %255, %256 : vector<2x64xf32>
    %258 = vector.extract_strided_slice %245 {offsets = [0, 128], sizes = [2, 64], strides = [1, 1]} : vector<2x256xf32> to vector<2x64xf32>
    %259 = math.tanh %258 : vector<2x64xf32>
    %260 = vector.extract_strided_slice %245 {offsets = [0, 192], sizes = [2, 64], strides = [1, 1]} : vector<2x256xf32> to vector<2x64xf32>
    %261 = arith.negf %260 : vector<2x64xf32>
    %262 = math.exp %261 : vector<2x64xf32>
    %cst_63 = arith.constant 1.000000e+00 : f32
    %263 = vector.broadcast %cst_63 : f32 to vector<2x64xf32>
    %264 = arith.addf %263, %262 : vector<2x64xf32>
    %265 = arith.divf %263, %264 : vector<2x64xf32>
    %266 = arith.mulf %257, %234 : vector<2x64xf32>
    %267 = arith.mulf %251, %259 : vector<2x64xf32>
    %268 = arith.addf %266, %267 : vector<2x64xf32>
    %269 = math.tanh %268 : vector<2x64xf32>
    %270 = arith.mulf %265, %269 : vector<2x64xf32>
    %271 = arith.index_cast %c7_i32 : i32 to index
    %c0_64 = arith.constant 0 : index
    %c0_65 = arith.constant 0 : index
    %272 = vector.load %arg2[%271, %c0_64, %c0_65] : memref<8x2x64xf32, #tpu.memory_space<vmem>>, vector<1x2x64xf32>
    %273 = vector.shape_cast %272 : vector<1x2x64xf32> to vector<2x64xf32>
    %274 = vector.shape_cast %270 : vector<2x64xf32> to vector<1x2x64xf32>
    tpu.vector_store %arg2[%271, %c0_64, %c0_65], %274 {strides = array<i32>} : memref<8x2x64xf32, #tpu.memory_space<vmem>>, vector<1x2x64xf32>,
    %c8_i32 = arith.constant 8 : i32
    return
  }
}

module attributes {stable_mosaic.version = 11 : i64} {
  func.func @_attention_kernel(%arg0: memref<2x8x64xf32, #tpu.memory_space<vmem>>, %arg1: memref<1x1x64xf32, #tpu.memory_space<vmem>>, %arg2: memref<1x1xf32, #tpu.memory_space<vmem>>, %arg3: memref<2x64xf32, #tpu.memory_space<vmem>>) attributes {dimension_semantics = [], scalar_prefetch = 0 : i64, scratch_operands = 0 : i64, tpu.core_type = #tpu.core_type<tc>} {
    %c0 = arith.constant 0 : index
    %c0_0 = arith.constant 0 : index
    %c0_1 = arith.constant 0 : index
    %0 = vector.load %arg0[%c0, %c0_0, %c0_1] : memref<2x8x64xf32, #tpu.memory_space<vmem>>, vector<2x8x64xf32>
    %c0_2 = arith.constant 0 : index
    %c0_3 = arith.constant 0 : index
    %c0_4 = arith.constant 0 : index
    %1 = vector.load %arg1[%c0_2, %c0_3, %c0_4] : memref<1x1x64xf32, #tpu.memory_space<vmem>>, vector<1x1x64xf32>
    %2 = vector.broadcast %1 : vector<1x1x64xf32> to vector<2x8x64xf32>
    %3 = arith.mulf %0, %2 : vector<2x8x64xf32>
    %cst = arith.constant dense<0.000000e+00> : vector<2x8xf32>
    %4 = vector.multi_reduction <add>, %3, %cst [2] : vector<2x8x64xf32> to vector<2x8xf32>
    %c0_5 = arith.constant 0 : index
    %c0_6 = arith.constant 0 : index
    %5 = vector.load %arg2[%c0_5, %c0_6] : memref<1x1xf32, #tpu.memory_space<vmem>>, vector<1x1xf32>
    %6 = vector.broadcast %5 : vector<1x1xf32> to vector<2x8xf32>
    %7 = arith.addf %4, %6 : vector<2x8xf32>
    %cst_7 = arith.constant dense<0xFF800000> : vector<2xf32>
    %8 = vector.multi_reduction <maximumf>, %7, %cst_7 [1] : vector<2x8xf32> to vector<2xf32>
    %9 = vector.shape_cast %8 : vector<2xf32> to vector<2x1xf32>
    %10 = vector.broadcast %9 : vector<2x1xf32> to vector<2x8xf32>
    %11 = arith.subf %7, %10 : vector<2x8xf32>
    %12 = math.exp %11 : vector<2x8xf32>
    %cst_8 = arith.constant dense<0.000000e+00> : vector<2xf32>
    %13 = vector.multi_reduction <add>, %12, %cst_8 [1] : vector<2x8xf32> to vector<2xf32>
    %14 = vector.shape_cast %13 : vector<2xf32> to vector<2x1xf32>
    %15 = vector.broadcast %14 : vector<2x1xf32> to vector<2x8xf32>
    %16 = arith.divf %12, %15 : vector<2x8xf32>
    %17 = vector.shape_cast %16 : vector<2x8xf32> to vector<2x8x1xf32>
    %18 = vector.broadcast %17 : vector<2x8x1xf32> to vector<2x8x64xf32>
    %19 = arith.mulf %18, %0 : vector<2x8x64xf32>
    %cst_9 = arith.constant dense<0.000000e+00> : vector<2x64xf32>
    %20 = vector.multi_reduction <add>, %19, %cst_9 [1] : vector<2x8x64xf32> to vector<2x64xf32>
    %c0_10 = arith.constant 0 : index
    %c0_11 = arith.constant 0 : index
    %21 = vector.load %arg3[%c0_10, %c0_11] : memref<2x64xf32, #tpu.memory_space<vmem>>, vector<2x64xf32>
    tpu.vector_store %arg3[%c0_10, %c0_11], %20 {strides = array<i32>} : memref<2x64xf32, #tpu.memory_space<vmem>>, vector<2x64xf32>,
    return
  }
}

module attributes {stable_mosaic.version = 11 : i64} {
  func.func @_process_kernel(%arg0: memref<2x64xf32, #tpu.memory_space<vmem>>, %arg1: memref<64x32xf32, #tpu.memory_space<vmem>>, %arg2: memref<1x32xf32, #tpu.memory_space<vmem>>, %arg3: memref<1x32xf32, #tpu.memory_space<vmem>>, %arg4: memref<1x32xf32, #tpu.memory_space<vmem>>, %arg5: memref<32x64xf32, #tpu.memory_space<vmem>>, %arg6: memref<1x64xf32, #tpu.memory_space<vmem>>, %arg7: memref<2x64xf32, #tpu.memory_space<vmem>>) attributes {dimension_semantics = [], scalar_prefetch = 0 : i64, scratch_operands = 0 : i64, tpu.core_type = #tpu.core_type<tc>} {
    %c0 = arith.constant 0 : index
    %c0_0 = arith.constant 0 : index
    %0 = vector.load %arg0[%c0, %c0_0] : memref<2x64xf32, #tpu.memory_space<vmem>>, vector<2x64xf32>
    %c0_1 = arith.constant 0 : index
    %c0_2 = arith.constant 0 : index
    %1 = vector.load %arg1[%c0_1, %c0_2] : memref<64x32xf32, #tpu.memory_space<vmem>>, vector<64x32xf32>
    %cst = arith.constant dense<0.000000e+00> : vector<2x32xf32>
    %2 = tpu.matmul %0, %1, %cst {dimension_numbers = #tpu.dot_dimension_numbers<[1], [0], [0], [1], [0, 0, 1, 1], [], []>} : vector<2x64xf32>, vector<64x32xf32>, vector<2x32xf32> -> vector<2x32xf32>
    %c0_3 = arith.constant 0 : index
    %c0_4 = arith.constant 0 : index
    %3 = vector.load %arg2[%c0_3, %c0_4] : memref<1x32xf32, #tpu.memory_space<vmem>>, vector<1x32xf32>
    %4 = vector.broadcast %3 : vector<1x32xf32> to vector<2x32xf32>
    %5 = arith.addf %2, %4 : vector<2x32xf32>
    %cst_5 = arith.constant dense<0.000000e+00> : vector<32xf32>
    %6 = vector.multi_reduction <add>, %5, %cst_5 [0] : vector<2x32xf32> to vector<32xf32>
    %7 = vector.shape_cast %6 : vector<32xf32> to vector<1x32xf32>
    %cst_6 = arith.constant 2.000000e+00 : f32
    %8 = vector.broadcast %cst_6 : f32 to vector<1x32xf32>
    %9 = arith.divf %7, %8 : vector<1x32xf32>
    %10 = vector.broadcast %9 : vector<1x32xf32> to vector<2x32xf32>
    %11 = arith.subf %5, %10 : vector<2x32xf32>
    %12 = arith.mulf %11, %11 : vector<2x32xf32>
    %cst_7 = arith.constant dense<0.000000e+00> : vector<32xf32>
    %13 = vector.multi_reduction <add>, %12, %cst_7 [0] : vector<2x32xf32> to vector<32xf32>
    %14 = vector.shape_cast %13 : vector<32xf32> to vector<1x32xf32>
    %cst_8 = arith.constant 2.000000e+00 : f32
    %15 = vector.broadcast %cst_8 : f32 to vector<1x32xf32>
    %16 = arith.divf %14, %15 : vector<1x32xf32>
    %17 = vector.broadcast %9 : vector<1x32xf32> to vector<2x32xf32>
    %18 = arith.subf %5, %17 : vector<2x32xf32>
    %cst_9 = arith.constant 9.99999974E-6 : f32
    %19 = vector.broadcast %cst_9 : f32 to vector<1x32xf32>
    %20 = arith.addf %16, %19 : vector<1x32xf32>
    %21 = math.rsqrt %20 : vector<1x32xf32>
    %22 = vector.broadcast %21 : vector<1x32xf32> to vector<2x32xf32>
    %23 = arith.mulf %18, %22 : vector<2x32xf32>
    %c0_10 = arith.constant 0 : index
    %c0_11 = arith.constant 0 : index
    %24 = vector.load %arg3[%c0_10, %c0_11] : memref<1x32xf32, #tpu.memory_space<vmem>>, vector<1x32xf32>
    %25 = vector.broadcast %24 : vector<1x32xf32> to vector<2x32xf32>
    %26 = arith.mulf %23, %25 : vector<2x32xf32>
    %c0_12 = arith.constant 0 : index
    %c0_13 = arith.constant 0 : index
    %27 = vector.load %arg4[%c0_12, %c0_13] : memref<1x32xf32, #tpu.memory_space<vmem>>, vector<1x32xf32>
    %28 = vector.broadcast %27 : vector<1x32xf32> to vector<2x32xf32>
    %29 = arith.addf %26, %28 : vector<2x32xf32>
    %cst_14 = arith.constant 0.000000e+00 : f32
    %30 = vector.broadcast %cst_14 : f32 to vector<2x32xf32>
    %31 = arith.maximumf %29, %30 : vector<2x32xf32>
    %c0_15 = arith.constant 0 : index
    %c0_16 = arith.constant 0 : index
    %32 = vector.load %arg5[%c0_15, %c0_16] : memref<32x64xf32, #tpu.memory_space<vmem>>, vector<32x64xf32>
    %cst_17 = arith.constant dense<0.000000e+00> : vector<2x64xf32>
    %33 = tpu.matmul %31, %32, %cst_17 {dimension_numbers = #tpu.dot_dimension_numbers<[1], [0], [0], [1], [0, 0, 1, 1], [], []>} : vector<2x32xf32>, vector<32x64xf32>, vector<2x64xf32> -> vector<2x64xf32>
    %c0_18 = arith.constant 0 : index
    %c0_19 = arith.constant 0 : index
    %34 = vector.load %arg6[%c0_18, %c0_19] : memref<1x64xf32, #tpu.memory_space<vmem>>, vector<1x64xf32>
    %35 = vector.broadcast %34 : vector<1x64xf32> to vector<2x64xf32>
    %36 = arith.addf %33, %35 : vector<2x64xf32>
    %c0_20 = arith.constant 0 : index
    %c0_21 = arith.constant 0 : index
    %37 = vector.load %arg7[%c0_20, %c0_21] : memref<2x64xf32, #tpu.memory_space<vmem>>, vector<2x64xf32>
    tpu.vector_store %arg7[%c0_20, %c0_21], %36 {strides = array<i32>} : memref<2x64xf32, #tpu.memory_space<vmem>>, vector<2x64xf32>,
    return
  }
}

</mosaic_0001>

<llo_original>
// kernel: conv_lstm_forward.5
$region0: #{conv_lstm_forward.5}
  #allocation0 [shape = 'u32[]', space=smem, size = 0x4, offset = 0x4, fixed_abs, tag = 'smem constant byte address 0x4 - core index']
  #allocation1 [shape = 'u32[144,128]{1,0:T(1,128)}', space=vmem, size = 0x12000, scoped, tag = 'internal scratch']
  %s0 = inlined_call_operand.vmem [shape: bf16[4096,27], index: 0, kind: input, shape index: {}]
  %s1 = inlined_call_operand.vmem [shape: bf16[27,128], index: 1, kind: input, shape index: {}]
  %s2 = inlined_call_operand.vmem [shape: f32[1,128], index: 2, kind: input, shape index: {}]
  %s3 = inlined_call_operand.vmem [shape: f32[16,128], index: 3, kind: output, shape index: {}]
  %s4 = sld [smem:[#allocation0]]
  $region45: #{conv_lstm_forward.5} parent=0
    _
  %s6 = ssub.s32 1, %s4
  %s7 = scalar_select 0, %s6, %s4
  loop: start=0, step=1, limit=4
  $region2: #{conv_lstm_forward.5} parent=0 // loop_pre_header
    _
  $region3: #{conv_lstm_forward.5} parent=0 // loop_header
    %s9 = sphi 0, %s13
    %p10 = scmp.ge.s32.totalorder %s9, 4
    %s19 = sphi 0, %s21
    %s22 = sphi 0, %s19
    %s23 = sphi 0, %s22
    %s39 = sphi 0, %s23
    %s43 = sphi 0, %s43
    %s45 = sphi 0, %s43
    %s46 = sphi 0, %s45
    %s60 = sphi 0, %s46
    %s64 = sphi 0, %s64
    %s66 = sphi 0, %s64
    %s67 = sphi 0, %s66
    %s81 = sphi 0, %s67
    %s87 = sphi 0, %s89
    %s90 = sphi 0, %s87
    %s91 = sphi 0, %s90
    %s107 = sphi 0, %s91
  $region4: #{conv_lstm_forward.5} parent=0 // loop_header_branch
    %12 = sbr.rel (%p10) target = $region8
  $region5: #{conv_lstm_forward.5} parent=0 // loop_body
    %s14 = ssub.s32 %s9, 1
    %s15 = ssub.s32 %s9, 2
    %s16 = sadd.s32 %s9, 1
    %s17 = ssub.s32 %s9, %s16
    %p18 = scmp.eq.s32.totalorder %s17, 0
    %s20 = sadd.s32 %s19, 1
    %s21 = scalar_select %p18, %s19, %s20
    %p24 = pneg %p18
    %p25 = scmp.eq.s32.totalorder %s9, 1
    %p26 = por %p24, %p25
    %p27 = scmp.ne.s32.totalorder %s19, %s22
    %p28 = scmp.eq.s32.totalorder %s9, 0
    %p29 = por %p27, %p28
    %p30 = scmp.ne.s32.totalorder %s19, %s22
    %p31 = scmp.eq.s32.totalorder %s14, 1
    %p32 = por %p30, %p31
    %p33 = scmp.ne.s32.totalorder %s22, %s23
    %p34 = scmp.eq.s32.totalorder %s14, 0
    %p35 = por %p33, %p34
    %p36 = scmp.ne.s32.totalorder %s22, %s23
    %p37 = scmp.eq.s32.totalorder %s15, 1
    %p38 = por %p36, %p37
    %p40 = scmp.ne.s32.totalorder %s23, %s39
    %p41 = scmp.eq.s32.totalorder %s15, 0
    %p42 = por %p40, %p41
    %s44 = sadd.s32 %s43, 1
    %p47 = scmp.eq.s32.totalorder %s9, 1
    %p48 = scmp.ne.s32.totalorder %s43, %s45
    %p49 = scmp.eq.s32.totalorder %s9, 0
    %p50 = por %p48, %p49
    %p51 = scmp.ne.s32.totalorder %s43, %s45
    %p52 = scmp.eq.s32.totalorder %s14, 1
    %p53 = por %p51, %p52
    %p54 = scmp.ne.s32.totalorder %s45, %s46
    %p55 = scmp.eq.s32.totalorder %s14, 0
    %p56 = por %p54, %p55
    %p57 = scmp.ne.s32.totalorder %s45, %s46
    %p58 = scmp.eq.s32.totalorder %s15, 1
    %p59 = por %p57, %p58
    %p61 = scmp.ne.s32.totalorder %s46, %s60
    %p62 = scmp.eq.s32.totalorder %s15, 0
    %p63 = por %p61, %p62
    %s65 = sadd.s32 %s64, 1
    %p68 = scmp.eq.s32.totalorder %s9, 1
    %p69 = scmp.ne.s32.totalorder %s64, %s66
    %p70 = scmp.eq.s32.totalorder %s9, 0
    %p71 = por %p69, %p70
    %p72 = scmp.ne.s32.totalorder %s64, %s66
    %p73 = scmp.eq.s32.totalorder %s14, 1
    %p74 = por %p72, %p73
    %p75 = scmp.ne.s32.totalorder %s66, %s67
    %p76 = scmp.eq.s32.totalorder %s14, 0
    %p77 = por %p75, %p76
    %p78 = scmp.ne.s32.totalorder %s66, %s67
    %p79 = scmp.eq.s32.totalorder %s15, 1
    %p80 = por %p78, %p79
    %p82 = scmp.ne.s32.totalorder %s67, %s81
    %p83 = scmp.eq.s32.totalorder %s15, 0
    %p84 = por %p82, %p83
    %s85 = ssub.s32 %s9, %s16
    %p86 = scmp.eq.s32.totalorder %s85, 0
    %s88 = sadd.s32 %s87, 1
    %s89 = scalar_select %p86, %s87, %s88
    %p92 = pneg %p86
    %p93 = scmp.eq.s32.totalorder %s9, 1
    %p94 = por %p92, %p93
    %p95 = scmp.ne.s32.totalorder %s87, %s90
    %p96 = scmp.eq.s32.totalorder %s9, 0
    %p97 = por %p95, %p96
    %p98 = scmp.ne.s32.totalorder %s87, %s90
    %p99 = scmp.eq.s32.totalorder %s14, 1
    %p100 = por %p98, %p99
    %p101 = scmp.ne.s32.totalorder %s90, %s91
    %p102 = scmp.eq.s32.totalorder %s14, 0
    %p103 = por %p101, %p102
    %p104 = scmp.ne.s32.totalorder %s90, %s91
    %p105 = scmp.eq.s32.totalorder %s15, 1
    %p106 = por %p104, %p105
    %p108 = scmp.ne.s32.totalorder %s91, %s107
    %p109 = scmp.eq.s32.totalorder %s15, 0
    %p110 = por %p108, %p109
    %p111 = scmp.le.s32.totalorder 1, %s9
    %p112 = scmp.lt.s32.totalorder %s9, 3
    %p113 = pnand %p111, %p112
    %p114 = pneg %p113
    // Predicated region
    $region9: #{conv_lstm_forward.5} parent=5 // pred_check
      _
    $region10: #{conv_lstm_forward.5} parent=5 // pred_check_branch
      %116 = sbr.rel (%p113) target = $region12
    $region11: #{conv_lstm_forward.5} parent=5 // pred_region
      %s117 = ssub.s32 %s9, 1
      // Predicated region
      $region13: #{conv_lstm_forward.5} parent=11 // pred_check
        %p118 = pneg %p56
      $region14: #{conv_lstm_forward.5} parent=11 // pred_check_branch
        %120 = sbr.rel (%p118) target = $region16
      $region15: #{conv_lstm_forward.5} parent=11 // pred_region
        _
      $region16: #{conv_lstm_forward.5} parent=11 // pred_fallthru
        _
      // Predicated region
      $region17: #{conv_lstm_forward.5} parent=11 // pred_check
        %p121 = pneg %p77
      $region18: #{conv_lstm_forward.5} parent=11 // pred_check_branch
        %123 = sbr.rel (%p121) target = $region20
      $region19: #{conv_lstm_forward.5} parent=11 // pred_region
        _
      $region20: #{conv_lstm_forward.5} parent=11 // pred_fallthru
        _
    $region12: #{conv_lstm_forward.5} parent=5 // pred_fallthru
      _
    %p124 = scmp.lt.s32.totalorder %s9, 2
    // Predicated region
    $region21: #{conv_lstm_forward.5} parent=5 // pred_check
      %p125 = pneg %p124
    $region22: #{conv_lstm_forward.5} parent=5 // pred_check_branch
      %127 = sbr.rel (%p125) target = $region24
    $region23: #{conv_lstm_forward.5} parent=5 // pred_region
      // Predicated region
      $region25: #{conv_lstm_forward.5} parent=23 // pred_check
        %p128 = pneg %p29
      $region26: #{conv_lstm_forward.5} parent=23 // pred_check_branch
        %130 = sbr.rel (%p128) target = $region28
      $region27: #{conv_lstm_forward.5} parent=23 // pred_region
        %s131 = smul.u32 256, %s9
        %p132 = scmp.lt.s32.totalorder %s131, 511
        %s133 = scalar_select %p132, %s131, 511
        %s134 = smul.addr %s133, 4
        %s135 = scalar_lea.vmem %s0, %s134
        %s136 = smul.u32 256, %s9
      $region28: #{conv_lstm_forward.5} parent=23 // pred_fallthru
        _
    $region24: #{conv_lstm_forward.5} parent=5 // pred_fallthru
      _
    %p137 = scmp.le.s32.totalorder 1, %s9
    %p138 = scmp.lt.s32.totalorder %s9, 3
    %p139 = pnand %p137, %p138
    %p140 = pneg %p139
    // Predicated region
    $region29: #{conv_lstm_forward.5} parent=5 // pred_check
      _
    $region30: #{conv_lstm_forward.5} parent=5 // pred_check_branch
      %142 = sbr.rel (%p139) target = $region32
    $region31: #{conv_lstm_forward.5} parent=5 // pred_region
      %s143 = ssub.s32 %s9, 1
      %s144 = smul.u32 256, %s14
      %p145 = scmp.lt.s32.totalorder %s144, 511
      %s146 = scalar_select %p145, %s144, 511
      %s147 = smul.addr %s146, 4
      %s148 = scalar_lea.vmem %s0, %s147
      %p149 = pneg %p35
      %p150 = pneg %p32
      %p151 = pneg %p56
      %p152 = pneg %p53
      %p153 = pneg %p77
      %p154 = pneg %p74
      %p155 = pneg %p103
      %p156 = pneg %p100
      %p157 = scmp.lt.s32.totalorder %s14, 1
      %s158 = scalar_select %p157, %s14, 1
      %s159 = smul.addr %s158, 8
      %s160 = scalar_lea.vmem %s3, %s159
      %s161 = smul.u32 256, %s14
      %p162 = scmp.lt.s32.totalorder %s161, 511
      %s163 = scalar_select %p162, %s161, 511
      %s164 = smul.addr %s163, 4
      %s165 = scalar_lea.vmem %s0, %s164
      %s166 = smul.u32 256, %s14
      %p167 = scmp.lt.s32.totalorder %s14, 1
      %s168 = scalar_select %p167, %s14, 1
      %s169 = smul.addr %s168, 8
      %s170 = scalar_lea.vmem %s3, %s169
      %v172 = vld [vmem:[%s165] sm:$0xf]
      %v173 = vld [vmem:[%s165 + $0x4] sm:$0xf]
      %v174 = vld [vmem:[%s165 + $0x8] sm:$0xf]
      %v175 = vld [vmem:[%s165 + $0xc] sm:$0xf]
      %v176 = vld [vmem:[%s165 + $0x10] sm:$0xf]
      %v177 = vld [vmem:[%s165 + $0x14] sm:$0xf]
      %v178 = vld [vmem:[%s165 + $0x18] sm:$0xf]
      %v179 = vld [vmem:[%s165 + $0x1c] sm:$0xf]
      %v180 = vld [vmem:[%s165 + $0x20] sm:$0xf]
      %v181 = vld [vmem:[%s165 + $0x24] sm:$0xf]
      %v182 = vld [vmem:[%s165 + $0x28] sm:$0xf]
      %v183 = vld [vmem:[%s165 + $0x2c] sm:$0xf]
      %v184 = vld [vmem:[%s165 + $0x30] sm:$0xf]
      %v185 = vld [vmem:[%s165 + $0x34] sm:$0xf]
      %v186 = vld [vmem:[%s165 + $0x38] sm:$0xf]
      %v187 = vld [vmem:[%s165 + $0x3c] sm:$0xf]
      %v188 = vld [vmem:[%s165 + $0x40] sm:$0xf]
      %v189 = vld [vmem:[%s165 + $0x44] sm:$0xf]
      %v190 = vld [vmem:[%s165 + $0x48] sm:$0xf]
      %v191 = vld [vmem:[%s165 + $0x4c] sm:$0xf]
      %v192 = vld [vmem:[%s165 + $0x50] sm:$0xf]
      %v193 = vld [vmem:[%s165 + $0x54] sm:$0xf]
      %v194 = vld [vmem:[%s165 + $0x58] sm:$0xf]
      %v195 = vld [vmem:[%s165 + $0x5c] sm:$0xf]
      %v196 = vld [vmem:[%s165 + $0x60] sm:$0xf]
      %v197 = vld [vmem:[%s165 + $0x64] sm:$0xf]
      %v198 = vld [vmem:[%s165 + $0x68] sm:$0xf]
      %v199 = vld [vmem:[%s165 + $0x6c] sm:$0xf]
      %v200 = vld [vmem:[%s165 + $0x70] sm:$0xf]
      %v201 = vld [vmem:[%s165 + $0x74] sm:$0xf]
      %v202 = vld [vmem:[%s165 + $0x78] sm:$0xf]
      %v203 = vld [vmem:[%s165 + $0x7c] sm:$0xf]
      %v204 = vld [vmem:[%s165 + $0x80] sm:$0xf]
      %v205 = vld [vmem:[%s165 + $0x84] sm:$0xf]
      %v206 = vld [vmem:[%s165 + $0x88] sm:$0xf]
      %v207 = vld [vmem:[%s165 + $0x8c] sm:$0xf]
      %v208 = vld [vmem:[%s165 + $0x90] sm:$0xf]
      %v209 = vld [vmem:[%s165 + $0x94] sm:$0xf]
      %v210 = vld [vmem:[%s165 + $0x98] sm:$0xf]
      %v211 = vld [vmem:[%s165 + $0x9c] sm:$0xf]
      %v212 = vld [vmem:[%s165 + $0xa0] sm:$0xf]
      %v213 = vld [vmem:[%s165 + $0xa4] sm:$0xf]
      %v214 = vld [vmem:[%s165 + $0xa8] sm:$0xf]
      %v215 = vld [vmem:[%s165 + $0xac] sm:$0xf]
      %v216 = vld [vmem:[%s165 + $0xb0] sm:$0xf]
      %v217 = vld [vmem:[%s165 + $0xb4] sm:$0xf]
      %v218 = vld [vmem:[%s165 + $0xb8] sm:$0xf]
      %v219 = vld [vmem:[%s165 + $0xbc] sm:$0xf]
      %v220 = vld [vmem:[%s165 + $0xc0] sm:$0xf]
      %v221 = vld [vmem:[%s165 + $0xc4] sm:$0xf]
      %v222 = vld [vmem:[%s165 + $0xc8] sm:$0xf]
      %v223 = vld [vmem:[%s165 + $0xcc] sm:$0xf]
      %v224 = vld [vmem:[%s165 + $0xd0] sm:$0xf]
      %v225 = vld [vmem:[%s165 + $0xd4] sm:$0xf]
      %v226 = vld [vmem:[%s165 + $0xd8] sm:$0xf]
      %v227 = vld [vmem:[%s165 + $0xdc] sm:$0xf]
      %v228 = vld [vmem:[%s165 + $0xe0] sm:$0xf]
      %v229 = vld [vmem:[%s165 + $0xe4] sm:$0xf]
      %v230 = vld [vmem:[%s165 + $0xe8] sm:$0xf]
      %v231 = vld [vmem:[%s165 + $0xec] sm:$0xf]
      %v232 = vld [vmem:[%s165 + $0xf0] sm:$0xf]
      %v233 = vld [vmem:[%s165 + $0xf4] sm:$0xf]
      %v234 = vld [vmem:[%s165 + $0xf8] sm:$0xf]
      %v235 = vld [vmem:[%s165 + $0xfc] sm:$0xf]
      %v236 = vld [vmem:[%s165 + $0x100] sm:$0xf]
      %v237 = vld [vmem:[%s165 + $0x104] sm:$0xf]
      %v238 = vld [vmem:[%s165 + $0x108] sm:$0xf]
      %v239 = vld [vmem:[%s165 + $0x10c] sm:$0xf]
      %v240 = vld [vmem:[%s165 + $0x110] sm:$0xf]
      %v241 = vld [vmem:[%s165 + $0x114] sm:$0xf]
      %v242 = vld [vmem:[%s165 + $0x118] sm:$0xf]
      %v243 = vld [vmem:[%s165 + $0x11c] sm:$0xf]
      %v244 = vld [vmem:[%s165 + $0x120] sm:$0xf]
      %v245 = vld [vmem:[%s165 + $0x124] sm:$0xf]
      %v246 = vld [vmem:[%s165 + $0x128] sm:$0xf]
      %v247 = vld [vmem:[%s165 + $0x12c] sm:$0xf]
      %v248 = vld [vmem:[%s165 + $0x130] sm:$0xf]
      %v249 = vld [vmem:[%s165 + $0x134] sm:$0xf]
      %v250 = vld [vmem:[%s165 + $0x138] sm:$0xf]
      %v251 = vld [vmem:[%s165 + $0x13c] sm:$0xf]
      %v252 = vld [vmem:[%s165 + $0x140] sm:$0xf]
      %v253 = vld [vmem:[%s165 + $0x144] sm:$0xf]
      %v254 = vld [vmem:[%s165 + $0x148] sm:$0xf]
      %v255 = vld [vmem:[%s165 + $0x14c] sm:$0xf]
      %v256 = vld [vmem:[%s165 + $0x150] sm:$0xf]
      %v257 = vld [vmem:[%s165 + $0x154] sm:$0xf]
      %v258 = vld [vmem:[%s165 + $0x158] sm:$0xf]
      %v259 = vld [vmem:[%s165 + $0x15c] sm:$0xf]
      %v260 = vld [vmem:[%s165 + $0x160] sm:$0xf]
      %v261 = vld [vmem:[%s165 + $0x164] sm:$0xf]
      %v262 = vld [vmem:[%s165 + $0x168] sm:$0xf]
      %v263 = vld [vmem:[%s165 + $0x16c] sm:$0xf]
      %v264 = vld [vmem:[%s165 + $0x170] sm:$0xf]
      %v265 = vld [vmem:[%s165 + $0x174] sm:$0xf]
      %v266 = vld [vmem:[%s165 + $0x178] sm:$0xf]
      %v267 = vld [vmem:[%s165 + $0x17c] sm:$0xf]
      %v268 = vld [vmem:[%s165 + $0x180] sm:$0xf]
      %v269 = vld [vmem:[%s165 + $0x184] sm:$0xf]
      %v270 = vld [vmem:[%s165 + $0x188] sm:$0xf]
      %v271 = vld [vmem:[%s165 + $0x18c] sm:$0xf]
      %v272 = vld [vmem:[%s165 + $0x190] sm:$0xf]
      %v273 = vld [vmem:[%s165 + $0x194] sm:$0xf]
      %v274 = vld [vmem:[%s165 + $0x198] sm:$0xf]
      %v275 = vld [vmem:[%s165 + $0x19c] sm:$0xf]
      %v276 = vld [vmem:[%s165 + $0x1a0] sm:$0xf]
      %v277 = vld [vmem:[%s165 + $0x1a4] sm:$0xf]
      %v278 = vld [vmem:[%s165 + $0x1a8] sm:$0xf]
      %v279 = vld [vmem:[%s165 + $0x1ac] sm:$0xf]
      %v280 = vld [vmem:[%s165 + $0x1b0] sm:$0xf]
      %v281 = vld [vmem:[%s165 + $0x1b4] sm:$0xf]
      %v282 = vld [vmem:[%s165 + $0x1b8] sm:$0xf]
      %v283 = vld [vmem:[%s165 + $0x1bc] sm:$0xf]
      %v284 = vld [vmem:[%s165 + $0x1c0] sm:$0xf]
      %v285 = vld [vmem:[%s165 + $0x1c4] sm:$0xf]
      %v286 = vld [vmem:[%s165 + $0x1c8] sm:$0xf]
      %v287 = vld [vmem:[%s165 + $0x1cc] sm:$0xf]
      %v288 = vld [vmem:[%s165 + $0x1d0] sm:$0xf]
      %v289 = vld [vmem:[%s165 + $0x1d4] sm:$0xf]
      %v290 = vld [vmem:[%s165 + $0x1d8] sm:$0xf]
      %v291 = vld [vmem:[%s165 + $0x1dc] sm:$0xf]
      %v292 = vld [vmem:[%s165 + $0x1e0] sm:$0xf]
      %v293 = vld [vmem:[%s165 + $0x1e4] sm:$0xf]
      %v294 = vld [vmem:[%s165 + $0x1e8] sm:$0xf]
      %v295 = vld [vmem:[%s165 + $0x1ec] sm:$0xf]
      %v296 = vld [vmem:[%s165 + $0x1f0] sm:$0xf]
      %v297 = vld [vmem:[%s165 + $0x1f4] sm:$0xf]
      %v298 = vld [vmem:[%s165 + $0x1f8] sm:$0xf]
      %v299 = vld [vmem:[%s165 + $0x1fc] sm:$0xf]
      %v300 = vld [vmem:[%s165 + $0x200] sm:$0xf]
      %v301 = vld [vmem:[%s165 + $0x204] sm:$0xf]
      %v302 = vld [vmem:[%s165 + $0x208] sm:$0xf]
      %v303 = vld [vmem:[%s165 + $0x20c] sm:$0xf]
      %v304 = vld [vmem:[%s165 + $0x210] sm:$0xf]
      %v305 = vld [vmem:[%s165 + $0x214] sm:$0xf]
      %v306 = vld [vmem:[%s165 + $0x218] sm:$0xf]
      %v307 = vld [vmem:[%s165 + $0x21c] sm:$0xf]
      %v308 = vld [vmem:[%s165 + $0x220] sm:$0xf]
      %v309 = vld [vmem:[%s165 + $0x224] sm:$0xf]
      %v310 = vld [vmem:[%s165 + $0x228] sm:$0xf]
      %v311 = vld [vmem:[%s165 + $0x22c] sm:$0xf]
      %v312 = vld [vmem:[%s165 + $0x230] sm:$0xf]
      %v313 = vld [vmem:[%s165 + $0x234] sm:$0xf]
      %v314 = vld [vmem:[%s165 + $0x238] sm:$0xf]
      %v315 = vld [vmem:[%s165 + $0x23c] sm:$0xf]
      %v316 = vld [vmem:[%s165 + $0x240] sm:$0xf]
      %v317 = vld [vmem:[%s165 + $0x244] sm:$0xf]
      %v318 = vld [vmem:[%s165 + $0x248] sm:$0xf]
      %v319 = vld [vmem:[%s165 + $0x24c] sm:$0xf]
      %v320 = vld [vmem:[%s165 + $0x250] sm:$0xf]
      %v321 = vld [vmem:[%s165 + $0x254] sm:$0xf]
      %v322 = vld [vmem:[%s165 + $0x258] sm:$0xf]
      %v323 = vld [vmem:[%s165 + $0x25c] sm:$0xf]
      %v324 = vld [vmem:[%s165 + $0x260] sm:$0xf]
      %v325 = vld [vmem:[%s165 + $0x264] sm:$0xf]
      %v326 = vld [vmem:[%s165 + $0x268] sm:$0xf]
      %v327 = vld [vmem:[%s165 + $0x26c] sm:$0xf]
      %v328 = vld [vmem:[%s165 + $0x270] sm:$0xf]
      %v329 = vld [vmem:[%s165 + $0x274] sm:$0xf]
      %v330 = vld [vmem:[%s165 + $0x278] sm:$0xf]
      %v331 = vld [vmem:[%s165 + $0x27c] sm:$0xf]
      %v332 = vld [vmem:[%s165 + $0x280] sm:$0xf]
      %v333 = vld [vmem:[%s165 + $0x284] sm:$0xf]
      %v334 = vld [vmem:[%s165 + $0x288] sm:$0xf]
      %v335 = vld [vmem:[%s165 + $0x28c] sm:$0xf]
      %v336 = vld [vmem:[%s165 + $0x290] sm:$0xf]
      %v337 = vld [vmem:[%s165 + $0x294] sm:$0xf]
      %v338 = vld [vmem:[%s165 + $0x298] sm:$0xf]
      %v339 = vld [vmem:[%s165 + $0x29c] sm:$0xf]
      %v340 = vld [vmem:[%s165 + $0x2a0] sm:$0xf]
      %v341 = vld [vmem:[%s165 + $0x2a4] sm:$0xf]
      %v342 = vld [vmem:[%s165 + $0x2a8] sm:$0xf]
      %v343 = vld [vmem:[%s165 + $0x2ac] sm:$0xf]
      %v344 = vld [vmem:[%s165 + $0x2b0] sm:$0xf]
      %v345 = vld [vmem:[%s165 + $0x2b4] sm:$0xf]
      %v346 = vld [vmem:[%s165 + $0x2b8] sm:$0xf]
      %v347 = vld [vmem:[%s165 + $0x2bc] sm:$0xf]
      %v348 = vld [vmem:[%s165 + $0x2c0] sm:$0xf]
      %v349 = vld [vmem:[%s165 + $0x2c4] sm:$0xf]
      %v350 = vld [vmem:[%s165 + $0x2c8] sm:$0xf]
      %v351 = vld [vmem:[%s165 + $0x2cc] sm:$0xf]
      %v352 = vld [vmem:[%s165 + $0x2d0] sm:$0xf]
      %v353 = vld [vmem:[%s165 + $0x2d4] sm:$0xf]
      %v354 = vld [vmem:[%s165 + $0x2d8] sm:$0xf]
      %v355 = vld [vmem:[%s165 + $0x2dc] sm:$0xf]
      %v356 = vld [vmem:[%s165 + $0x2e0] sm:$0xf]
      %v357 = vld [vmem:[%s165 + $0x2e4] sm:$0xf]
      %v358 = vld [vmem:[%s165 + $0x2e8] sm:$0xf]
      %v359 = vld [vmem:[%s165 + $0x2ec] sm:$0xf]
      %v360 = vld [vmem:[%s165 + $0x2f0] sm:$0xf]
      %v361 = vld [vmem:[%s165 + $0x2f4] sm:$0xf]
      %v362 = vld [vmem:[%s165 + $0x2f8] sm:$0xf]
      %v363 = vld [vmem:[%s165 + $0x2fc] sm:$0xf]
      %v364 = vld [vmem:[%s165 + $0x300] sm:$0xf]
      %v365 = vld [vmem:[%s165 + $0x304] sm:$0xf]
      %v366 = vld [vmem:[%s165 + $0x308] sm:$0xf]
      %v367 = vld [vmem:[%s165 + $0x30c] sm:$0xf]
      %v368 = vld [vmem:[%s165 + $0x310] sm:$0xf]
      %v369 = vld [vmem:[%s165 + $0x314] sm:$0xf]
      %v370 = vld [vmem:[%s165 + $0x318] sm:$0xf]
      %v371 = vld [vmem:[%s165 + $0x31c] sm:$0xf]
      %v372 = vld [vmem:[%s165 + $0x320] sm:$0xf]
      %v373 = vld [vmem:[%s165 + $0x324] sm:$0xf]
      %v374 = vld [vmem:[%s165 + $0x328] sm:$0xf]
      %v375 = vld [vmem:[%s165 + $0x32c] sm:$0xf]
      %v376 = vld [vmem:[%s165 + $0x330] sm:$0xf]
      %v377 = vld [vmem:[%s165 + $0x334] sm:$0xf]
      %v378 = vld [vmem:[%s165 + $0x338] sm:$0xf]
      %v379 = vld [vmem:[%s165 + $0x33c] sm:$0xf]
      %v380 = vld [vmem:[%s165 + $0x340] sm:$0xf]
      %v381 = vld [vmem:[%s165 + $0x344] sm:$0xf]
      %v382 = vld [vmem:[%s165 + $0x348] sm:$0xf]
      %v383 = vld [vmem:[%s165 + $0x34c] sm:$0xf]
      %v384 = vld [vmem:[%s165 + $0x350] sm:$0xf]
      %v385 = vld [vmem:[%s165 + $0x354] sm:$0xf]
      %v386 = vld [vmem:[%s165 + $0x358] sm:$0xf]
      %v387 = vld [vmem:[%s165 + $0x35c] sm:$0xf]
      %v388 = vld [vmem:[%s165 + $0x360] sm:$0xf]
      %v389 = vld [vmem:[%s165 + $0x364] sm:$0xf]
      %v390 = vld [vmem:[%s165 + $0x368] sm:$0xf]
      %v391 = vld [vmem:[%s165 + $0x36c] sm:$0xf]
      %v392 = vld [vmem:[%s165 + $0x370] sm:$0xf]
      %v393 = vld [vmem:[%s165 + $0x374] sm:$0xf]
      %v394 = vld [vmem:[%s165 + $0x378] sm:$0xf]
      %v395 = vld [vmem:[%s165 + $0x37c] sm:$0xf]
      %v396 = vld [vmem:[%s165 + $0x380] sm:$0xf]
      %v397 = vld [vmem:[%s165 + $0x384] sm:$0xf]
      %v398 = vld [vmem:[%s165 + $0x388] sm:$0xf]
      %v399 = vld [vmem:[%s165 + $0x38c] sm:$0xf]
      %v400 = vld [vmem:[%s165 + $0x390] sm:$0xf]
      %v401 = vld [vmem:[%s165 + $0x394] sm:$0xf]
      %v402 = vld [vmem:[%s165 + $0x398] sm:$0xf]
      %v403 = vld [vmem:[%s165 + $0x39c] sm:$0xf]
      %v404 = vld [vmem:[%s165 + $0x3a0] sm:$0xf]
      %v405 = vld [vmem:[%s165 + $0x3a4] sm:$0xf]
      %v406 = vld [vmem:[%s165 + $0x3a8] sm:$0xf]
      %v407 = vld [vmem:[%s165 + $0x3ac] sm:$0xf]
      %v408 = vld [vmem:[%s165 + $0x3b0] sm:$0xf]
      %v409 = vld [vmem:[%s165 + $0x3b4] sm:$0xf]
      %v410 = vld [vmem:[%s165 + $0x3b8] sm:$0xf]
      %v411 = vld [vmem:[%s165 + $0x3bc] sm:$0xf]
      %v412 = vld [vmem:[%s165 + $0x3c0] sm:$0xf]
      %v413 = vld [vmem:[%s165 + $0x3c4] sm:$0xf]
      %v414 = vld [vmem:[%s165 + $0x3c8] sm:$0xf]
      %v415 = vld [vmem:[%s165 + $0x3cc] sm:$0xf]
      %v416 = vld [vmem:[%s165 + $0x3d0] sm:$0xf]
      %v417 = vld [vmem:[%s165 + $0x3d4] sm:$0xf]
      %v418 = vld [vmem:[%s165 + $0x3d8] sm:$0xf]
      %v419 = vld [vmem:[%s165 + $0x3dc] sm:$0xf]
      %v420 = vld [vmem:[%s165 + $0x3e0] sm:$0xf]
      %v421 = vld [vmem:[%s165 + $0x3e4] sm:$0xf]
      %v422 = vld [vmem:[%s165 + $0x3e8] sm:$0xf]
      %v423 = vld [vmem:[%s165 + $0x3ec] sm:$0xf]
      %v424 = vld [vmem:[%s165 + $0x3f0] sm:$0xf]
      %v425 = vld [vmem:[%s165 + $0x3f4] sm:$0xf]
      %v426 = vld [vmem:[%s165 + $0x3f8] sm:$0xf]
      %v427 = vld [vmem:[%s165 + $0x3fc] sm:$0xf]
      %v428 = vld [vmem:[%s1] sm:$0xf]
      %v429 = vld [vmem:[%s1 + $0x4] sm:$0xf]
      %v430 = vld [vmem:[%s1 + $0x8] sm:$0xf]
      %v431 = vld [vmem:[%s1 + $0xc] sm:$0x3]
      %v432 = vld [vmem:[%s2] sm:$0x1]
      %v434 = vlaneseq
      %v435 = vshrl.u32 %v434, 7
      %v436 = vsub.s32 0, %v435
      %v437 = vrot.slane %v432, %v436
      %v695 = vunpack.c.l.b16 %v172
      %v696 = vunpack.c.l.b16 %v173
      %v697 = vunpack.c.l.b16 %v174
      %v698 = vunpack.c.l.b16 %v175
      %v699 = vunpack.c.l.b16 %v176
      %v700 = vunpack.c.l.b16 %v177
      %v701 = vunpack.c.l.b16 %v178
      %v702 = vunpack.c.l.b16 %v179
      %v703 = vunpack.c.l.b16 %v180
      %v704 = vunpack.c.l.b16 %v181
      %v705 = vunpack.c.l.b16 %v182
      %v706 = vunpack.c.l.b16 %v183
      %v707 = vunpack.c.l.b16 %v184
      %v708 = vunpack.c.l.b16 %v185
      %v709 = vunpack.c.l.b16 %v186
      %v710 = vunpack.c.l.b16 %v187
      %v711 = vunpack.c.l.b16 %v188
      %v712 = vunpack.c.l.b16 %v189
      %v713 = vunpack.c.l.b16 %v190
      %v714 = vunpack.c.l.b16 %v191
      %v715 = vunpack.c.l.b16 %v192
      %v716 = vunpack.c.l.b16 %v193
      %v717 = vunpack.c.l.b16 %v194
      %v718 = vunpack.c.l.b16 %v195
      %v719 = vunpack.c.l.b16 %v196
      %v720 = vunpack.c.l.b16 %v197
      %v721 = vunpack.c.l.b16 %v198
      %v722 = vunpack.c.l.b16 %v199
      %v723 = vunpack.c.l.b16 %v200
      %v724 = vunpack.c.l.b16 %v201
      %v725 = vunpack.c.l.b16 %v202
      %v726 = vunpack.c.l.b16 %v203
      %v727 = vunpack.c.l.b16 %v204
      %v728 = vunpack.c.l.b16 %v205
      %v729 = vunpack.c.l.b16 %v206
      %v730 = vunpack.c.l.b16 %v207
      %v731 = vunpack.c.l.b16 %v208
      %v732 = vunpack.c.l.b16 %v209
      %v733 = vunpack.c.l.b16 %v210
      %v734 = vunpack.c.l.b16 %v211
      %v735 = vunpack.c.l.b16 %v212
      %v736 = vunpack.c.l.b16 %v213
      %v737 = vunpack.c.l.b16 %v214
      %v738 = vunpack.c.l.b16 %v215
      %v739 = vunpack.c.l.b16 %v216
      %v740 = vunpack.c.l.b16 %v217
      %v741 = vunpack.c.l.b16 %v218
      %v742 = vunpack.c.l.b16 %v219
      %v743 = vunpack.c.l.b16 %v220
      %v744 = vunpack.c.l.b16 %v221
      %v745 = vunpack.c.l.b16 %v222
      %v746 = vunpack.c.l.b16 %v223
      %v747 = vunpack.c.l.b16 %v224
      %v748 = vunpack.c.l.b16 %v225
      %v749 = vunpack.c.l.b16 %v226
      %v750 = vunpack.c.l.b16 %v227
      %v751 = vunpack.c.l.b16 %v228
      %v752 = vunpack.c.l.b16 %v229
      %v753 = vunpack.c.l.b16 %v230
      %v754 = vunpack.c.l.b16 %v231
      %v755 = vunpack.c.l.b16 %v232
      %v756 = vunpack.c.l.b16 %v233
      %v757 = vunpack.c.l.b16 %v234
      %v758 = vunpack.c.l.b16 %v235
      %v759 = vunpack.c.l.b16 %v236
      %v760 = vunpack.c.l.b16 %v237
      %v761 = vunpack.c.l.b16 %v238
      %v762 = vunpack.c.l.b16 %v239
      %v763 = vunpack.c.l.b16 %v240
      %v764 = vunpack.c.l.b16 %v241
      %v765 = vunpack.c.l.b16 %v242
      %v766 = vunpack.c.l.b16 %v243
      %v767 = vunpack.c.l.b16 %v244
      %v768 = vunpack.c.l.b16 %v245
      %v769 = vunpack.c.l.b16 %v246
      %v770 = vunpack.c.l.b16 %v247
      %v771 = vunpack.c.l.b16 %v248
      %v772 = vunpack.c.l.b16 %v249
      %v773 = vunpack.c.l.b16 %v250
      %v774 = vunpack.c.l.b16 %v251
      %v775 = vunpack.c.l.b16 %v252
      %v776 = vunpack.c.l.b16 %v253
      %v777 = vunpack.c.l.b16 %v254
      %v778 = vunpack.c.l.b16 %v255
      %v779 = vunpack.c.l.b16 %v256
      %v780 = vunpack.c.l.b16 %v257
      %v781 = vunpack.c.l.b16 %v258
      %v782 = vunpack.c.l.b16 %v259
      %v783 = vunpack.c.l.b16 %v260
      %v784 = vunpack.c.l.b16 %v261
      %v785 = vunpack.c.l.b16 %v262
      %v786 = vunpack.c.l.b16 %v263
      %v787 = vunpack.c.l.b16 %v264
      %v788 = vunpack.c.l.b16 %v265
      %v789 = vunpack.c.l.b16 %v266
      %v790 = vunpack.c.l.b16 %v267
      %v791 = vunpack.c.l.b16 %v268
      %v792 = vunpack.c.l.b16 %v269
      %v793 = vunpack.c.l.b16 %v270
      %v794 = vunpack.c.l.b16 %v271
      %v795 = vunpack.c.l.b16 %v272
      %v796 = vunpack.c.l.b16 %v273
      %v797 = vunpack.c.l.b16 %v274
      %v798 = vunpack.c.l.b16 %v275
      %v799 = vunpack.c.l.b16 %v276
      %v800 = vunpack.c.l.b16 %v277
      %v801 = vunpack.c.l.b16 %v278
      %v802 = vunpack.c.l.b16 %v279
      %v803 = vunpack.c.l.b16 %v280
      %v804 = vunpack.c.l.b16 %v281
      %v805 = vunpack.c.l.b16 %v282
      %v806 = vunpack.c.l.b16 %v283
      %v807 = vunpack.c.l.b16 %v284
      %v808 = vunpack.c.l.b16 %v285
      %v809 = vunpack.c.l.b16 %v286
      %v810 = vunpack.c.l.b16 %v287
      %v811 = vunpack.c.l.b16 %v288
      %v812 = vunpack.c.l.b16 %v289
      %v813 = vunpack.c.l.b16 %v290
      %v814 = vunpack.c.l.b16 %v291
      %v815 = vunpack.c.l.b16 %v292
      %v816 = vunpack.c.l.b16 %v293
      %v817 = vunpack.c.l.b16 %v294
      %v818 = vunpack.c.l.b16 %v295
      %v819 = vunpack.c.l.b16 %v296
      %v820 = vunpack.c.l.b16 %v297
      %v821 = vunpack.c.l.b16 %v298
      %v822 = vunpack.c.l.b16 %v299
      %v823 = vunpack.c.l.b16 %v300
      %v824 = vunpack.c.l.b16 %v301
      %v825 = vunpack.c.l.b16 %v302
      %v826 = vunpack.c.l.b16 %v303
      %v827 = vunpack.c.l.b16 %v304
      %v828 = vunpack.c.l.b16 %v305
      %v829 = vunpack.c.l.b16 %v306
      %v830 = vunpack.c.l.b16 %v307
      %v831 = vunpack.c.l.b16 %v308
      %v832 = vunpack.c.l.b16 %v309
      %v833 = vunpack.c.l.b16 %v310
      %v834 = vunpack.c.l.b16 %v311
      %v835 = vunpack.c.l.b16 %v312
      %v836 = vunpack.c.l.b16 %v313
      %v837 = vunpack.c.l.b16 %v314
      %v838 = vunpack.c.l.b16 %v315
      %v839 = vunpack.c.l.b16 %v316
      %v840 = vunpack.c.l.b16 %v317
      %v841 = vunpack.c.l.b16 %v318
      %v842 = vunpack.c.l.b16 %v319
      %v843 = vunpack.c.l.b16 %v320
      %v844 = vunpack.c.l.b16 %v321
      %v845 = vunpack.c.l.b16 %v322
      %v846 = vunpack.c.l.b16 %v323
      %v847 = vunpack.c.l.b16 %v324
      %v848 = vunpack.c.l.b16 %v325
      %v849 = vunpack.c.l.b16 %v326
      %v850 = vunpack.c.l.b16 %v327
      %v851 = vunpack.c.l.b16 %v328
      %v852 = vunpack.c.l.b16 %v329
      %v853 = vunpack.c.l.b16 %v330
      %v854 = vunpack.c.l.b16 %v331
      %v855 = vunpack.c.l.b16 %v332
      %v856 = vunpack.c.l.b16 %v333
      %v857 = vunpack.c.l.b16 %v334
      %v858 = vunpack.c.l.b16 %v335
      %v859 = vunpack.c.l.b16 %v336
      %v860 = vunpack.c.l.b16 %v337
      %v861 = vunpack.c.l.b16 %v338
      %v862 = vunpack.c.l.b16 %v339
      %v863 = vunpack.c.l.b16 %v340
      %v864 = vunpack.c.l.b16 %v341
      %v865 = vunpack.c.l.b16 %v342
      %v866 = vunpack.c.l.b16 %v343
      %v867 = vunpack.c.l.b16 %v344
      %v868 = vunpack.c.l.b16 %v345
      %v869 = vunpack.c.l.b16 %v346
      %v870 = vunpack.c.l.b16 %v347
      %v871 = vunpack.c.l.b16 %v348
      %v872 = vunpack.c.l.b16 %v349
      %v873 = vunpack.c.l.b16 %v350
      %v874 = vunpack.c.l.b16 %v351
      %v875 = vunpack.c.l.b16 %v352
      %v876 = vunpack.c.l.b16 %v353
      %v877 = vunpack.c.l.b16 %v354
      %v878 = vunpack.c.l.b16 %v355
      %v879 = vunpack.c.l.b16 %v356
      %v880 = vunpack.c.l.b16 %v357
      %v881 = vunpack.c.l.b16 %v358
      %v882 = vunpack.c.l.b16 %v359
      %v883 = vunpack.c.l.b16 %v360
      %v884 = vunpack.c.l.b16 %v361
      %v885 = vunpack.c.l.b16 %v362
      %v886 = vunpack.c.l.b16 %v363
      %v887 = vunpack.c.l.b16 %v364
      %v888 = vunpack.c.l.b16 %v365
      %v889 = vunpack.c.l.b16 %v366
      %v890 = vunpack.c.l.b16 %v367
      %v891 = vunpack.c.l.b16 %v368
      %v892 = vunpack.c.l.b16 %v369
      %v893 = vunpack.c.l.b16 %v370
      %v894 = vunpack.c.l.b16 %v371
      %v895 = vunpack.c.l.b16 %v372
      %v896 = vunpack.c.l.b16 %v373
      %v897 = vunpack.c.l.b16 %v374
      %v898 = vunpack.c.l.b16 %v375
      %v899 = vunpack.c.l.b16 %v376
      %v900 = vunpack.c.l.b16 %v377
      %v901 = vunpack.c.l.b16 %v378
      %v902 = vunpack.c.l.b16 %v379
      %v903 = vunpack.c.l.b16 %v380
      %v904 = vunpack.c.l.b16 %v381
      %v905 = vunpack.c.l.b16 %v382
      %v906 = vunpack.c.l.b16 %v383
      %v907 = vunpack.c.l.b16 %v384
      %v908 = vunpack.c.l.b16 %v385
      %v909 = vunpack.c.l.b16 %v386
      %v910 = vunpack.c.l.b16 %v387
      %v911 = vunpack.c.l.b16 %v388
      %v912 = vunpack.c.l.b16 %v389
      %v913 = vunpack.c.l.b16 %v390
      %v914 = vunpack.c.l.b16 %v391
      %v915 = vunpack.c.l.b16 %v392
      %v916 = vunpack.c.l.b16 %v393
      %v917 = vunpack.c.l.b16 %v394
      %v918 = vunpack.c.l.b16 %v395
      %v919 = vunpack.c.l.b16 %v396
      %v920 = vunpack.c.l.b16 %v397
      %v921 = vunpack.c.l.b16 %v398
      %v922 = vunpack.c.l.b16 %v399
      %v923 = vunpack.c.l.b16 %v400
      %v924 = vunpack.c.l.b16 %v401
      %v925 = vunpack.c.l.b16 %v402
      %v926 = vunpack.c.l.b16 %v403
      %v927 = vunpack.c.l.b16 %v404
      %v928 = vunpack.c.l.b16 %v405
      %v929 = vunpack.c.l.b16 %v406
      %v930 = vunpack.c.l.b16 %v407
      %v931 = vunpack.c.l.b16 %v408
      %v932 = vunpack.c.l.b16 %v409
      %v933 = vunpack.c.l.b16 %v410
      %v934 = vunpack.c.l.b16 %v411
      %v935 = vunpack.c.l.b16 %v412
      %v936 = vunpack.c.l.b16 %v413
      %v937 = vunpack.c.l.b16 %v414
      %v938 = vunpack.c.l.b16 %v415
      %v939 = vunpack.c.l.b16 %v416
      %v940 = vunpack.c.l.b16 %v417
      %v941 = vunpack.c.l.b16 %v418
      %v942 = vunpack.c.l.b16 %v419
      %v943 = vunpack.c.l.b16 %v420
      %v944 = vunpack.c.l.b16 %v421
      %v945 = vunpack.c.l.b16 %v422
      %v946 = vunpack.c.l.b16 %v423
      %v947 = vunpack.c.l.b16 %v424
      %v948 = vunpack.c.l.b16 %v425
      %v949 = vunpack.c.l.b16 %v426
      %v950 = vunpack.c.l.b16 %v427
      %v951 = vpack.c.b16 %v696, %v695
      %v952 = vpack.c.b16 %v698, %v697
      %v953 = vpack.c.b16 %v700, %v699
      %v954 = vpack.c.b16 %v702, %v701
      %v955 = vpack.c.b16 %v704, %v703
      %v956 = vpack.c.b16 %v706, %v705
      %v957 = vpack.c.b16 %v708, %v707
      %v958 = vpack.c.b16 %v710, %v709
      %v959 = vpack.c.b16 %v712, %v711
      %v960 = vpack.c.b16 %v714, %v713
      %v961 = vpack.c.b16 %v716, %v715
      %v962 = vpack.c.b16 %v718, %v717
      %v963 = vpack.c.b16 %v720, %v719
      %v964 = vpack.c.b16 %v722, %v721
      %v965 = vpack.c.b16 %v724, %v723
      %v966 = vpack.c.b16 %v726, %v725
      %v967 = vpack.c.b16 %v728, %v727
      %v968 = vpack.c.b16 %v730, %v729
      %v969 = vpack.c.b16 %v732, %v731
      %v970 = vpack.c.b16 %v734, %v733
      %v971 = vpack.c.b16 %v736, %v735
      %v972 = vpack.c.b16 %v738, %v737
      %v973 = vpack.c.b16 %v740, %v739
      %v974 = vpack.c.b16 %v742, %v741
      %v975 = vpack.c.b16 %v744, %v743
      %v976 = vpack.c.b16 %v746, %v745
      %v977 = vpack.c.b16 %v748, %v747
      %v978 = vpack.c.b16 %v750, %v749
      %v979 = vpack.c.b16 %v752, %v751
      %v980 = vpack.c.b16 %v754, %v753
      %v981 = vpack.c.b16 %v756, %v755
      %v982 = vpack.c.b16 %v758, %v757
      %v983 = vpack.c.b16 %v760, %v759
      %v984 = vpack.c.b16 %v762, %v761
      %v985 = vpack.c.b16 %v764, %v763
      %v986 = vpack.c.b16 %v766, %v765
      %v987 = vpack.c.b16 %v768, %v767
      %v988 = vpack.c.b16 %v770, %v769
      %v989 = vpack.c.b16 %v772, %v771
      %v990 = vpack.c.b16 %v774, %v773
      %v991 = vpack.c.b16 %v776, %v775
      %v992 = vpack.c.b16 %v778, %v777
      %v993 = vpack.c.b16 %v780, %v779
      %v994 = vpack.c.b16 %v782, %v781
      %v995 = vpack.c.b16 %v784, %v783
      %v996 = vpack.c.b16 %v786, %v785
      %v997 = vpack.c.b16 %v788, %v787
      %v998 = vpack.c.b16 %v790, %v789
      %v999 = vpack.c.b16 %v792, %v791
      %v1000 = vpack.c.b16 %v794, %v793
      %v1001 = vpack.c.b16 %v796, %v795
      %v1002 = vpack.c.b16 %v798, %v797
      %v1003 = vpack.c.b16 %v800, %v799
      %v1004 = vpack.c.b16 %v802, %v801
      %v1005 = vpack.c.b16 %v804, %v803
      %v1006 = vpack.c.b16 %v806, %v805
      %v1007 = vpack.c.b16 %v808, %v807
      %v1008 = vpack.c.b16 %v810, %v809
      %v1009 = vpack.c.b16 %v812, %v811
      %v1010 = vpack.c.b16 %v814, %v813
      %v1011 = vpack.c.b16 %v816, %v815
      %v1012 = vpack.c.b16 %v818, %v817
      %v1013 = vpack.c.b16 %v820, %v819
      %v1014 = vpack.c.b16 %v822, %v821
      %v1015 = vpack.c.b16 %v824, %v823
      %v1016 = vpack.c.b16 %v826, %v825
      %v1017 = vpack.c.b16 %v828, %v827
      %v1018 = vpack.c.b16 %v830, %v829
      %v1019 = vpack.c.b16 %v832, %v831
      %v1020 = vpack.c.b16 %v834, %v833
      %v1021 = vpack.c.b16 %v836, %v835
      %v1022 = vpack.c.b16 %v838, %v837
      %v1023 = vpack.c.b16 %v840, %v839
      %v1024 = vpack.c.b16 %v842, %v841
      %v1025 = vpack.c.b16 %v844, %v843
      %v1026 = vpack.c.b16 %v846, %v845
      %v1027 = vpack.c.b16 %v848, %v847
      %v1028 = vpack.c.b16 %v850, %v849
      %v1029 = vpack.c.b16 %v852, %v851
      %v1030 = vpack.c.b16 %v854, %v853
      %v1031 = vpack.c.b16 %v856, %v855
      %v1032 = vpack.c.b16 %v858, %v857
      %v1033 = vpack.c.b16 %v860, %v859
      %v1034 = vpack.c.b16 %v862, %v861
      %v1035 = vpack.c.b16 %v864, %v863
      %v1036 = vpack.c.b16 %v866, %v865
      %v1037 = vpack.c.b16 %v868, %v867
      %v1038 = vpack.c.b16 %v870, %v869
      %v1039 = vpack.c.b16 %v872, %v871
      %v1040 = vpack.c.b16 %v874, %v873
      %v1041 = vpack.c.b16 %v876, %v875
      %v1042 = vpack.c.b16 %v878, %v877
      %v1043 = vpack.c.b16 %v880, %v879
      %v1044 = vpack.c.b16 %v882, %v881
      %v1045 = vpack.c.b16 %v884, %v883
      %v1046 = vpack.c.b16 %v886, %v885
      %v1047 = vpack.c.b16 %v888, %v887
      %v1048 = vpack.c.b16 %v890, %v889
      %v1049 = vpack.c.b16 %v892, %v891
      %v1050 = vpack.c.b16 %v894, %v893
      %v1051 = vpack.c.b16 %v896, %v895
      %v1052 = vpack.c.b16 %v898, %v897
      %v1053 = vpack.c.b16 %v900, %v899
      %v1054 = vpack.c.b16 %v902, %v901
      %v1055 = vpack.c.b16 %v904, %v903
      %v1056 = vpack.c.b16 %v906, %v905
      %v1057 = vpack.c.b16 %v908, %v907
      %v1058 = vpack.c.b16 %v910, %v909
      %v1059 = vpack.c.b16 %v912, %v911
      %v1060 = vpack.c.b16 %v914, %v913
      %v1061 = vpack.c.b16 %v916, %v915
      %v1062 = vpack.c.b16 %v918, %v917
      %v1063 = vpack.c.b16 %v920, %v919
      %v1064 = vpack.c.b16 %v922, %v921
      %v1065 = vpack.c.b16 %v924, %v923
      %v1066 = vpack.c.b16 %v926, %v925
      %v1067 = vpack.c.b16 %v928, %v927
      %v1068 = vpack.c.b16 %v930, %v929
      %v1069 = vpack.c.b16 %v932, %v931
      %v1070 = vpack.c.b16 %v934, %v933
      %v1071 = vpack.c.b16 %v936, %v935
      %v1072 = vpack.c.b16 %v938, %v937
      %v1073 = vpack.c.b16 %v940, %v939
      %v1074 = vpack.c.b16 %v942, %v941
      %v1075 = vpack.c.b16 %v944, %v943
      %v1076 = vpack.c.b16 %v946, %v945
      %v1077 = vpack.c.b16 %v948, %v947
      %v1078 = vpack.c.b16 %v950, %v949
      %v1083 = vunpack.c.l.b16 %v428
      %v1084 = vunpack.c.l.b16 %v429
      %v1085 = vunpack.c.l.b16 %v430
      %v1086 = vunpack.c.l.b16 %v431
      %v1087 = vpack.c.b16 %v1084, %v1083
      %v1088 = vpack.c.b16 %v1086, %v1085
      %vm1090 = vcmask 220160
      %v1092 = vsel %vm1090, %v951, 0
      %v1095 = vsel %vm1090, %v952, 0
      %v1098 = vsel %vm1090, %v953, 0
      %v1101 = vsel %vm1090, %v954, 0
      %v1104 = vsel %vm1090, %v955, 0
      %v1107 = vsel %vm1090, %v956, 0
      %v1110 = vsel %vm1090, %v957, 0
      %v1113 = vsel %vm1090, %v958, 0
      %v1116 = vsel %vm1090, %v959, 0
      %v1119 = vsel %vm1090, %v960, 0
      %v1122 = vsel %vm1090, %v961, 0
      %v1125 = vsel %vm1090, %v962, 0
      %v1128 = vsel %vm1090, %v963, 0
      %v1131 = vsel %vm1090, %v964, 0
      %v1134 = vsel %vm1090, %v965, 0
      %v1137 = vsel %vm1090, %v966, 0
      %v1140 = vsel %vm1090, %v967, 0
      %v1143 = vsel %vm1090, %v968, 0
      %v1146 = vsel %vm1090, %v969, 0
      %v1149 = vsel %vm1090, %v970, 0
      %v1152 = vsel %vm1090, %v971, 0
      %v1155 = vsel %vm1090, %v972, 0
      %v1158 = vsel %vm1090, %v973, 0
      %v1161 = vsel %vm1090, %v974, 0
      %v1164 = vsel %vm1090, %v975, 0
      %v1167 = vsel %vm1090, %v976, 0
      %v1170 = vsel %vm1090, %v977, 0
      %v1173 = vsel %vm1090, %v978, 0
      %v1176 = vsel %vm1090, %v979, 0
      %v1179 = vsel %vm1090, %v980, 0
      %v1182 = vsel %vm1090, %v981, 0
      %v1185 = vsel %vm1090, %v982, 0
      %v1188 = vsel %vm1090, %v983, 0
      %v1191 = vsel %vm1090, %v984, 0
      %v1194 = vsel %vm1090, %v985, 0
      %v1197 = vsel %vm1090, %v986, 0
      %v1200 = vsel %vm1090, %v987, 0
      %v1203 = vsel %vm1090, %v988, 0
      %v1206 = vsel %vm1090, %v989, 0
      %v1209 = vsel %vm1090, %v990, 0
      %v1212 = vsel %vm1090, %v991, 0
      %v1215 = vsel %vm1090, %v992, 0
      %v1218 = vsel %vm1090, %v993, 0
      %v1221 = vsel %vm1090, %v994, 0
      %v1224 = vsel %vm1090, %v995, 0
      %v1227 = vsel %vm1090, %v996, 0
      %v1230 = vsel %vm1090, %v997, 0
      %v1233 = vsel %vm1090, %v998, 0
      %v1236 = vsel %vm1090, %v999, 0
      %v1239 = vsel %vm1090, %v1000, 0
      %v1242 = vsel %vm1090, %v1001, 0
      %v1245 = vsel %vm1090, %v1002, 0
      %v1248 = vsel %vm1090, %v1003, 0
      %v1251 = vsel %vm1090, %v1004, 0
      %v1254 = vsel %vm1090, %v1005, 0
      %v1257 = vsel %vm1090, %v1006, 0
      %v1260 = vsel %vm1090, %v1007, 0
      %v1263 = vsel %vm1090, %v1008, 0
      %v1266 = vsel %vm1090, %v1009, 0
      %v1269 = vsel %vm1090, %v1010, 0
      %v1272 = vsel %vm1090, %v1011, 0
      %v1275 = vsel %vm1090, %v1012, 0
      %v1278 = vsel %vm1090, %v1013, 0
      %v1281 = vsel %vm1090, %v1014, 0
      %v1284 = vsel %vm1090, %v1015, 0
      %v1287 = vsel %vm1090, %v1016, 0
      %v1290 = vsel %vm1090, %v1017, 0
      %v1293 = vsel %vm1090, %v1018, 0
      %v1296 = vsel %vm1090, %v1019, 0
      %v1299 = vsel %vm1090, %v1020, 0
      %v1302 = vsel %vm1090, %v1021, 0
      %v1305 = vsel %vm1090, %v1022, 0
      %v1308 = vsel %vm1090, %v1023, 0
      %v1311 = vsel %vm1090, %v1024, 0
      %v1314 = vsel %vm1090, %v1025, 0
      %v1317 = vsel %vm1090, %v1026, 0
      %v1320 = vsel %vm1090, %v1027, 0
      %v1323 = vsel %vm1090, %v1028, 0
      %v1326 = vsel %vm1090, %v1029, 0
      %v1329 = vsel %vm1090, %v1030, 0
      %v1332 = vsel %vm1090, %v1031, 0
      %v1335 = vsel %vm1090, %v1032, 0
      %v1338 = vsel %vm1090, %v1033, 0
      %v1341 = vsel %vm1090, %v1034, 0
      %v1344 = vsel %vm1090, %v1035, 0
      %v1347 = vsel %vm1090, %v1036, 0
      %v1350 = vsel %vm1090, %v1037, 0
      %v1353 = vsel %vm1090, %v1038, 0
      %v1356 = vsel %vm1090, %v1039, 0
      %v1359 = vsel %vm1090, %v1040, 0
      %v1362 = vsel %vm1090, %v1041, 0
      %v1365 = vsel %vm1090, %v1042, 0
      %v1368 = vsel %vm1090, %v1043, 0
      %v1371 = vsel %vm1090, %v1044, 0
      %v1374 = vsel %vm1090, %v1045, 0
      %v1377 = vsel %vm1090, %v1046, 0
      %v1380 = vsel %vm1090, %v1047, 0
      %v1383 = vsel %vm1090, %v1048, 0
      %v1386 = vsel %vm1090, %v1049, 0
      %v1389 = vsel %vm1090, %v1050, 0
      %v1392 = vsel %vm1090, %v1051, 0
      %v1395 = vsel %vm1090, %v1052, 0
      %v1398 = vsel %vm1090, %v1053, 0
      %v1401 = vsel %vm1090, %v1054, 0
      %v1404 = vsel %vm1090, %v1055, 0
      %v1407 = vsel %vm1090, %v1056, 0
      %v1410 = vsel %vm1090, %v1057, 0
      %v1413 = vsel %vm1090, %v1058, 0
      %v1416 = vsel %vm1090, %v1059, 0
      %v1419 = vsel %vm1090, %v1060, 0
      %v1422 = vsel %vm1090, %v1061, 0
      %v1425 = vsel %vm1090, %v1062, 0
      %v1428 = vsel %vm1090, %v1063, 0
      %v1431 = vsel %vm1090, %v1064, 0
      %v1434 = vsel %vm1090, %v1065, 0
      %v1437 = vsel %vm1090, %v1066, 0
      %v1440 = vsel %vm1090, %v1067, 0
      %v1443 = vsel %vm1090, %v1068, 0
      %v1446 = vsel %vm1090, %v1069, 0
      %v1449 = vsel %vm1090, %v1070, 0
      %v1452 = vsel %vm1090, %v1071, 0
      %v1455 = vsel %vm1090, %v1072, 0
      %v1458 = vsel %vm1090, %v1073, 0
      %v1461 = vsel %vm1090, %v1074, 0
      %v1464 = vsel %vm1090, %v1075, 0
      %v1467 = vsel %vm1090, %v1076, 0
      %v1470 = vsel %vm1090, %v1077, 0
      %v1473 = vsel %vm1090, %v1078, 0
      %vm1475 = vcmask 1044480
      %vm1476 = vcmask 1045504
      %v1477 = vsel %vm1475, 4294967295, 65535
      %v1478 = vsel %vm1476, %v1477, 0
      %v1480 = vand.u32 %v1088, %v1478
      %1482 = vmatprep.subr.bf16.mxu0 0
      %1483 = vmatpush1.bf16.msra.mxu0 %v1087
      %1484 = vmatprep.subr.bf16.mxu0 0
      %1485 = vmatpush1.bf16.msra.mxu0 %v1480
      %1486 = vmatprep.subr.bf16.mxu0 0
      %1487 = vmatpush1.bf16.msra.mxu0 0
      %1488 = vmatprep.subr.bf16.mxu0 0
      %1489 = vmatpush1.bf16.msra.mxu0 0
      %1490 = vmatprep.subr.bf16.mxu0 0
      %1491 = vmatpush1.bf16.msra.mxu0 0
      %1492 = vmatprep.subr.bf16.mxu0 0
      %1493 = vmatpush1.bf16.msra.mxu0 0
      %1494 = vmatprep.subr.bf16.mxu0 0
      %1495 = vmatpush1.bf16.msra.mxu0 0
      %1496 = vmatprep.subr.bf16.mxu0 0
      %1497 = vmatpush1.bf16.msra.mxu0 0
      %1498 = vmatprep.subr.bf16.mxu0 0
      %1499 = vmatpush1.bf16.msra.mxu0 0
      %1500 = vmatprep.subr.bf16.mxu0 0
      %1501 = vmatpush1.bf16.msra.mxu0 0
      %1502 = vmatprep.subr.bf16.mxu0 0
      %1503 = vmatpush1.bf16.msra.mxu0 0
      %1504 = vmatprep.subr.bf16.mxu0 0
      %1505 = vmatpush1.bf16.msra.mxu0 0
      %1506 = vmatprep.subr.bf16.mxu0 0
      %1507 = vmatpush1.bf16.msra.mxu0 0
      %1508 = vmatprep.subr.bf16.mxu0 0
      %1509 = vmatpush1.bf16.msra.mxu0 0
      %1510 = vmatprep.subr.bf16.mxu0 0
      %1511 = vmatpush1.bf16.msra.mxu0 0
      %1512 = vmatprep.subr.bf16.mxu0 0
      %1513 = vmatpush1.bf16.msra.mxu0 0
      %1514 = vmatprep.mubr.bf16.mxu0 0
      %1515 = vmatmul.mubr.bf16.gmra.mrb[0].mxu0 %v1092
      %v1516 = vpop.f32.mrb[0].mxu0
      %v1517 = vadd.f32 %v437, %v1516
      %v1518 = vpop.f32.mrb[0].mxu0
      %v1519 = vpop.f32.mrb[0].mxu0
      %v1520 = vadd.f32 %v437, %v1519
      %v1521 = vpop.f32.mrb[0].mxu0
      %1522 = vmatprep.mubr.bf16.mxu0 0
      %1523 = vmatmul.mubr.bf16.gmra.mrb[0].mxu0 %v1095
      %v1524 = vpop.f32.mrb[0].mxu0
      %v1525 = vadd.f32 %v437, %v1524
      %v1526 = vpop.f32.mrb[0].mxu0
      %v1527 = vpop.f32.mrb[0].mxu0
      %v1528 = vadd.f32 %v437, %v1527
      %v1529 = vpop.f32.mrb[0].mxu0
      %1530 = vmatprep.mubr.bf16.mxu0 0
      %1531 = vmatmul.mubr.bf16.gmra.mrb[0].mxu0 %v1098
      %v1532 = vpop.f32.mrb[0].mxu0
      %v1533 = vadd.f32 %v437, %v1532
      %v1534 = vpop.f32.mrb[0].mxu0
      %v1535 = vpop.f32.mrb[0].mxu0
      %v1536 = vadd.f32 %v437, %v1535
      %v1537 = vpop.f32.mrb[0].mxu0
      %1538 = vmatprep.mubr.bf16.mxu0 0
      %1539 = vmatmul.mubr.bf16.gmra.mrb[0].mxu0 %v1101
      %v1540 = vpop.f32.mrb[0].mxu0
      %v1541 = vadd.f32 %v437, %v1540
      %v1542 = vpop.f32.mrb[0].mxu0
      %v1543 = vpop.f32.mrb[0].mxu0
      %v1544 = vadd.f32 %v437, %v1543
      %v1545 = vpop.f32.mrb[0].mxu0
      %1546 = vmatprep.mubr.bf16.mxu0 0
      %1547 = vmatmul.mubr.bf16.gmra.mrb[0].mxu0 %v1104
      %v1548 = vpop.f32.mrb[0].mxu0
      %v1549 = vadd.f32 %v437, %v1548
      %v1550 = vpop.f32.mrb[0].mxu0
      %v1551 = vpop.f32.mrb[0].mxu0
      %v1552 = vadd.f32 %v437, %v1551
      %v1553 = vpop.f32.mrb[0].mxu0
      %1554 = vmatprep.mubr.bf16.mxu0 0
      %1555 = vmatmul.mubr.bf16.gmra.mrb[0].mxu0 %v1107
      %v1556 = vpop.f32.mrb[0].mxu0
      %v1557 = vadd.f32 %v437, %v1556
      %v1558 = vpop.f32.mrb[0].mxu0
      %v1559 = vpop.f32.mrb[0].mxu0
      %v1560 = vadd.f32 %v437, %v1559
      %v1561 = vpop.f32.mrb[0].mxu0
      %1562 = vmatprep.mubr.bf16.mxu0 0
      %1563 = vmatmul.mubr.bf16.gmra.mrb[0].mxu0 %v1110
      %v1564 = vpop.f32.mrb[0].mxu0
      %v1565 = vadd.f32 %v437, %v1564
      %v1566 = vpop.f32.mrb[0].mxu0
      %v1567 = vpop.f32.mrb[0].mxu0
      %v1568 = vadd.f32 %v437, %v1567
      %v1569 = vpop.f32.mrb[0].mxu0
      %1570 = vmatprep.mubr.bf16.mxu0 0
      %1571 = vmatmul.mubr.bf16.gmra.mrb[0].mxu0 %v1113
      %v1572 = vpop.f32.mrb[0].mxu0
      %v1573 = vadd.f32 %v437, %v1572
      %v1574 = vpop.f32.mrb[0].mxu0
      %v1575 = vpop.f32.mrb[0].mxu0
      %v1576 = vadd.f32 %v437, %v1575
      %v1577 = vpop.f32.mrb[0].mxu0
      %1578 = vmatprep.mubr.bf16.mxu0 0
      %1579 = vmatmul.mubr.bf16.gmra.mrb[0].mxu0 %v1116
      %v1580 = vpop.f32.mrb[0].mxu0
      %v1581 = vadd.f32 %v437, %v1580
      %v1582 = vpop.f32.mrb[0].mxu0
      %v1583 = vpop.f32.mrb[0].mxu0
      %v1584 = vadd.f32 %v437, %v1583
      %v1585 = vpop.f32.mrb[0].mxu0
      %1586 = vmatprep.mubr.bf16.mxu0 0
      %1587 = vmatmul.mubr.bf16.gmra.mrb[0].mxu0 %v1119
      %v1588 = vpop.f32.mrb[0].mxu0
      %v1589 = vadd.f32 %v437, %v1588
      %v1590 = vpop.f32.mrb[0].mxu0
      %v1591 = vpop.f32.mrb[0].mxu0
      %v1592 = vadd.f32 %v437, %v1591
      %v1593 = vpop.f32.mrb[0].mxu0
      %1594 = vmatprep.mubr.bf16.mxu0 0
      %1595 = vmatmul.mubr.bf16.gmra.mrb[0].mxu0 %v1122
      %v1596 = vpop.f32.mrb[0].mxu0
      %v1597 = vadd.f32 %v437, %v1596
      %v1598 = vpop.f32.mrb[0].mxu0
      %v1599 = vpop.f32.mrb[0].mxu0
      %v1600 = vadd.f32 %v437, %v1599
      %v1601 = vpop.f32.mrb[0].mxu0
      %1602 = vmatprep.mubr.bf16.mxu0 0
      %1603 = vmatmul.mubr.bf16.gmra.mrb[0].mxu0 %v1125
      %v1604 = vpop.f32.mrb[0].mxu0
      %v1605 = vadd.f32 %v437, %v1604
      %v1606 = vpop.f32.mrb[0].mxu0
      %v1607 = vpop.f32.mrb[0].mxu0
      %v1608 = vadd.f32 %v437, %v1607
      %v1609 = vpop.f32.mrb[0].mxu0
      %1610 = vmatprep.mubr.bf16.mxu0 0
      %1611 = vmatmul.mubr.bf16.gmra.mrb[0].mxu0 %v1128
      %v1612 = vpop.f32.mrb[0].mxu0
      %v1613 = vadd.f32 %v437, %v1612
      %v1614 = vpop.f32.mrb[0].mxu0
      %v1615 = vpop.f32.mrb[0].mxu0
      %v1616 = vadd.f32 %v437, %v1615
      %v1617 = vpop.f32.mrb[0].mxu0
      %1618 = vmatprep.mubr.bf16.mxu0 0
      %1619 = vmatmul.mubr.bf16.gmra.mrb[0].mxu0 %v1131
      %v1620 = vpop.f32.mrb[0].mxu0
      %v1621 = vadd.f32 %v437, %v1620
      %v1622 = vpop.f32.mrb[0].mxu0
      %v1623 = vpop.f32.mrb[0].mxu0
      %v1624 = vadd.f32 %v437, %v1623
      %v1625 = vpop.f32.mrb[0].mxu0
      %1626 = vmatprep.mubr.bf16.mxu0 0
      %1627 = vmatmul.mubr.bf16.gmra.mrb[0].mxu0 %v1134
      %v1628 = vpop.f32.mrb[0].mxu0
      %v1629 = vadd.f32 %v437, %v1628
      %v1630 = vpop.f32.mrb[0].mxu0
      %v1631 = vpop.f32.mrb[0].mxu0
      %v1632 = vadd.f32 %v437, %v1631
      %v1633 = vpop.f32.mrb[0].mxu0
      %1634 = vmatprep.mubr.bf16.mxu0 0
      %1635 = vmatmul.mubr.bf16.gmra.mrb[0].mxu0 %v1137
      %v1636 = vpop.f32.mrb[0].mxu0
      %v1637 = vadd.f32 %v437, %v1636
      %v1638 = vpop.f32.mrb[0].mxu0
      %v1639 = vpop.f32.mrb[0].mxu0
      %v1640 = vadd.f32 %v437, %v1639
      %v1641 = vpop.f32.mrb[0].mxu0
      %1642 = vmatprep.mubr.bf16.mxu0 0
      %1643 = vmatmul.mubr.bf16.gmra.mrb[0].mxu0 %v1140
      %v1644 = vpop.f32.mrb[0].mxu0
      %v1645 = vadd.f32 %v437, %v1644
      %v1646 = vpop.f32.mrb[0].mxu0
      %v1647 = vpop.f32.mrb[0].mxu0
      %v1648 = vadd.f32 %v437, %v1647
      %v1649 = vpop.f32.mrb[0].mxu0
      %1650 = vmatprep.mubr.bf16.mxu0 0
      %1651 = vmatmul.mubr.bf16.gmra.mrb[0].mxu0 %v1143
      %v1652 = vpop.f32.mrb[0].mxu0
      %v1653 = vadd.f32 %v437, %v1652
      %v1654 = vpop.f32.mrb[0].mxu0
      %v1655 = vpop.f32.mrb[0].mxu0
      %v1656 = vadd.f32 %v437, %v1655
      %v1657 = vpop.f32.mrb[0].mxu0
      %1658 = vmatprep.mubr.bf16.mxu0 0
      %1659 = vmatmul.mubr.bf16.gmra.mrb[0].mxu0 %v1146
      %v1660 = vpop.f32.mrb[0].mxu0
      %v1661 = vadd.f32 %v437, %v1660
      %v1662 = vpop.f32.mrb[0].mxu0
      %v1663 = vpop.f32.mrb[0].mxu0
      %v1664 = vadd.f32 %v437, %v1663
      %v1665 = vpop.f32.mrb[0].mxu0
      %1666 = vmatprep.mubr.bf16.mxu0 0
      %1667 = vmatmul.mubr.bf16.gmra.mrb[0].mxu0 %v1149
      %v1668 = vpop.f32.mrb[0].mxu0
      %v1669 = vadd.f32 %v437, %v1668
      %v1670 = vpop.f32.mrb[0].mxu0
      %v1671 = vpop.f32.mrb[0].mxu0
      %v1672 = vadd.f32 %v437, %v1671
      %v1673 = vpop.f32.mrb[0].mxu0
      %1674 = vmatprep.mubr.bf16.mxu0 0
      %1675 = vmatmul.mubr.bf16.gmra.mrb[0].mxu0 %v1152
      %v1676 = vpop.f32.mrb[0].mxu0
      %v1677 = vadd.f32 %v437, %v1676
      %v1678 = vpop.f32.mrb[0].mxu0
      %v1679 = vpop.f32.mrb[0].mxu0
      %v1680 = vadd.f32 %v437, %v1679
      %v1681 = vpop.f32.mrb[0].mxu0
      %1682 = vmatprep.mubr.bf16.mxu0 0
      %1683 = vmatmul.mubr.bf16.gmra.mrb[0].mxu0 %v1155
      %v1684 = vpop.f32.mrb[0].mxu0
      %v1685 = vadd.f32 %v437, %v1684
      %v1686 = vpop.f32.mrb[0].mxu0
      %v1687 = vpop.f32.mrb[0].mxu0
      %v1688 = vadd.f32 %v437, %v1687
      %v1689 = vpop.f32.mrb[0].mxu0
      %1690 = vmatprep.mubr.bf16.mxu0 0
      %1691 = vmatmul.mubr.bf16.gmra.mrb[0].mxu0 %v1158
      %v1692 = vpop.f32.mrb[0].mxu0
      %v1693 = vadd.f32 %v437, %v1692
      %v1694 = vpop.f32.mrb[0].mxu0
      %v1695 = vpop.f32.mrb[0].mxu0
      %v1696 = vadd.f32 %v437, %v1695
      %v1697 = vpop.f32.mrb[0].mxu0
      %1698 = vmatprep.mubr.bf16.mxu0 0
      %1699 = vmatmul.mubr.bf16.gmra.mrb[0].mxu0 %v1161
      %v1700 = vpop.f32.mrb[0].mxu0
      %v1701 = vadd.f32 %v437, %v1700
      %v1702 = vpop.f32.mrb[0].mxu0
      %v1703 = vpop.f32.mrb[0].mxu0
      %v1704 = vadd.f32 %v437, %v1703
      %v1705 = vpop.f32.mrb[0].mxu0
      %1706 = vmatprep.mubr.bf16.mxu0 0
      %1707 = vmatmul.mubr.bf16.gmra.mrb[0].mxu0 %v1164
      %v1708 = vpop.f32.mrb[0].mxu0
      %v1709 = vadd.f32 %v437, %v1708
      %v1710 = vpop.f32.mrb[0].mxu0
      %v1711 = vpop.f32.mrb[0].mxu0
      %v1712 = vadd.f32 %v437, %v1711
      %v1713 = vpop.f32.mrb[0].mxu0
      %1714 = vmatprep.mubr.bf16.mxu0 0
      %1715 = vmatmul.mubr.bf16.gmra.mrb[0].mxu0 %v1167
      %v1716 = vpop.f32.mrb[0].mxu0
      %v1717 = vadd.f32 %v437, %v1716
      %v1718 = vpop.f32.mrb[0].mxu0
      %v1719 = vpop.f32.mrb[0].mxu0
      %v1720 = vadd.f32 %v437, %v1719
      %v1721 = vpop.f32.mrb[0].mxu0
      %1722 = vmatprep.mubr.bf16.mxu0 0
      %1723 = vmatmul.mubr.bf16.gmra.mrb[0].mxu0 %v1170
      %v1724 = vpop.f32.mrb[0].mxu0
      %v1725 = vadd.f32 %v437, %v1724
      %v1726 = vpop.f32.mrb[0].mxu0
      %v1727 = vpop.f32.mrb[0].mxu0
      %v1728 = vadd.f32 %v437, %v1727
      %v1729 = vpop.f32.mrb[0].mxu0
      %1730 = vmatprep.mubr.bf16.mxu0 0
      %1731 = vmatmul.mubr.bf16.gmra.mrb[0].mxu0 %v1173
      %v1732 = vpop.f32.mrb[0].mxu0
      %v1733 = vadd.f32 %v437, %v1732
      %v1734 = vpop.f32.mrb[0].mxu0
      %v1735 = vpop.f32.mrb[0].mxu0
      %v1736 = vadd.f32 %v437, %v1735
      %v1737 = vpop.f32.mrb[0].mxu0
      %1738 = vmatprep.mubr.bf16.mxu0 0
      %1739 = vmatmul.mubr.bf16.gmra.mrb[0].mxu0 %v1176
      %v1740 = vpop.f32.mrb[0].mxu0
      %v1741 = vadd.f32 %v437, %v1740
      %v1742 = vpop.f32.mrb[0].mxu0
      %v1743 = vpop.f32.mrb[0].mxu0
      %v1744 = vadd.f32 %v437, %v1743
      %v1745 = vpop.f32.mrb[0].mxu0
      %1746 = vmatprep.mubr.bf16.mxu0 0
      %1747 = vmatmul.mubr.bf16.gmra.mrb[0].mxu0 %v1179
      %v1748 = vpop.f32.mrb[0].mxu0
      %v1749 = vadd.f32 %v437, %v1748
      %v1750 = vpop.f32.mrb[0].mxu0
      %v1751 = vpop.f32.mrb[0].mxu0
      %v1752 = vadd.f32 %v437, %v1751
      %v1753 = vpop.f32.mrb[0].mxu0
      %1754 = vmatprep.mubr.bf16.mxu0 0
      %1755 = vmatmul.mubr.bf16.gmra.mrb[0].mxu0 %v1182
      %v1756 = vpop.f32.mrb[0].mxu0
      %v1757 = vadd.f32 %v437, %v1756
      %v1758 = vpop.f32.mrb[0].mxu0
      %v1759 = vpop.f32.mrb[0].mxu0
      %v1760 = vadd.f32 %v437, %v1759
      %v1761 = vpop.f32.mrb[0].mxu0
      %1762 = vmatprep.mubr.bf16.mxu0 0
      %1763 = vmatmul.mubr.bf16.gmra.mrb[0].mxu0 %v1185
      %v1764 = vpop.f32.mrb[0].mxu0
      %v1765 = vadd.f32 %v437, %v1764
      %v1766 = vpop.f32.mrb[0].mxu0
      %v1767 = vpop.f32.mrb[0].mxu0
      %v1768 = vadd.f32 %v437, %v1767
      %v1769 = vpop.f32.mrb[0].mxu0
      %1770 = vmatprep.mubr.bf16.mxu0 0
      %1771 = vmatmul.mubr.bf16.gmra.mrb[0].mxu0 %v1188
      %v1772 = vpop.f32.mrb[0].mxu0
      %v1773 = vadd.f32 %v437, %v1772
      %v1774 = vpop.f32.mrb[0].mxu0
      %v1775 = vpop.f32.mrb[0].mxu0
      %v1776 = vadd.f32 %v437, %v1775
      %v1777 = vpop.f32.mrb[0].mxu0
      %1778 = vmatprep.mubr.bf16.mxu0 0
      %1779 = vmatmul.mubr.bf16.gmra.mrb[0].mxu0 %v1191
      %v1780 = vpop.f32.mrb[0].mxu0
      %v1781 = vadd.f32 %v437, %v1780
      %v1782 = vpop.f32.mrb[0].mxu0
      %v1783 = vpop.f32.mrb[0].mxu0
      %v1784 = vadd.f32 %v437, %v1783
      %v1785 = vpop.f32.mrb[0].mxu0
      %1786 = vmatprep.mubr.bf16.mxu0 0
      %1787 = vmatmul.mubr.bf16.gmra.mrb[0].mxu0 %v1194
      %v1788 = vpop.f32.mrb[0].mxu0
      %v1789 = vadd.f32 %v437, %v1788
      %v1790 = vpop.f32.mrb[0].mxu0
      %v1791 = vpop.f32.mrb[0].mxu0
      %v1792 = vadd.f32 %v437, %v1791
      %v1793 = vpop.f32.mrb[0].mxu0
      %1794 = vmatprep.mubr.bf16.mxu0 0
      %1795 = vmatmul.mubr.bf16.gmra.mrb[0].mxu0 %v1197
      %v1796 = vpop.f32.mrb[0].mxu0
      %v1797 = vadd.f32 %v437, %v1796
      %v1798 = vpop.f32.mrb[0].mxu0
      %v1799 = vpop.f32.mrb[0].mxu0
      %v1800 = vadd.f32 %v437, %v1799
      %v1801 = vpop.f32.mrb[0].mxu0
      %1802 = vmatprep.mubr.bf16.mxu0 0
      %1803 = vmatmul.mubr.bf16.gmra.mrb[0].mxu0 %v1200
      %v1804 = vpop.f32.mrb[0].mxu0
      %v1805 = vadd.f32 %v437, %v1804
      %v1806 = vpop.f32.mrb[0].mxu0
      %v1807 = vpop.f32.mrb[0].mxu0
      %v1808 = vadd.f32 %v437, %v1807
      %v1809 = vpop.f32.mrb[0].mxu0
      %1810 = vmatprep.mubr.bf16.mxu0 0
      %1811 = vmatmul.mubr.bf16.gmra.mrb[0].mxu0 %v1203
      %v1812 = vpop.f32.mrb[0].mxu0
      %v1813 = vadd.f32 %v437, %v1812
      %v1814 = vpop.f32.mrb[0].mxu0
      %v1815 = vpop.f32.mrb[0].mxu0
      %v1816 = vadd.f32 %v437, %v1815
      %v1817 = vpop.f32.mrb[0].mxu0
      %1818 = vmatprep.mubr.bf16.mxu0 0
      %1819 = vmatmul.mubr.bf16.gmra.mrb[0].mxu0 %v1206
      %v1820 = vpop.f32.mrb[0].mxu0
      %v1821 = vadd.f32 %v437, %v1820
      %v1822 = vpop.f32.mrb[0].mxu0
      %v1823 = vpop.f32.mrb[0].mxu0
      %v1824 = vadd.f32 %v437, %v1823
      %v1825 = vpop.f32.mrb[0].mxu0
      %1826 = vmatprep.mubr.bf16.mxu0 0
      %1827 = vmatmul.mubr.bf16.gmra.mrb[0].mxu0 %v1209
      %v1828 = vpop.f32.mrb[0].mxu0
      %v1829 = vadd.f32 %v437, %v1828
      %v1830 = vpop.f32.mrb[0].mxu0
      %v1831 = vpop.f32.mrb[0].mxu0
      %v1832 = vadd.f32 %v437, %v1831
      %v1833 = vpop.f32.mrb[0].mxu0
      %1834 = vmatprep.mubr.bf16.mxu0 0
      %1835 = vmatmul.mubr.bf16.gmra.mrb[0].mxu0 %v1212
      %v1836 = vpop.f32.mrb[0].mxu0
      %v1837 = vadd.f32 %v437, %v1836
      %v1838 = vpop.f32.mrb[0].mxu0
      %v1839 = vpop.f32.mrb[0].mxu0
      %v1840 = vadd.f32 %v437, %v1839
      %v1841 = vpop.f32.mrb[0].mxu0
      %1842 = vmatprep.mubr.bf16.mxu0 0
      %1843 = vmatmul.mubr.bf16.gmra.mrb[0].mxu0 %v1215
      %v1844 = vpop.f32.mrb[0].mxu0
      %v1845 = vadd.f32 %v437, %v1844
      %v1846 = vpop.f32.mrb[0].mxu0
      %v1847 = vpop.f32.mrb[0].mxu0
      %v1848 = vadd.f32 %v437, %v1847
      %v1849 = vpop.f32.mrb[0].mxu0
      %1850 = vmatprep.mubr.bf16.mxu0 0
      %1851 = vmatmul.mubr.bf16.gmra.mrb[0].mxu0 %v1218
      %v1852 = vpop.f32.mrb[0].mxu0
      %v1853 = vadd.f32 %v437, %v1852
      %v1854 = vpop.f32.mrb[0].mxu0
      %v1855 = vpop.f32.mrb[0].mxu0
      %v1856 = vadd.f32 %v437, %v1855
      %v1857 = vpop.f32.mrb[0].mxu0
      %1858 = vmatprep.mubr.bf16.mxu0 0
      %1859 = vmatmul.mubr.bf16.gmra.mrb[0].mxu0 %v1221
      %v1860 = vpop.f32.mrb[0].mxu0
      %v1861 = vadd.f32 %v437, %v1860
      %v1862 = vpop.f32.mrb[0].mxu0
      %v1863 = vpop.f32.mrb[0].mxu0
      %v1864 = vadd.f32 %v437, %v1863
      %v1865 = vpop.f32.mrb[0].mxu0
      %1866 = vmatprep.mubr.bf16.mxu0 0
      %1867 = vmatmul.mubr.bf16.gmra.mrb[0].mxu0 %v1224
      %v1868 = vpop.f32.mrb[0].mxu0
      %v1869 = vadd.f32 %v437, %v1868
      %v1870 = vpop.f32.mrb[0].mxu0
      %v1871 = vpop.f32.mrb[0].mxu0
      %v1872 = vadd.f32 %v437, %v1871
      %v1873 = vpop.f32.mrb[0].mxu0
      %1874 = vmatprep.mubr.bf16.mxu0 0
      %1875 = vmatmul.mubr.bf16.gmra.mrb[0].mxu0 %v1227
      %v1876 = vpop.f32.mrb[0].mxu0
      %v1877 = vadd.f32 %v437, %v1876
      %v1878 = vpop.f32.mrb[0].mxu0
      %v1879 = vpop.f32.mrb[0].mxu0
      %v1880 = vadd.f32 %v437, %v1879
      %v1881 = vpop.f32.mrb[0].mxu0
      %1882 = vmatprep.mubr.bf16.mxu0 0
      %1883 = vmatmul.mubr.bf16.gmra.mrb[0].mxu0 %v1230
      %v1884 = vpop.f32.mrb[0].mxu0
      %v1885 = vadd.f32 %v437, %v1884
      %v1886 = vpop.f32.mrb[0].mxu0
      %v1887 = vpop.f32.mrb[0].mxu0
      %v1888 = vadd.f32 %v437, %v1887
      %v1889 = vpop.f32.mrb[0].mxu0
      %1890 = vmatprep.mubr.bf16.mxu0 0
      %1891 = vmatmul.mubr.bf16.gmra.mrb[0].mxu0 %v1233
      %v1892 = vpop.f32.mrb[0].mxu0
      %v1893 = vadd.f32 %v437, %v1892
      %v1894 = vpop.f32.mrb[0].mxu0
      %v1895 = vpop.f32.mrb[0].mxu0
      %v1896 = vadd.f32 %v437, %v1895
      %v1897 = vpop.f32.mrb[0].mxu0
      %1898 = vmatprep.mubr.bf16.mxu0 0
      %1899 = vmatmul.mubr.bf16.gmra.mrb[0].mxu0 %v1236
      %v1900 = vpop.f32.mrb[0].mxu0
      %v1901 = vadd.f32 %v437, %v1900
      %v1902 = vpop.f32.mrb[0].mxu0
      %v1903 = vpop.f32.mrb[0].mxu0
      %v1904 = vadd.f32 %v437, %v1903
      %v1905 = vpop.f32.mrb[0].mxu0
      %1906 = vmatprep.mubr.bf16.mxu0 0
      %1907 = vmatmul.mubr.bf16.gmra.mrb[0].mxu0 %v1239
      %v1908 = vpop.f32.mrb[0].mxu0
      %v1909 = vadd.f32 %v437, %v1908
      %v1910 = vpop.f32.mrb[0].mxu0
      %v1911 = vpop.f32.mrb[0].mxu0
      %v1912 = vadd.f32 %v437, %v1911
      %v1913 = vpop.f32.mrb[0].mxu0
      %1914 = vmatprep.mubr.bf16.mxu0 0
      %1915 = vmatmul.mubr.bf16.gmra.mrb[0].mxu0 %v1242
      %v1916 = vpop.f32.mrb[0].mxu0
      %v1917 = vadd.f32 %v437, %v1916
      %v1918 = vpop.f32.mrb[0].mxu0
      %v1919 = vpop.f32.mrb[0].mxu0
      %v1920 = vadd.f32 %v437, %v1919
      %v1921 = vpop.f32.mrb[0].mxu0
      %1922 = vmatprep.mubr.bf16.mxu0 0
      %1923 = vmatmul.mubr.bf16.gmra.mrb[0].mxu0 %v1245
      %v1924 = vpop.f32.mrb[0].mxu0
      %v1925 = vadd.f32 %v437, %v1924
      %v1926 = vpop.f32.mrb[0].mxu0
      %v1927 = vpop.f32.mrb[0].mxu0
      %v1928 = vadd.f32 %v437, %v1927
      %v1929 = vpop.f32.mrb[0].mxu0
      %1930 = vmatprep.mubr.bf16.mxu0 0
      %1931 = vmatmul.mubr.bf16.gmra.mrb[0].mxu0 %v1248
      %v1932 = vpop.f32.mrb[0].mxu0
      %v1933 = vadd.f32 %v437, %v1932
      %v1934 = vpop.f32.mrb[0].mxu0
      %v1935 = vpop.f32.mrb[0].mxu0
      %v1936 = vadd.f32 %v437, %v1935
      %v1937 = vpop.f32.mrb[0].mxu0
      %1938 = vmatprep.mubr.bf16.mxu0 0
      %1939 = vmatmul.mubr.bf16.gmra.mrb[0].mxu0 %v1251
      %v1940 = vpop.f32.mrb[0].mxu0
      %v1941 = vadd.f32 %v437, %v1940
      %v1942 = vpop.f32.mrb[0].mxu0
      %v1943 = vpop.f32.mrb[0].mxu0
      %v1944 = vadd.f32 %v437, %v1943
      %v1945 = vpop.f32.mrb[0].mxu0
      %1946 = vmatprep.mubr.bf16.mxu0 0
      %1947 = vmatmul.mubr.bf16.gmra.mrb[0].mxu0 %v1254
      %v1948 = vpop.f32.mrb[0].mxu0
      %v1949 = vadd.f32 %v437, %v1948
      %v1950 = vpop.f32.mrb[0].mxu0
      %v1951 = vpop.f32.mrb[0].mxu0
      %v1952 = vadd.f32 %v437, %v1951
      %v1953 = vpop.f32.mrb[0].mxu0
      %1954 = vmatprep.mubr.bf16.mxu0 0
      %1955 = vmatmul.mubr.bf16.gmra.mrb[0].mxu0 %v1257
      %v1956 = vpop.f32.mrb[0].mxu0
      %v1957 = vadd.f32 %v437, %v1956
      %v1958 = vpop.f32.mrb[0].mxu0
      %v1959 = vpop.f32.mrb[0].mxu0
      %v1960 = vadd.f32 %v437, %v1959
      %v1961 = vpop.f32.mrb[0].mxu0
      %1962 = vmatprep.mubr.bf16.mxu0 0
      %1963 = vmatmul.mubr.bf16.gmra.mrb[0].mxu0 %v1260
      %v1964 = vpop.f32.mrb[0].mxu0
      %v1965 = vadd.f32 %v437, %v1964
      %v1966 = vpop.f32.mrb[0].mxu0
      %v1967 = vpop.f32.mrb[0].mxu0
      %v1968 = vadd.f32 %v437, %v1967
      %v1969 = vpop.f32.mrb[0].mxu0
      %1970 = vmatprep.mubr.bf16.mxu0 0
      %1971 = vmatmul.mubr.bf16.gmra.mrb[0].mxu0 %v1263
      %v1972 = vpop.f32.mrb[0].mxu0
      %v1973 = vadd.f32 %v437, %v1972
      %v1974 = vpop.f32.mrb[0].mxu0
      %v1975 = vpop.f32.mrb[0].mxu0
      %v1976 = vadd.f32 %v437, %v1975
      %v1977 = vpop.f32.mrb[0].mxu0
      %1978 = vmatprep.mubr.bf16.mxu0 0
      %1979 = vmatmul.mubr.bf16.gmra.mrb[0].mxu0 %v1266
      %v1980 = vpop.f32.mrb[0].mxu0
      %v1981 = vadd.f32 %v437, %v1980
      %v1982 = vpop.f32.mrb[0].mxu0
      %v1983 = vpop.f32.mrb[0].mxu0
      %v1984 = vadd.f32 %v437, %v1983
      %v1985 = vpop.f32.mrb[0].mxu0
      %1986 = vmatprep.mubr.bf16.mxu0 0
      %1987 = vmatmul.mubr.bf16.gmra.mrb[0].mxu0 %v1269
      %v1988 = vpop.f32.mrb[0].mxu0
      %v1989 = vadd.f32 %v437, %v1988
      %v1990 = vpop.f32.mrb[0].mxu0
      %v1991 = vpop.f32.mrb[0].mxu0
      %v1992 = vadd.f32 %v437, %v1991
      %v1993 = vpop.f32.mrb[0].mxu0
      %1994 = vmatprep.mubr.bf16.mxu0 0
      %1995 = vmatmul.mubr.bf16.gmra.mrb[0].mxu0 %v1272
      %v1996 = vpop.f32.mrb[0].mxu0
      %v1997 = vadd.f32 %v437, %v1996
      %v1998 = vpop.f32.mrb[0].mxu0
      %v1999 = vpop.f32.mrb[0].mxu0
      %v2000 = vadd.f32 %v437, %v1999
      %v2001 = vpop.f32.mrb[0].mxu0
      %2002 = vmatprep.mubr.bf16.mxu0 0
      %2003 = vmatmul.mubr.bf16.gmra.mrb[0].mxu0 %v1275
      %v2004 = vpop.f32.mrb[0].mxu0
      %v2005 = vadd.f32 %v437, %v2004
      %v2006 = vpop.f32.mrb[0].mxu0
      %v2007 = vpop.f32.mrb[0].mxu0
      %v2008 = vadd.f32 %v437, %v2007
      %v2009 = vpop.f32.mrb[0].mxu0
      %2010 = vmatprep.mubr.bf16.mxu0 0
      %2011 = vmatmul.mubr.bf16.gmra.mrb[0].mxu0 %v1278
      %v2012 = vpop.f32.mrb[0].mxu0
      %v2013 = vadd.f32 %v437, %v2012
      %v2014 = vpop.f32.mrb[0].mxu0
      %v2015 = vpop.f32.mrb[0].mxu0
      %v2016 = vadd.f32 %v437, %v2015
      %v2017 = vpop.f32.mrb[0].mxu0
      %2018 = vmatprep.mubr.bf16.mxu0 0
      %2019 = vmatmul.mubr.bf16.gmra.mrb[0].mxu0 %v1281
      %v2020 = vpop.f32.mrb[0].mxu0
      %v2021 = vadd.f32 %v437, %v2020
      %v2022 = vpop.f32.mrb[0].mxu0
      %v2023 = vpop.f32.mrb[0].mxu0
      %v2024 = vadd.f32 %v437, %v2023
      %v2025 = vpop.f32.mrb[0].mxu0
      %2026 = vmatprep.mubr.bf16.mxu0 0
      %2027 = vmatmul.mubr.bf16.gmra.mrb[0].mxu0 %v1284
      %v2028 = vpop.f32.mrb[0].mxu0
      %v2029 = vadd.f32 %v437, %v2028
      %v2030 = vpop.f32.mrb[0].mxu0
      %v2031 = vpop.f32.mrb[0].mxu0
      %v2032 = vadd.f32 %v437, %v2031
      %v2033 = vpop.f32.mrb[0].mxu0
      %2034 = vmatprep.mubr.bf16.mxu0 0
      %2035 = vmatmul.mubr.bf16.gmra.mrb[0].mxu0 %v1287
      %v2036 = vpop.f32.mrb[0].mxu0
      %v2037 = vadd.f32 %v437, %v2036
      %v2038 = vpop.f32.mrb[0].mxu0
      %v2039 = vpop.f32.mrb[0].mxu0
      %v2040 = vadd.f32 %v437, %v2039
      %v2041 = vpop.f32.mrb[0].mxu0
      %2042 = vmatprep.mubr.bf16.mxu0 0
      %2043 = vmatmul.mubr.bf16.gmra.mrb[0].mxu0 %v1290
      %v2044 = vpop.f32.mrb[0].mxu0
      %v2045 = vadd.f32 %v437, %v2044
      %v2046 = vpop.f32.mrb[0].mxu0
      %v2047 = vpop.f32.mrb[0].mxu0
      %v2048 = vadd.f32 %v437, %v2047
      %v2049 = vpop.f32.mrb[0].mxu0
      %2050 = vmatprep.mubr.bf16.mxu0 0
      %2051 = vmatmul.mubr.bf16.gmra.mrb[0].mxu0 %v1293
      %v2052 = vpop.f32.mrb[0].mxu0
      %v2053 = vadd.f32 %v437, %v2052
      %v2054 = vpop.f32.mrb[0].mxu0
      %v2055 = vpop.f32.mrb[0].mxu0
      %v2056 = vadd.f32 %v437, %v2055
      %v2057 = vpop.f32.mrb[0].mxu0
      %2058 = vmatprep.mubr.bf16.mxu0 0
      %2059 = vmatmul.mubr.bf16.gmra.mrb[0].mxu0 %v1296
      %v2060 = vpop.f32.mrb[0].mxu0
      %v2061 = vadd.f32 %v437, %v2060
      %v2062 = vpop.f32.mrb[0].mxu0
      %v2063 = vpop.f32.mrb[0].mxu0
      %v2064 = vadd.f32 %v437, %v2063
      %v2065 = vpop.f32.mrb[0].mxu0
      %2066 = vmatprep.mubr.bf16.mxu0 0
      %2067 = vmatmul.mubr.bf16.gmra.mrb[0].mxu0 %v1299
      %v2068 = vpop.f32.mrb[0].mxu0
      %v2069 = vadd.f32 %v437, %v2068
      %v2070 = vpop.f32.mrb[0].mxu0
      %v2071 = vpop.f32.mrb[0].mxu0
      %v2072 = vadd.f32 %v437, %v2071
      %v2073 = vpop.f32.mrb[0].mxu0
      %2074 = vmatprep.mubr.bf16.mxu0 0
      %2075 = vmatmul.mubr.bf16.gmra.mrb[0].mxu0 %v1302
      %v2076 = vpop.f32.mrb[0].mxu0
      %v2077 = vadd.f32 %v437, %v2076
      %v2078 = vpop.f32.mrb[0].mxu0
      %v2079 = vpop.f32.mrb[0].mxu0
      %v2080 = vadd.f32 %v437, %v2079
      %v2081 = vpop.f32.mrb[0].mxu0
      %2082 = vmatprep.mubr.bf16.mxu0 0
      %2083 = vmatmul.mubr.bf16.gmra.mrb[0].mxu0 %v1305
      %v2084 = vpop.f32.mrb[0].mxu0
      %v2085 = vadd.f32 %v437, %v2084
      %v2086 = vpop.f32.mrb[0].mxu0
      %v2087 = vpop.f32.mrb[0].mxu0
      %v2088 = vadd.f32 %v437, %v2087
      %v2089 = vpop.f32.mrb[0].mxu0
      %2090 = vmatprep.mubr.bf16.mxu0 0
      %2091 = vmatmul.mubr.bf16.gmra.mrb[0].mxu0 %v1308
      %v2092 = vpop.f32.mrb[0].mxu0
      %v2093 = vadd.f32 %v437, %v2092
      %v2094 = vpop.f32.mrb[0].mxu0
      %v2095 = vpop.f32.mrb[0].mxu0
      %v2096 = vadd.f32 %v437, %v2095
      %v2097 = vpop.f32.mrb[0].mxu0
      %2098 = vmatprep.mubr.bf16.mxu0 0
      %2099 = vmatmul.mubr.bf16.gmra.mrb[0].mxu0 %v1311
      %v2100 = vpop.f32.mrb[0].mxu0
      %v2101 = vadd.f32 %v437, %v2100
      %v2102 = vpop.f32.mrb[0].mxu0
      %v2103 = vpop.f32.mrb[0].mxu0
      %v2104 = vadd.f32 %v437, %v2103
      %v2105 = vpop.f32.mrb[0].mxu0
      %2106 = vmatprep.mubr.bf16.mxu0 0
      %2107 = vmatmul.mubr.bf16.gmra.mrb[0].mxu0 %v1314
      %v2108 = vpop.f32.mrb[0].mxu0
      %v2109 = vadd.f32 %v437, %v2108
      %v2110 = vpop.f32.mrb[0].mxu0
      %v2111 = vpop.f32.mrb[0].mxu0
      %v2112 = vadd.f32 %v437, %v2111
      %v2113 = vpop.f32.mrb[0].mxu0
      %2114 = vmatprep.mubr.bf16.mxu0 0
      %2115 = vmatmul.mubr.bf16.gmra.mrb[0].mxu0 %v1317
      %v2116 = vpop.f32.mrb[0].mxu0
      %v2117 = vadd.f32 %v437, %v2116
      %v2118 = vpop.f32.mrb[0].mxu0
      %v2119 = vpop.f32.mrb[0].mxu0
      %v2120 = vadd.f32 %v437, %v2119
      %v2121 = vpop.f32.mrb[0].mxu0
      %2122 = vmatprep.mubr.bf16.mxu0 0
      %2123 = vmatmul.mubr.bf16.gmra.mrb[0].mxu0 %v1320
      %v2124 = vpop.f32.mrb[0].mxu0
      %v2125 = vadd.f32 %v437, %v2124
      %v2126 = vpop.f32.mrb[0].mxu0
      %v2127 = vpop.f32.mrb[0].mxu0
      %v2128 = vadd.f32 %v437, %v2127
      %v2129 = vpop.f32.mrb[0].mxu0
      %2130 = vmatprep.mubr.bf16.mxu0 0
      %2131 = vmatmul.mubr.bf16.gmra.mrb[0].mxu0 %v1323
      %v2132 = vpop.f32.mrb[0].mxu0
      %v2133 = vadd.f32 %v437, %v2132
      %v2134 = vpop.f32.mrb[0].mxu0
      %v2135 = vpop.f32.mrb[0].mxu0
      %v2136 = vadd.f32 %v437, %v2135
      %v2137 = vpop.f32.mrb[0].mxu0
      %2138 = vmatprep.mubr.bf16.mxu0 0
      %2139 = vmatmul.mubr.bf16.gmra.mrb[0].mxu0 %v1326
      %v2140 = vpop.f32.mrb[0].mxu0
      %v2141 = vadd.f32 %v437, %v2140
      %v2142 = vpop.f32.mrb[0].mxu0
      %v2143 = vpop.f32.mrb[0].mxu0
      %v2144 = vadd.f32 %v437, %v2143
      %v2145 = vpop.f32.mrb[0].mxu0
      %2146 = vmatprep.mubr.bf16.mxu0 0
      %2147 = vmatmul.mubr.bf16.gmra.mrb[0].mxu0 %v1329
      %v2148 = vpop.f32.mrb[0].mxu0
      %v2149 = vadd.f32 %v437, %v2148
      %v2150 = vpop.f32.mrb[0].mxu0
      %v2151 = vpop.f32.mrb[0].mxu0
      %v2152 = vadd.f32 %v437, %v2151
      %v2153 = vpop.f32.mrb[0].mxu0
      %2154 = vmatprep.mubr.bf16.mxu0 0
      %2155 = vmatmul.mubr.bf16.gmra.mrb[0].mxu0 %v1332
      %v2156 = vpop.f32.mrb[0].mxu0
      %v2157 = vadd.f32 %v437, %v2156
      %v2158 = vpop.f32.mrb[0].mxu0
      %v2159 = vpop.f32.mrb[0].mxu0
      %v2160 = vadd.f32 %v437, %v2159
      %v2161 = vpop.f32.mrb[0].mxu0
      %2162 = vmatprep.mubr.bf16.mxu0 0
      %2163 = vmatmul.mubr.bf16.gmra.mrb[0].mxu0 %v1335
      %v2164 = vpop.f32.mrb[0].mxu0
      %v2165 = vadd.f32 %v437, %v2164
      %v2166 = vpop.f32.mrb[0].mxu0
      %v2167 = vpop.f32.mrb[0].mxu0
      %v2168 = vadd.f32 %v437, %v2167
      %v2169 = vpop.f32.mrb[0].mxu0
      %2170 = vmatprep.mubr.bf16.mxu0 0
      %2171 = vmatmul.mubr.bf16.gmra.mrb[0].mxu0 %v1338
      %v2172 = vpop.f32.mrb[0].mxu0
      %v2173 = vadd.f32 %v437, %v2172
      %v2174 = vpop.f32.mrb[0].mxu0
      %v2175 = vpop.f32.mrb[0].mxu0
      %v2176 = vadd.f32 %v437, %v2175
      %v2177 = vpop.f32.mrb[0].mxu0
      %2178 = vmatprep.mubr.bf16.mxu0 0
      %2179 = vmatmul.mubr.bf16.gmra.mrb[0].mxu0 %v1341
      %v2180 = vpop.f32.mrb[0].mxu0
      %v2181 = vadd.f32 %v437, %v2180
      %v2182 = vpop.f32.mrb[0].mxu0
      %v2183 = vpop.f32.mrb[0].mxu0
      %v2184 = vadd.f32 %v437, %v2183
      %v2185 = vpop.f32.mrb[0].mxu0
      %2186 = vmatprep.mubr.bf16.mxu0 0
      %2187 = vmatmul.mubr.bf16.gmra.mrb[0].mxu0 %v1344
      %v2188 = vpop.f32.mrb[0].mxu0
      %v2189 = vadd.f32 %v437, %v2188
      %v2190 = vpop.f32.mrb[0].mxu0
      %v2191 = vpop.f32.mrb[0].mxu0
      %v2192 = vadd.f32 %v437, %v2191
      %v2193 = vpop.f32.mrb[0].mxu0
      %2194 = vmatprep.mubr.bf16.mxu0 0
      %2195 = vmatmul.mubr.bf16.gmra.mrb[0].mxu0 %v1347
      %v2196 = vpop.f32.mrb[0].mxu0
      %v2197 = vadd.f32 %v437, %v2196
      %v2198 = vpop.f32.mrb[0].mxu0
      %v2199 = vpop.f32.mrb[0].mxu0
      %v2200 = vadd.f32 %v437, %v2199
      %v2201 = vpop.f32.mrb[0].mxu0
      %2202 = vmatprep.mubr.bf16.mxu0 0
      %2203 = vmatmul.mubr.bf16.gmra.mrb[0].mxu0 %v1350
      %v2204 = vpop.f32.mrb[0].mxu0
      %v2205 = vadd.f32 %v437, %v2204
      %v2206 = vpop.f32.mrb[0].mxu0
      %v2207 = vpop.f32.mrb[0].mxu0
      %v2208 = vadd.f32 %v437, %v2207
      %v2209 = vpop.f32.mrb[0].mxu0
      %2210 = vmatprep.mubr.bf16.mxu0 0
      %2211 = vmatmul.mubr.bf16.gmra.mrb[0].mxu0 %v1353
      %v2212 = vpop.f32.mrb[0].mxu0
      %v2213 = vadd.f32 %v437, %v2212
      %v2214 = vpop.f32.mrb[0].mxu0
      %v2215 = vpop.f32.mrb[0].mxu0
      %v2216 = vadd.f32 %v437, %v2215
      %v2217 = vpop.f32.mrb[0].mxu0
      %2218 = vmatprep.mubr.bf16.mxu0 0
      %2219 = vmatmul.mubr.bf16.gmra.mrb[0].mxu0 %v1356
      %v2220 = vpop.f32.mrb[0].mxu0
      %v2221 = vadd.f32 %v437, %v2220
      %v2222 = vpop.f32.mrb[0].mxu0
      %v2223 = vpop.f32.mrb[0].mxu0
      %v2224 = vadd.f32 %v437, %v2223
      %v2225 = vpop.f32.mrb[0].mxu0
      %2226 = vmatprep.mubr.bf16.mxu0 0
      %2227 = vmatmul.mubr.bf16.gmra.mrb[0].mxu0 %v1359
      %v2228 = vpop.f32.mrb[0].mxu0
      %v2229 = vadd.f32 %v437, %v2228
      %v2230 = vpop.f32.mrb[0].mxu0
      %v2231 = vpop.f32.mrb[0].mxu0
      %v2232 = vadd.f32 %v437, %v2231
      %v2233 = vpop.f32.mrb[0].mxu0
      %2234 = vmatprep.mubr.bf16.mxu0 0
      %2235 = vmatmul.mubr.bf16.gmra.mrb[0].mxu0 %v1362
      %v2236 = vpop.f32.mrb[0].mxu0
      %v2237 = vadd.f32 %v437, %v2236
      %v2238 = vpop.f32.mrb[0].mxu0
      %v2239 = vpop.f32.mrb[0].mxu0
      %v2240 = vadd.f32 %v437, %v2239
      %v2241 = vpop.f32.mrb[0].mxu0
      %2242 = vmatprep.mubr.bf16.mxu0 0
      %2243 = vmatmul.mubr.bf16.gmra.mrb[0].mxu0 %v1365
      %v2244 = vpop.f32.mrb[0].mxu0
      %v2245 = vadd.f32 %v437, %v2244
      %v2246 = vpop.f32.mrb[0].mxu0
      %v2247 = vpop.f32.mrb[0].mxu0
      %v2248 = vadd.f32 %v437, %v2247
      %v2249 = vpop.f32.mrb[0].mxu0
      %2250 = vmatprep.mubr.bf16.mxu0 0
      %2251 = vmatmul.mubr.bf16.gmra.mrb[0].mxu0 %v1368
      %v2252 = vpop.f32.mrb[0].mxu0
      %v2253 = vadd.f32 %v437, %v2252
      %v2254 = vpop.f32.mrb[0].mxu0
      %v2255 = vpop.f32.mrb[0].mxu0
      %v2256 = vadd.f32 %v437, %v2255
      %v2257 = vpop.f32.mrb[0].mxu0
      %2258 = vmatprep.mubr.bf16.mxu0 0
      %2259 = vmatmul.mubr.bf16.gmra.mrb[0].mxu0 %v1371
      %v2260 = vpop.f32.mrb[0].mxu0
      %v2261 = vadd.f32 %v437, %v2260
      %v2262 = vpop.f32.mrb[0].mxu0
      %v2263 = vpop.f32.mrb[0].mxu0
      %v2264 = vadd.f32 %v437, %v2263
      %v2265 = vpop.f32.mrb[0].mxu0
      %2266 = vmatprep.mubr.bf16.mxu0 0
      %2267 = vmatmul.mubr.bf16.gmra.mrb[0].mxu0 %v1374
      %v2268 = vpop.f32.mrb[0].mxu0
      %v2269 = vadd.f32 %v437, %v2268
      %v2270 = vpop.f32.mrb[0].mxu0
      %v2271 = vpop.f32.mrb[0].mxu0
      %v2272 = vadd.f32 %v437, %v2271
      %v2273 = vpop.f32.mrb[0].mxu0
      %2274 = vmatprep.mubr.bf16.mxu0 0
      %2275 = vmatmul.mubr.bf16.gmra.mrb[0].mxu0 %v1377
      %v2276 = vpop.f32.mrb[0].mxu0
      %v2277 = vadd.f32 %v437, %v2276
      %v2278 = vpop.f32.mrb[0].mxu0
      %v2279 = vpop.f32.mrb[0].mxu0
      %v2280 = vadd.f32 %v437, %v2279
      %v2281 = vpop.f32.mrb[0].mxu0
      %2282 = vmatprep.mubr.bf16.mxu0 0
      %2283 = vmatmul.mubr.bf16.gmra.mrb[0].mxu0 %v1380
      %v2284 = vpop.f32.mrb[0].mxu0
      %v2285 = vadd.f32 %v437, %v2284
      %v2286 = vpop.f32.mrb[0].mxu0
      %v2287 = vpop.f32.mrb[0].mxu0
      %v2288 = vadd.f32 %v437, %v2287
      %v2289 = vpop.f32.mrb[0].mxu0
      %2290 = vmatprep.mubr.bf16.mxu0 0
      %2291 = vmatmul.mubr.bf16.gmra.mrb[0].mxu0 %v1383
      %v2292 = vpop.f32.mrb[0].mxu0
      %v2293 = vadd.f32 %v437, %v2292
      %v2294 = vpop.f32.mrb[0].mxu0
      %v2295 = vpop.f32.mrb[0].mxu0
      %v2296 = vadd.f32 %v437, %v2295
      %v2297 = vpop.f32.mrb[0].mxu0
      %2298 = vmatprep.mubr.bf16.mxu0 0
      %2299 = vmatmul.mubr.bf16.gmra.mrb[0].mxu0 %v1386
      %v2300 = vpop.f32.mrb[0].mxu0
      %v2301 = vadd.f32 %v437, %v2300
      %v2302 = vpop.f32.mrb[0].mxu0
      %v2303 = vpop.f32.mrb[0].mxu0
      %v2304 = vadd.f32 %v437, %v2303
      %v2305 = vpop.f32.mrb[0].mxu0
      %2306 = vmatprep.mubr.bf16.mxu0 0
      %2307 = vmatmul.mubr.bf16.gmra.mrb[0].mxu0 %v1389
      %v2308 = vpop.f32.mrb[0].mxu0
      %v2309 = vadd.f32 %v437, %v2308
      %v2310 = vpop.f32.mrb[0].mxu0
      %v2311 = vpop.f32.mrb[0].mxu0
      %v2312 = vadd.f32 %v437, %v2311
      %v2313 = vpop.f32.mrb[0].mxu0
      %2314 = vmatprep.mubr.bf16.mxu0 0
      %2315 = vmatmul.mubr.bf16.gmra.mrb[0].mxu0 %v1392
      %v2316 = vpop.f32.mrb[0].mxu0
      %v2317 = vadd.f32 %v437, %v2316
      %v2318 = vpop.f32.mrb[0].mxu0
      %v2319 = vpop.f32.mrb[0].mxu0
      %v2320 = vadd.f32 %v437, %v2319
      %v2321 = vpop.f32.mrb[0].mxu0
      %2322 = vmatprep.mubr.bf16.mxu0 0
      %2323 = vmatmul.mubr.bf16.gmra.mrb[0].mxu0 %v1395
      %v2324 = vpop.f32.mrb[0].mxu0
      %v2325 = vadd.f32 %v437, %v2324
      %v2326 = vpop.f32.mrb[0].mxu0
      %v2327 = vpop.f32.mrb[0].mxu0
      %v2328 = vadd.f32 %v437, %v2327
      %v2329 = vpop.f32.mrb[0].mxu0
      %2330 = vmatprep.mubr.bf16.mxu0 0
      %2331 = vmatmul.mubr.bf16.gmra.mrb[0].mxu0 %v1398
      %v2332 = vpop.f32.mrb[0].mxu0
      %v2333 = vadd.f32 %v437, %v2332
      %v2334 = vpop.f32.mrb[0].mxu0
      %v2335 = vpop.f32.mrb[0].mxu0
      %v2336 = vadd.f32 %v437, %v2335
      %v2337 = vpop.f32.mrb[0].mxu0
      %2338 = vmatprep.mubr.bf16.mxu0 0
      %2339 = vmatmul.mubr.bf16.gmra.mrb[0].mxu0 %v1401
      %v2340 = vpop.f32.mrb[0].mxu0
      %v2341 = vadd.f32 %v437, %v2340
      %v2342 = vpop.f32.mrb[0].mxu0
      %v2343 = vpop.f32.mrb[0].mxu0
      %v2344 = vadd.f32 %v437, %v2343
      %v2345 = vpop.f32.mrb[0].mxu0
      %2346 = vmatprep.mubr.bf16.mxu0 0
      %2347 = vmatmul.mubr.bf16.gmra.mrb[0].mxu0 %v1404
      %v2348 = vpop.f32.mrb[0].mxu0
      %v2349 = vadd.f32 %v437, %v2348
      %v2350 = vpop.f32.mrb[0].mxu0
      %v2351 = vpop.f32.mrb[0].mxu0
      %v2352 = vadd.f32 %v437, %v2351
      %v2353 = vpop.f32.mrb[0].mxu0
      %2354 = vmatprep.mubr.bf16.mxu0 0
      %2355 = vmatmul.mubr.bf16.gmra.mrb[0].mxu0 %v1407
      %v2356 = vpop.f32.mrb[0].mxu0
      %v2357 = vadd.f32 %v437, %v2356
      %v2358 = vpop.f32.mrb[0].mxu0
      %v2359 = vpop.f32.mrb[0].mxu0
      %v2360 = vadd.f32 %v437, %v2359
      %v2361 = vpop.f32.mrb[0].mxu0
      %2362 = vmatprep.mubr.bf16.mxu0 0
      %2363 = vmatmul.mubr.bf16.gmra.mrb[0].mxu0 %v1410
      %v2364 = vpop.f32.mrb[0].mxu0
      %v2365 = vadd.f32 %v437, %v2364
      %v2366 = vpop.f32.mrb[0].mxu0
      %v2367 = vpop.f32.mrb[0].mxu0
      %v2368 = vadd.f32 %v437, %v2367
      %v2369 = vpop.f32.mrb[0].mxu0
      %2370 = vmatprep.mubr.bf16.mxu0 0
      %2371 = vmatmul.mubr.bf16.gmra.mrb[0].mxu0 %v1413
      %v2372 = vpop.f32.mrb[0].mxu0
      %v2373 = vadd.f32 %v437, %v2372
      %v2374 = vpop.f32.mrb[0].mxu0
      %v2375 = vpop.f32.mrb[0].mxu0
      %v2376 = vadd.f32 %v437, %v2375
      %v2377 = vpop.f32.mrb[0].mxu0
      %2378 = vmatprep.mubr.bf16.mxu0 0
      %2379 = vmatmul.mubr.bf16.gmra.mrb[0].mxu0 %v1416
      %v2380 = vpop.f32.mrb[0].mxu0
      %v2381 = vadd.f32 %v437, %v2380
      %v2382 = vpop.f32.mrb[0].mxu0
      %v2383 = vpop.f32.mrb[0].mxu0
      %v2384 = vadd.f32 %v437, %v2383
      %v2385 = vpop.f32.mrb[0].mxu0
      %2386 = vmatprep.mubr.bf16.mxu0 0
      %2387 = vmatmul.mubr.bf16.gmra.mrb[0].mxu0 %v1419
      %v2388 = vpop.f32.mrb[0].mxu0
      %v2389 = vadd.f32 %v437, %v2388
      %v2390 = vpop.f32.mrb[0].mxu0
      %v2391 = vpop.f32.mrb[0].mxu0
      %v2392 = vadd.f32 %v437, %v2391
      %v2393 = vpop.f32.mrb[0].mxu0
      %2394 = vmatprep.mubr.bf16.mxu0 0
      %2395 = vmatmul.mubr.bf16.gmra.mrb[0].mxu0 %v1422
      %v2396 = vpop.f32.mrb[0].mxu0
      %v2397 = vadd.f32 %v437, %v2396
      %v2398 = vpop.f32.mrb[0].mxu0
      %v2399 = vpop.f32.mrb[0].mxu0
      %v2400 = vadd.f32 %v437, %v2399
      %v2401 = vpop.f32.mrb[0].mxu0
      %2402 = vmatprep.mubr.bf16.mxu0 0
      %2403 = vmatmul.mubr.bf16.gmra.mrb[0].mxu0 %v1425
      %v2404 = vpop.f32.mrb[0].mxu0
      %v2405 = vadd.f32 %v437, %v2404
      %v2406 = vpop.f32.mrb[0].mxu0
      %v2407 = vpop.f32.mrb[0].mxu0
      %v2408 = vadd.f32 %v437, %v2407
      %v2409 = vpop.f32.mrb[0].mxu0
      %2410 = vmatprep.mubr.bf16.mxu0 0
      %2411 = vmatmul.mubr.bf16.gmra.mrb[0].mxu0 %v1428
      %v2412 = vpop.f32.mrb[0].mxu0
      %v2413 = vadd.f32 %v437, %v2412
      %v2414 = vpop.f32.mrb[0].mxu0
      %v2415 = vpop.f32.mrb[0].mxu0
      %v2416 = vadd.f32 %v437, %v2415
      %v2417 = vpop.f32.mrb[0].mxu0
      %2418 = vmatprep.mubr.bf16.mxu0 0
      %2419 = vmatmul.mubr.bf16.gmra.mrb[0].mxu0 %v1431
      %v2420 = vpop.f32.mrb[0].mxu0
      %v2421 = vadd.f32 %v437, %v2420
      %v2422 = vpop.f32.mrb[0].mxu0
      %v2423 = vpop.f32.mrb[0].mxu0
      %v2424 = vadd.f32 %v437, %v2423
      %v2425 = vpop.f32.mrb[0].mxu0
      %2426 = vmatprep.mubr.bf16.mxu0 0
      %2427 = vmatmul.mubr.bf16.gmra.mrb[0].mxu0 %v1434
      %v2428 = vpop.f32.mrb[0].mxu0
      %v2429 = vadd.f32 %v437, %v2428
      %v2430 = vpop.f32.mrb[0].mxu0
      %v2431 = vpop.f32.mrb[0].mxu0
      %v2432 = vadd.f32 %v437, %v2431
      %v2433 = vpop.f32.mrb[0].mxu0
      %2434 = vmatprep.mubr.bf16.mxu0 0
      %2435 = vmatmul.mubr.bf16.gmra.mrb[0].mxu0 %v1437
      %v2436 = vpop.f32.mrb[0].mxu0
      %v2437 = vadd.f32 %v437, %v2436
      %v2438 = vpop.f32.mrb[0].mxu0
      %v2439 = vpop.f32.mrb[0].mxu0
      %v2440 = vadd.f32 %v437, %v2439
      %v2441 = vpop.f32.mrb[0].mxu0
      %2442 = vmatprep.mubr.bf16.mxu0 0
      %2443 = vmatmul.mubr.bf16.gmra.mrb[0].mxu0 %v1440
      %v2444 = vpop.f32.mrb[0].mxu0
      %v2445 = vadd.f32 %v437, %v2444
      %v2446 = vpop.f32.mrb[0].mxu0
      %v2447 = vpop.f32.mrb[0].mxu0
      %v2448 = vadd.f32 %v437, %v2447
      %v2449 = vpop.f32.mrb[0].mxu0
      %2450 = vmatprep.mubr.bf16.mxu0 0
      %2451 = vmatmul.mubr.bf16.gmra.mrb[0].mxu0 %v1443
      %v2452 = vpop.f32.mrb[0].mxu0
      %v2453 = vadd.f32 %v437, %v2452
      %v2454 = vpop.f32.mrb[0].mxu0
      %v2455 = vpop.f32.mrb[0].mxu0
      %v2456 = vadd.f32 %v437, %v2455
      %v2457 = vpop.f32.mrb[0].mxu0
      %2458 = vmatprep.mubr.bf16.mxu0 0
      %2459 = vmatmul.mubr.bf16.gmra.mrb[0].mxu0 %v1446
      %v2460 = vpop.f32.mrb[0].mxu0
      %v2461 = vadd.f32 %v437, %v2460
      %v2462 = vpop.f32.mrb[0].mxu0
      %v2463 = vpop.f32.mrb[0].mxu0
      %v2464 = vadd.f32 %v437, %v2463
      %v2465 = vpop.f32.mrb[0].mxu0
      %2466 = vmatprep.mubr.bf16.mxu0 0
      %2467 = vmatmul.mubr.bf16.gmra.mrb[0].mxu0 %v1449
      %v2468 = vpop.f32.mrb[0].mxu0
      %v2469 = vadd.f32 %v437, %v2468
      %v2470 = vpop.f32.mrb[0].mxu0
      %v2471 = vpop.f32.mrb[0].mxu0
      %v2472 = vadd.f32 %v437, %v2471
      %v2473 = vpop.f32.mrb[0].mxu0
      %2474 = vmatprep.mubr.bf16.mxu0 0
      %2475 = vmatmul.mubr.bf16.gmra.mrb[0].mxu0 %v1452
      %v2476 = vpop.f32.mrb[0].mxu0
      %v2477 = vadd.f32 %v437, %v2476
      %v2478 = vpop.f32.mrb[0].mxu0
      %v2479 = vpop.f32.mrb[0].mxu0
      %v2480 = vadd.f32 %v437, %v2479
      %v2481 = vpop.f32.mrb[0].mxu0
      %2482 = vmatprep.mubr.bf16.mxu0 0
      %2483 = vmatmul.mubr.bf16.gmra.mrb[0].mxu0 %v1455
      %v2484 = vpop.f32.mrb[0].mxu0
      %v2485 = vadd.f32 %v437, %v2484
      %v2486 = vpop.f32.mrb[0].mxu0
      %v2487 = vpop.f32.mrb[0].mxu0
      %v2488 = vadd.f32 %v437, %v2487
      %v2489 = vpop.f32.mrb[0].mxu0
      %2490 = vmatprep.mubr.bf16.mxu0 0
      %2491 = vmatmul.mubr.bf16.gmra.mrb[0].mxu0 %v1458
      %v2492 = vpop.f32.mrb[0].mxu0
      %v2493 = vadd.f32 %v437, %v2492
      %v2494 = vpop.f32.mrb[0].mxu0
      %v2495 = vpop.f32.mrb[0].mxu0
      %v2496 = vadd.f32 %v437, %v2495
      %v2497 = vpop.f32.mrb[0].mxu0
      %2498 = vmatprep.mubr.bf16.mxu0 0
      %2499 = vmatmul.mubr.bf16.gmra.mrb[0].mxu0 %v1461
      %v2500 = vpop.f32.mrb[0].mxu0
      %v2501 = vadd.f32 %v437, %v2500
      %v2502 = vpop.f32.mrb[0].mxu0
      %v2503 = vpop.f32.mrb[0].mxu0
      %v2504 = vadd.f32 %v437, %v2503
      %v2505 = vpop.f32.mrb[0].mxu0
      %2506 = vmatprep.mubr.bf16.mxu0 0
      %2507 = vmatmul.mubr.bf16.gmra.mrb[0].mxu0 %v1464
      %v2508 = vpop.f32.mrb[0].mxu0
      %v2509 = vadd.f32 %v437, %v2508
      %v2510 = vpop.f32.mrb[0].mxu0
      %v2511 = vpop.f32.mrb[0].mxu0
      %v2512 = vadd.f32 %v437, %v2511
      %v2513 = vpop.f32.mrb[0].mxu0
      %2514 = vmatprep.mubr.bf16.mxu0 0
      %2515 = vmatmul.mubr.bf16.gmra.mrb[0].mxu0 %v1467
      %v2516 = vpop.f32.mrb[0].mxu0
      %v2517 = vadd.f32 %v437, %v2516
      %v2518 = vpop.f32.mrb[0].mxu0
      %v2519 = vpop.f32.mrb[0].mxu0
      %v2520 = vadd.f32 %v437, %v2519
      %v2521 = vpop.f32.mrb[0].mxu0
      %2522 = vmatprep.mubr.bf16.mxu0 0
      %2523 = vmatmul.mubr.bf16.gmra.mrb[0].mxu0 %v1470
      %v2524 = vpop.f32.mrb[0].mxu0
      %v2525 = vadd.f32 %v437, %v2524
      %v2526 = vpop.f32.mrb[0].mxu0
      %v2527 = vpop.f32.mrb[0].mxu0
      %v2528 = vadd.f32 %v437, %v2527
      %v2529 = vpop.f32.mrb[0].mxu0
      %2530 = vmatprep.mubr.bf16.mxu0 0
      %2531 = vmatmul.mubr.bf16.gmra.mrb[0].mxu0 %v1473
      %v2532 = vpop.f32.mrb[0].mxu0
      %v2533 = vadd.f32 %v437, %v2532
      %v2534 = vpop.f32.mrb[0].mxu0
      %v2535 = vpop.f32.mrb[0].mxu0
      %v2536 = vadd.f32 %v437, %v2535
      %v2537 = vpop.f32.mrb[0].mxu0
      %2538 = vdwg.mxu0
      %v2539 = vmax.f32 %v1517, 0.0
      %v2540 = vmax.f32 %v1520, 0.0
      %v2541 = vmax.f32 %v1525, 0.0
      %v2542 = vmax.f32 %v1528, 0.0
      %v2543 = vmax.f32 %v1533, 0.0
      %v2544 = vmax.f32 %v1536, 0.0
      %v2545 = vmax.f32 %v1541, 0.0
      %v2546 = vmax.f32 %v1544, 0.0
      %v2547 = vmax.f32 %v1549, 0.0
      %v2548 = vmax.f32 %v1552, 0.0
      %v2549 = vmax.f32 %v1557, 0.0
      %v2550 = vmax.f32 %v1560, 0.0
      %v2551 = vmax.f32 %v1565, 0.0
      %v2552 = vmax.f32 %v1568, 0.0
      %v2553 = vmax.f32 %v1573, 0.0
      %v2554 = vmax.f32 %v1576, 0.0
      %v2555 = vmax.f32 %v1581, 0.0
      %v2556 = vmax.f32 %v1584, 0.0
      %v2557 = vmax.f32 %v1589, 0.0
      %v2558 = vmax.f32 %v1592, 0.0
      %v2559 = vmax.f32 %v1597, 0.0
      %v2560 = vmax.f32 %v1600, 0.0
      %v2561 = vmax.f32 %v1605, 0.0
      %v2562 = vmax.f32 %v1608, 0.0
      %v2563 = vmax.f32 %v1613, 0.0
      %v2564 = vmax.f32 %v1616, 0.0
      %v2565 = vmax.f32 %v1621, 0.0
      %v2566 = vmax.f32 %v1624, 0.0
      %v2567 = vmax.f32 %v1629, 0.0
      %v2568 = vmax.f32 %v1632, 0.0
      %v2569 = vmax.f32 %v1637, 0.0
      %v2570 = vmax.f32 %v1640, 0.0
      %v2571 = vmax.f32 %v1645, 0.0
      %v2572 = vmax.f32 %v1648, 0.0
      %v2573 = vmax.f32 %v1653, 0.0
      %v2574 = vmax.f32 %v1656, 0.0
      %v2575 = vmax.f32 %v1661, 0.0
      %v2576 = vmax.f32 %v1664, 0.0
      %v2577 = vmax.f32 %v1669, 0.0
      %v2578 = vmax.f32 %v1672, 0.0
      %v2579 = vmax.f32 %v1677, 0.0
      %v2580 = vmax.f32 %v1680, 0.0
      %v2581 = vmax.f32 %v1685, 0.0
      %v2582 = vmax.f32 %v1688, 0.0
      %v2583 = vmax.f32 %v1693, 0.0
      %v2584 = vmax.f32 %v1696, 0.0
      %v2585 = vmax.f32 %v1701, 0.0
      %v2586 = vmax.f32 %v1704, 0.0
      %v2587 = vmax.f32 %v1709, 0.0
      %v2588 = vmax.f32 %v1712, 0.0
      %v2589 = vmax.f32 %v1717, 0.0
      %v2590 = vmax.f32 %v1720, 0.0
      %v2591 = vmax.f32 %v1725, 0.0
      %v2592 = vmax.f32 %v1728, 0.0
      %v2593 = vmax.f32 %v1733, 0.0
      %v2594 = vmax.f32 %v1736, 0.0
      %v2595 = vmax.f32 %v1741, 0.0
      %v2596 = vmax.f32 %v1744, 0.0
      %v2597 = vmax.f32 %v1749, 0.0
      %v2598 = vmax.f32 %v1752, 0.0
      %v2599 = vmax.f32 %v1757, 0.0
      %v2600 = vmax.f32 %v1760, 0.0
      %v2601 = vmax.f32 %v1765, 0.0
      %v2602 = vmax.f32 %v1768, 0.0
      %v2603 = vmax.f32 %v1773, 0.0
      %v2604 = vmax.f32 %v1776, 0.0
      %v2605 = vmax.f32 %v1781, 0.0
      %v2606 = vmax.f32 %v1784, 0.0
      %v2607 = vmax.f32 %v1789, 0.0
      %v2608 = vmax.f32 %v1792, 0.0
      %v2609 = vmax.f32 %v1797, 0.0
      %v2610 = vmax.f32 %v1800, 0.0
      %v2611 = vmax.f32 %v1805, 0.0
      %v2612 = vmax.f32 %v1808, 0.0
      %v2613 = vmax.f32 %v1813, 0.0
      %v2614 = vmax.f32 %v1816, 0.0
      %v2615 = vmax.f32 %v1821, 0.0
      %v2616 = vmax.f32 %v1824, 0.0
      %v2617 = vmax.f32 %v1829, 0.0
      %v2618 = vmax.f32 %v1832, 0.0
      %v2619 = vmax.f32 %v1837, 0.0
      %v2620 = vmax.f32 %v1840, 0.0
      %v2621 = vmax.f32 %v1845, 0.0
      %v2622 = vmax.f32 %v1848, 0.0
      %v2623 = vmax.f32 %v1853, 0.0
      %v2624 = vmax.f32 %v1856, 0.0
      %v2625 = vmax.f32 %v1861, 0.0
      %v2626 = vmax.f32 %v1864, 0.0
      %v2627 = vmax.f32 %v1869, 0.0
      %v2628 = vmax.f32 %v1872, 0.0
      %v2629 = vmax.f32 %v1877, 0.0
      %v2630 = vmax.f32 %v1880, 0.0
      %v2631 = vmax.f32 %v1885, 0.0
      %v2632 = vmax.f32 %v1888, 0.0
      %v2633 = vmax.f32 %v1893, 0.0
      %v2634 = vmax.f32 %v1896, 0.0
      %v2635 = vmax.f32 %v1901, 0.0
      %v2636 = vmax.f32 %v1904, 0.0
      %v2637 = vmax.f32 %v1909, 0.0
      %v2638 = vmax.f32 %v1912, 0.0
      %v2639 = vmax.f32 %v1917, 0.0
      %v2640 = vmax.f32 %v1920, 0.0
      %v2641 = vmax.f32 %v1925, 0.0
      %v2642 = vmax.f32 %v1928, 0.0
      %v2643 = vmax.f32 %v1933, 0.0
      %v2644 = vmax.f32 %v1936, 0.0
      %v2645 = vmax.f32 %v1941, 0.0
      %v2646 = vmax.f32 %v1944, 0.0
      %v2647 = vmax.f32 %v1949, 0.0
      %v2648 = vmax.f32 %v1952, 0.0
      %v2649 = vmax.f32 %v1957, 0.0
      %v2650 = vmax.f32 %v1960, 0.0
      %v2651 = vmax.f32 %v1965, 0.0
      %v2652 = vmax.f32 %v1968, 0.0
      %v2653 = vmax.f32 %v1973, 0.0
      %v2654 = vmax.f32 %v1976, 0.0
      %v2655 = vmax.f32 %v1981, 0.0
      %v2656 = vmax.f32 %v1984, 0.0
      %v2657 = vmax.f32 %v1989, 0.0
      %v2658 = vmax.f32 %v1992, 0.0
      %v2659 = vmax.f32 %v1997, 0.0
      %v2660 = vmax.f32 %v2000, 0.0
      %v2661 = vmax.f32 %v2005, 0.0
      %v2662 = vmax.f32 %v2008, 0.0
      %v2663 = vmax.f32 %v2013, 0.0
      %v2664 = vmax.f32 %v2016, 0.0
      %v2665 = vmax.f32 %v2021, 0.0
      %v2666 = vmax.f32 %v2024, 0.0
      %v2667 = vmax.f32 %v2029, 0.0
      %v2668 = vmax.f32 %v2032, 0.0
      %v2669 = vmax.f32 %v2037, 0.0
      %v2670 = vmax.f32 %v2040, 0.0
      %v2671 = vmax.f32 %v2045, 0.0
      %v2672 = vmax.f32 %v2048, 0.0
      %v2673 = vmax.f32 %v2053, 0.0
      %v2674 = vmax.f32 %v2056, 0.0
      %v2675 = vmax.f32 %v2061, 0.0
      %v2676 = vmax.f32 %v2064, 0.0
      %v2677 = vmax.f32 %v2069, 0.0
      %v2678 = vmax.f32 %v2072, 0.0
      %v2679 = vmax.f32 %v2077, 0.0
      %v2680 = vmax.f32 %v2080, 0.0
      %v2681 = vmax.f32 %v2085, 0.0
      %v2682 = vmax.f32 %v2088, 0.0
      %v2683 = vmax.f32 %v2093, 0.0
      %v2684 = vmax.f32 %v2096, 0.0
      %v2685 = vmax.f32 %v2101, 0.0
      %v2686 = vmax.f32 %v2104, 0.0
      %v2687 = vmax.f32 %v2109, 0.0
      %v2688 = vmax.f32 %v2112, 0.0
      %v2689 = vmax.f32 %v2117, 0.0
      %v2690 = vmax.f32 %v2120, 0.0
      %v2691 = vmax.f32 %v2125, 0.0
      %v2692 = vmax.f32 %v2128, 0.0
      %v2693 = vmax.f32 %v2133, 0.0
      %v2694 = vmax.f32 %v2136, 0.0
      %v2695 = vmax.f32 %v2141, 0.0
      %v2696 = vmax.f32 %v2144, 0.0
      %v2697 = vmax.f32 %v2149, 0.0
      %v2698 = vmax.f32 %v2152, 0.0
      %v2699 = vmax.f32 %v2157, 0.0
      %v2700 = vmax.f32 %v2160, 0.0
      %v2701 = vmax.f32 %v2165, 0.0
      %v2702 = vmax.f32 %v2168, 0.0
      %v2703 = vmax.f32 %v2173, 0.0
      %v2704 = vmax.f32 %v2176, 0.0
      %v2705 = vmax.f32 %v2181, 0.0
      %v2706 = vmax.f32 %v2184, 0.0
      %v2707 = vmax.f32 %v2189, 0.0
      %v2708 = vmax.f32 %v2192, 0.0
      %v2709 = vmax.f32 %v2197, 0.0
      %v2710 = vmax.f32 %v2200, 0.0
      %v2711 = vmax.f32 %v2205, 0.0
      %v2712 = vmax.f32 %v2208, 0.0
      %v2713 = vmax.f32 %v2213, 0.0
      %v2714 = vmax.f32 %v2216, 0.0
      %v2715 = vmax.f32 %v2221, 0.0
      %v2716 = vmax.f32 %v2224, 0.0
      %v2717 = vmax.f32 %v2229, 0.0
      %v2718 = vmax.f32 %v2232, 0.0
      %v2719 = vmax.f32 %v2237, 0.0
      %v2720 = vmax.f32 %v2240, 0.0
      %v2721 = vmax.f32 %v2245, 0.0
      %v2722 = vmax.f32 %v2248, 0.0
      %v2723 = vmax.f32 %v2253, 0.0
      %v2724 = vmax.f32 %v2256, 0.0
      %v2725 = vmax.f32 %v2261, 0.0
      %v2726 = vmax.f32 %v2264, 0.0
      %v2727 = vmax.f32 %v2269, 0.0
      %v2728 = vmax.f32 %v2272, 0.0
      %v2729 = vmax.f32 %v2277, 0.0
      %v2730 = vmax.f32 %v2280, 0.0
      %v2731 = vmax.f32 %v2285, 0.0
      %v2732 = vmax.f32 %v2288, 0.0
      %v2733 = vmax.f32 %v2293, 0.0
      %v2734 = vmax.f32 %v2296, 0.0
      %v2735 = vmax.f32 %v2301, 0.0
      %v2736 = vmax.f32 %v2304, 0.0
      %v2737 = vmax.f32 %v2309, 0.0
      %v2738 = vmax.f32 %v2312, 0.0
      %v2739 = vmax.f32 %v2317, 0.0
      %v2740 = vmax.f32 %v2320, 0.0
      %v2741 = vmax.f32 %v2325, 0.0
      %v2742 = vmax.f32 %v2328, 0.0
      %v2743 = vmax.f32 %v2333, 0.0
      %v2744 = vmax.f32 %v2336, 0.0
      %v2745 = vmax.f32 %v2341, 0.0
      %v2746 = vmax.f32 %v2344, 0.0
      %v2747 = vmax.f32 %v2349, 0.0
      %v2748 = vmax.f32 %v2352, 0.0
      %v2749 = vmax.f32 %v2357, 0.0
      %v2750 = vmax.f32 %v2360, 0.0
      %v2751 = vmax.f32 %v2365, 0.0
      %v2752 = vmax.f32 %v2368, 0.0
      %v2753 = vmax.f32 %v2373, 0.0
      %v2754 = vmax.f32 %v2376, 0.0
      %v2755 = vmax.f32 %v2381, 0.0
      %v2756 = vmax.f32 %v2384, 0.0
      %v2757 = vmax.f32 %v2389, 0.0
      %v2758 = vmax.f32 %v2392, 0.0
      %v2759 = vmax.f32 %v2397, 0.0
      %v2760 = vmax.f32 %v2400, 0.0
      %v2761 = vmax.f32 %v2405, 0.0
      %v2762 = vmax.f32 %v2408, 0.0
      %v2763 = vmax.f32 %v2413, 0.0
      %v2764 = vmax.f32 %v2416, 0.0
      %v2765 = vmax.f32 %v2421, 0.0
      %v2766 = vmax.f32 %v2424, 0.0
      %v2767 = vmax.f32 %v2429, 0.0
      %v2768 = vmax.f32 %v2432, 0.0
      %v2769 = vmax.f32 %v2437, 0.0
      %v2770 = vmax.f32 %v2440, 0.0
      %v2771 = vmax.f32 %v2445, 0.0
      %v2772 = vmax.f32 %v2448, 0.0
      %v2773 = vmax.f32 %v2453, 0.0
      %v2774 = vmax.f32 %v2456, 0.0
      %v2775 = vmax.f32 %v2461, 0.0
      %v2776 = vmax.f32 %v2464, 0.0
      %v2777 = vmax.f32 %v2469, 0.0
      %v2778 = vmax.f32 %v2472, 0.0
      %v2779 = vmax.f32 %v2477, 0.0
      %v2780 = vmax.f32 %v2480, 0.0
      %v2781 = vmax.f32 %v2485, 0.0
      %v2782 = vmax.f32 %v2488, 0.0
      %v2783 = vmax.f32 %v2493, 0.0
      %v2784 = vmax.f32 %v2496, 0.0
      %v2785 = vmax.f32 %v2501, 0.0
      %v2786 = vmax.f32 %v2504, 0.0
      %v2787 = vmax.f32 %v2509, 0.0
      %v2788 = vmax.f32 %v2512, 0.0
      %v2789 = vmax.f32 %v2517, 0.0
      %v2790 = vmax.f32 %v2520, 0.0
      %v2791 = vmax.f32 %v2525, 0.0
      %v2792 = vmax.f32 %v2528, 0.0
      %v2793 = vmax.f32 %v2533, 0.0
      %v2794 = vmax.f32 %v2536, 0.0
      %v2795 = vadd.f32 %v2539, %v2540
      %v2796 = vadd.f32 %v2795, %v2541
      %v2797 = vadd.f32 %v2796, %v2542
      %v2798 = vadd.f32 %v2797, %v2543
      %v2799 = vadd.f32 %v2798, %v2544
      %v2800 = vadd.f32 %v2799, %v2545
      %v2801 = vadd.f32 %v2800, %v2546
      %v2802 = vadd.f32 %v2801, %v2547
      %v2803 = vadd.f32 %v2802, %v2548
      %v2804 = vadd.f32 %v2803, %v2549
      %v2805 = vadd.f32 %v2804, %v2550
      %v2806 = vadd.f32 %v2805, %v2551
      %v2807 = vadd.f32 %v2806, %v2552
      %v2808 = vadd.f32 %v2807, %v2553
      %v2809 = vadd.f32 %v2808, %v2554
      %v2810 = vadd.f32 %v2809, %v2555
      %v2811 = vadd.f32 %v2810, %v2556
      %v2812 = vadd.f32 %v2811, %v2557
      %v2813 = vadd.f32 %v2812, %v2558
      %v2814 = vadd.f32 %v2813, %v2559
      %v2815 = vadd.f32 %v2814, %v2560
      %v2816 = vadd.f32 %v2815, %v2561
      %v2817 = vadd.f32 %v2816, %v2562
      %v2818 = vadd.f32 %v2817, %v2563
      %v2819 = vadd.f32 %v2818, %v2564
      %v2820 = vadd.f32 %v2819, %v2565
      %v2821 = vadd.f32 %v2820, %v2566
      %v2822 = vadd.f32 %v2821, %v2567
      %v2823 = vadd.f32 %v2822, %v2568
      %v2824 = vadd.f32 %v2823, %v2569
      %v2825 = vadd.f32 %v2824, %v2570
      %v2826 = vrot.slane %v2825, 4
      %v2827 = vadd.f32 %v2825, %v2826
      %v2828 = vrot.slane %v2827, 2
      %v2829 = vadd.f32 %v2827, %v2828
      %v2830 = vrot.slane %v2829, 1
      %v2831 = vadd.f32 %v2829, %v2830
      %v2832 = vrcp.pop 256.0
      %v2833 = vmul.f32 %v2831, %v2832
      %v2834 = vadd.f32 %v2571, %v2572
      %v2835 = vadd.f32 %v2834, %v2573
      %v2836 = vadd.f32 %v2835, %v2574
      %v2837 = vadd.f32 %v2836, %v2575
      %v2838 = vadd.f32 %v2837, %v2576
      %v2839 = vadd.f32 %v2838, %v2577
      %v2840 = vadd.f32 %v2839, %v2578
      %v2841 = vadd.f32 %v2840, %v2579
      %v2842 = vadd.f32 %v2841, %v2580
      %v2843 = vadd.f32 %v2842, %v2581
      %v2844 = vadd.f32 %v2843, %v2582
      %v2845 = vadd.f32 %v2844, %v2583
      %v2846 = vadd.f32 %v2845, %v2584
      %v2847 = vadd.f32 %v2846, %v2585
      %v2848 = vadd.f32 %v2847, %v2586
      %v2849 = vadd.f32 %v2848, %v2587
      %v2850 = vadd.f32 %v2849, %v2588
      %v2851 = vadd.f32 %v2850, %v2589
      %v2852 = vadd.f32 %v2851, %v2590
      %v2853 = vadd.f32 %v2852, %v2591
      %v2854 = vadd.f32 %v2853, %v2592
      %v2855 = vadd.f32 %v2854, %v2593
      %v2856 = vadd.f32 %v2855, %v2594
      %v2857 = vadd.f32 %v2856, %v2595
      %v2858 = vadd.f32 %v2857, %v2596
      %v2859 = vadd.f32 %v2858, %v2597
      %v2860 = vadd.f32 %v2859, %v2598
      %v2861 = vadd.f32 %v2860, %v2599
      %v2862 = vadd.f32 %v2861, %v2600
      %v2863 = vadd.f32 %v2862, %v2601
      %v2864 = vadd.f32 %v2863, %v2602
      %v2865 = vrot.slane %v2864, 4
      %v2866 = vadd.f32 %v2864, %v2865
      %v2867 = vrot.slane %v2866, 2
      %v2868 = vadd.f32 %v2866, %v2867
      %v2869 = vrot.slane %v2868, 1
      %v2870 = vadd.f32 %v2868, %v2869
      %v2871 = vmul.f32 %v2870, %v2832
      %v2872 = vadd.f32 %v2603, %v2604
      %v2873 = vadd.f32 %v2872, %v2605
      %v2874 = vadd.f32 %v2873, %v2606
      %v2875 = vadd.f32 %v2874, %v2607
      %v2876 = vadd.f32 %v2875, %v2608
      %v2877 = vadd.f32 %v2876, %v2609
      %v2878 = vadd.f32 %v2877, %v2610
      %v2879 = vadd.f32 %v2878, %v2611
      %v2880 = vadd.f32 %v2879, %v2612
      %v2881 = vadd.f32 %v2880, %v2613
      %v2882 = vadd.f32 %v2881, %v2614
      %v2883 = vadd.f32 %v2882, %v2615
      %v2884 = vadd.f32 %v2883, %v2616
      %v2885 = vadd.f32 %v2884, %v2617
      %v2886 = vadd.f32 %v2885, %v2618
      %v2887 = vadd.f32 %v2886, %v2619
      %v2888 = vadd.f32 %v2887, %v2620
      %v2889 = vadd.f32 %v2888, %v2621
      %v2890 = vadd.f32 %v2889, %v2622
      %v2891 = vadd.f32 %v2890, %v2623
      %v2892 = vadd.f32 %v2891, %v2624
      %v2893 = vadd.f32 %v2892, %v2625
      %v2894 = vadd.f32 %v2893, %v2626
      %v2895 = vadd.f32 %v2894, %v2627
      %v2896 = vadd.f32 %v2895, %v2628
      %v2897 = vadd.f32 %v2896, %v2629
      %v2898 = vadd.f32 %v2897, %v2630
      %v2899 = vadd.f32 %v2898, %v2631
      %v2900 = vadd.f32 %v2899, %v2632
      %v2901 = vadd.f32 %v2900, %v2633
      %v2902 = vadd.f32 %v2901, %v2634
      %v2903 = vrot.slane %v2902, 4
      %v2904 = vadd.f32 %v2902, %v2903
      %v2905 = vrot.slane %v2904, 2
      %v2906 = vadd.f32 %v2904, %v2905
      %v2907 = vrot.slane %v2906, 1
      %v2908 = vadd.f32 %v2906, %v2907
      %v2909 = vmul.f32 %v2908, %v2832
      %v2910 = vadd.f32 %v2635, %v2636
      %v2911 = vadd.f32 %v2910, %v2637
      %v2912 = vadd.f32 %v2911, %v2638
      %v2913 = vadd.f32 %v2912, %v2639
      %v2914 = vadd.f32 %v2913, %v2640
      %v2915 = vadd.f32 %v2914, %v2641
      %v2916 = vadd.f32 %v2915, %v2642
      %v2917 = vadd.f32 %v2916, %v2643
      %v2918 = vadd.f32 %v2917, %v2644
      %v2919 = vadd.f32 %v2918, %v2645
      %v2920 = vadd.f32 %v2919, %v2646
      %v2921 = vadd.f32 %v2920, %v2647
      %v2922 = vadd.f32 %v2921, %v2648
      %v2923 = vadd.f32 %v2922, %v2649
      %v2924 = vadd.f32 %v2923, %v2650
      %v2925 = vadd.f32 %v2924, %v2651
      %v2926 = vadd.f32 %v2925, %v2652
      %v2927 = vadd.f32 %v2926, %v2653
      %v2928 = vadd.f32 %v2927, %v2654
      %v2929 = vadd.f32 %v2928, %v2655
      %v2930 = vadd.f32 %v2929, %v2656
      %v2931 = vadd.f32 %v2930, %v2657
      %v2932 = vadd.f32 %v2931, %v2658
      %v2933 = vadd.f32 %v2932, %v2659
      %v2934 = vadd.f32 %v2933, %v2660
      %v2935 = vadd.f32 %v2934, %v2661
      %v2936 = vadd.f32 %v2935, %v2662
      %v2937 = vadd.f32 %v2936, %v2663
      %v2938 = vadd.f32 %v2937, %v2664
      %v2939 = vadd.f32 %v2938, %v2665
      %v2940 = vadd.f32 %v2939, %v2666
      %v2941 = vrot.slane %v2940, 4
      %v2942 = vadd.f32 %v2940, %v2941
      %v2943 = vrot.slane %v2942, 2
      %v2944 = vadd.f32 %v2942, %v2943
      %v2945 = vrot.slane %v2944, 1
      %v2946 = vadd.f32 %v2944, %v2945
      %v2947 = vmul.f32 %v2946, %v2832
      %v2948 = vadd.f32 %v2667, %v2668
      %v2949 = vadd.f32 %v2948, %v2669
      %v2950 = vadd.f32 %v2949, %v2670
      %v2951 = vadd.f32 %v2950, %v2671
      %v2952 = vadd.f32 %v2951, %v2672
      %v2953 = vadd.f32 %v2952, %v2673
      %v2954 = vadd.f32 %v2953, %v2674
      %v2955 = vadd.f32 %v2954, %v2675
      %v2956 = vadd.f32 %v2955, %v2676
      %v2957 = vadd.f32 %v2956, %v2677
      %v2958 = vadd.f32 %v2957, %v2678
      %v2959 = vadd.f32 %v2958, %v2679
      %v2960 = vadd.f32 %v2959, %v2680
      %v2961 = vadd.f32 %v2960, %v2681
      %v2962 = vadd.f32 %v2961, %v2682
      %v2963 = vadd.f32 %v2962, %v2683
      %v2964 = vadd.f32 %v2963, %v2684
      %v2965 = vadd.f32 %v2964, %v2685
      %v2966 = vadd.f32 %v2965, %v2686
      %v2967 = vadd.f32 %v2966, %v2687
      %v2968 = vadd.f32 %v2967, %v2688
      %v2969 = vadd.f32 %v2968, %v2689
      %v2970 = vadd.f32 %v2969, %v2690
      %v2971 = vadd.f32 %v2970, %v2691
      %v2972 = vadd.f32 %v2971, %v2692
      %v2973 = vadd.f32 %v2972, %v2693
      %v2974 = vadd.f32 %v2973, %v2694
      %v2975 = vadd.f32 %v2974, %v2695
      %v2976 = vadd.f32 %v2975, %v2696
      %v2977 = vadd.f32 %v2976, %v2697
      %v2978 = vadd.f32 %v2977, %v2698
      %v2979 = vrot.slane %v2978, 4
      %v2980 = vadd.f32 %v2978, %v2979
      %v2981 = vrot.slane %v2980, 2
      %v2982 = vadd.f32 %v2980, %v2981
      %v2983 = vrot.slane %v2982, 1
      %v2984 = vadd.f32 %v2982, %v2983
      %v2985 = vmul.f32 %v2984, %v2832
      %v2986 = vadd.f32 %v2699, %v2700
      %v2987 = vadd.f32 %v2986, %v2701
      %v2988 = vadd.f32 %v2987, %v2702
      %v2989 = vadd.f32 %v2988, %v2703
      %v2990 = vadd.f32 %v2989, %v2704
      %v2991 = vadd.f32 %v2990, %v2705
      %v2992 = vadd.f32 %v2991, %v2706
      %v2993 = vadd.f32 %v2992, %v2707
      %v2994 = vadd.f32 %v2993, %v2708
      %v2995 = vadd.f32 %v2994, %v2709
      %v2996 = vadd.f32 %v2995, %v2710
      %v2997 = vadd.f32 %v2996, %v2711
      %v2998 = vadd.f32 %v2997, %v2712
      %v2999 = vadd.f32 %v2998, %v2713
      %v3000 = vadd.f32 %v2999, %v2714
      %v3001 = vadd.f32 %v3000, %v2715
      %v3002 = vadd.f32 %v3001, %v2716
      %v3003 = vadd.f32 %v3002, %v2717
      %v3004 = vadd.f32 %v3003, %v2718
      %v3005 = vadd.f32 %v3004, %v2719
      %v3006 = vadd.f32 %v3005, %v2720
      %v3007 = vadd.f32 %v3006, %v2721
      %v3008 = vadd.f32 %v3007, %v2722
      %v3009 = vadd.f32 %v3008, %v2723
      %v3010 = vadd.f32 %v3009, %v2724
      %v3011 = vadd.f32 %v3010, %v2725
      %v3012 = vadd.f32 %v3011, %v2726
      %v3013 = vadd.f32 %v3012, %v2727
      %v3014 = vadd.f32 %v3013, %v2728
      %v3015 = vadd.f32 %v3014, %v2729
      %v3016 = vadd.f32 %v3015, %v2730
      %v3017 = vrot.slane %v3016, 4
      %v3018 = vadd.f32 %v3016, %v3017
      %v3019 = vrot.slane %v3018, 2
      %v3020 = vadd.f32 %v3018, %v3019
      %v3021 = vrot.slane %v3020, 1
      %v3022 = vadd.f32 %v3020, %v3021
      %v3023 = vmul.f32 %v3022, %v2832
      %v3024 = vadd.f32 %v2731, %v2732
      %v3025 = vadd.f32 %v3024, %v2733
      %v3026 = vadd.f32 %v3025, %v2734
      %v3027 = vadd.f32 %v3026, %v2735
      %v3028 = vadd.f32 %v3027, %v2736
      %v3029 = vadd.f32 %v3028, %v2737
      %v3030 = vadd.f32 %v3029, %v2738
      %v3031 = vadd.f32 %v3030, %v2739
      %v3032 = vadd.f32 %v3031, %v2740
      %v3033 = vadd.f32 %v3032, %v2741
      %v3034 = vadd.f32 %v3033, %v2742
      %v3035 = vadd.f32 %v3034, %v2743
      %v3036 = vadd.f32 %v3035, %v2744
      %v3037 = vadd.f32 %v3036, %v2745
      %v3038 = vadd.f32 %v3037, %v2746
      %v3039 = vadd.f32 %v3038, %v2747
      %v3040 = vadd.f32 %v3039, %v2748
      %v3041 = vadd.f32 %v3040, %v2749
      %v3042 = vadd.f32 %v3041, %v2750
      %v3043 = vadd.f32 %v3042, %v2751
      %v3044 = vadd.f32 %v3043, %v2752
      %v3045 = vadd.f32 %v3044, %v2753
      %v3046 = vadd.f32 %v3045, %v2754
      %v3047 = vadd.f32 %v3046, %v2755
      %v3048 = vadd.f32 %v3047, %v2756
      %v3049 = vadd.f32 %v3048, %v2757
      %v3050 = vadd.f32 %v3049, %v2758
      %v3051 = vadd.f32 %v3050, %v2759
      %v3052 = vadd.f32 %v3051, %v2760
      %v3053 = vadd.f32 %v3052, %v2761
      %v3054 = vadd.f32 %v3053, %v2762
      %v3055 = vrot.slane %v3054, 4
      %v3056 = vadd.f32 %v3054, %v3055
      %v3057 = vrot.slane %v3056, 2
      %v3058 = vadd.f32 %v3056, %v3057
      %v3059 = vrot.slane %v3058, 1
      %v3060 = vadd.f32 %v3058, %v3059
      %v3061 = vmul.f32 %v3060, %v2832
      %v3062 = vadd.f32 %v2763, %v2764
      %v3063 = vadd.f32 %v3062, %v2765
      %v3064 = vadd.f32 %v3063, %v2766
      %v3065 = vadd.f32 %v3064, %v2767
      %v3066 = vadd.f32 %v3065, %v2768
      %v3067 = vadd.f32 %v3066, %v2769
      %v3068 = vadd.f32 %v3067, %v2770
      %v3069 = vadd.f32 %v3068, %v2771
      %v3070 = vadd.f32 %v3069, %v2772
      %v3071 = vadd.f32 %v3070, %v2773
      %v3072 = vadd.f32 %v3071, %v2774
      %v3073 = vadd.f32 %v3072, %v2775
      %v3074 = vadd.f32 %v3073, %v2776
      %v3075 = vadd.f32 %v3074, %v2777
      %v3076 = vadd.f32 %v3075, %v2778
      %v3077 = vadd.f32 %v3076, %v2779
      %v3078 = vadd.f32 %v3077, %v2780
      %v3079 = vadd.f32 %v3078, %v2781
      %v3080 = vadd.f32 %v3079, %v2782
      %v3081 = vadd.f32 %v3080, %v2783
      %v3082 = vadd.f32 %v3081, %v2784
      %v3083 = vadd.f32 %v3082, %v2785
      %v3084 = vadd.f32 %v3083, %v2786
      %v3085 = vadd.f32 %v3084, %v2787
      %v3086 = vadd.f32 %v3085, %v2788
      %v3087 = vadd.f32 %v3086, %v2789
      %v3088 = vadd.f32 %v3087, %v2790
      %v3089 = vadd.f32 %v3088, %v2791
      %v3090 = vadd.f32 %v3089, %v2792
      %v3091 = vadd.f32 %v3090, %v2793
      %v3092 = vadd.f32 %v3091, %v2794
      %v3093 = vrot.slane %v3092, 4
      %v3094 = vadd.f32 %v3092, %v3093
      %v3095 = vrot.slane %v3094, 2
      %v3096 = vadd.f32 %v3094, %v3095
      %v3097 = vrot.slane %v3096, 1
      %v3098 = vadd.f32 %v3096, %v3097
      %v3099 = vmul.f32 %v3098, %v2832
      %vm3100 = vcmask 1040384
      %v3101 = vsel %vm3100, %v2833, %v2871
      %vm3102 = vcmask 1041408
      %v3103 = vsel %vm3102, %v3101, %v2909
      %vm3104 = vcmask 1042432
      %v3105 = vsel %vm3104, %v3103, %v2947
      %vm3106 = vcmask 1043456
      %v3107 = vsel %vm3106, %v3105, %v2985
      %v3108 = vsel %vm1475, %v3107, %v3023
      %v3109 = vsel %vm1476, %v3108, %v3061
      %vm3110 = vcmask 1046528
      %v3111 = vsel %vm3110, %v3109, %v3099
      %3112 = vst [vmem:[%s170] sm:$0xff] %v3111
      %p3113 = scmp.lt.s32.totalorder %s14, 1
      %s3114 = scalar_select %p3113, %s14, 1
      %s3115 = smul.addr %s3114, 8
      %s3116 = scalar_lea.vmem %s3, %s3115
      // Predicated region
      $region33: #{conv_lstm_forward.5} parent=31 // pred_check
        %p3117 = pneg %p100
      $region34: #{conv_lstm_forward.5} parent=31 // pred_check_branch
        %3119 = sbr.rel (%p3117) target = $region36
      $region35: #{conv_lstm_forward.5} parent=31 // pred_region
        _
      $region36: #{conv_lstm_forward.5} parent=31 // pred_fallthru
        _
    $region32: #{conv_lstm_forward.5} parent=5 // pred_fallthru
      _
    %p3120 = scmp.le.s32.totalorder 2, %s9
    // Predicated region
    $region37: #{conv_lstm_forward.5} parent=5 // pred_check
      %p3121 = pneg %p3120
    $region38: #{conv_lstm_forward.5} parent=5 // pred_check_branch
      %3123 = sbr.rel (%p3121) target = $region40
    $region39: #{conv_lstm_forward.5} parent=5 // pred_region
      %s3124 = ssub.s32 %s9, 2
      // Predicated region
      $region41: #{conv_lstm_forward.5} parent=39 // pred_check
        %p3125 = pneg %p106
      $region42: #{conv_lstm_forward.5} parent=39 // pred_check_branch
        %3127 = sbr.rel (%p3125) target = $region44
      $region43: #{conv_lstm_forward.5} parent=39 // pred_region
        %p3128 = scmp.lt.s32.totalorder %s15, 1
        %s3129 = scalar_select %p3128, %s15, 1
        %s3130 = smul.addr %s3129, 8
        %s3131 = scalar_lea.vmem %s3, %s3130
      $region44: #{conv_lstm_forward.5} parent=39 // pred_fallthru
        _
    $region40: #{conv_lstm_forward.5} parent=5 // pred_fallthru
      _
  $region6: #{conv_lstm_forward.5} parent=0 // loop_footer
    %s13 = sadd.s32 1, %s9
  $region7: #{conv_lstm_forward.5} parent=0 // loop_footer_branch
    %8 = sbr.rel target = $region3
  $region8: #{conv_lstm_forward.5} parent=0 // loop_exit
    _

// kernel: conv_lstm_forward.6
$region0: #{conv_lstm_forward.6}
  #allocation0 [shape = 'u32[]', space=smem, size = 0x4, offset = 0x4, fixed_abs, tag = 'smem constant byte address 0x4 - core index']
  #allocation1 [shape = 'u32[144,128]{1,0:T(1,128)}', space=vmem, size = 0x12000, scoped, tag = 'internal scratch']
  %s0 = inlined_call_operand.vmem [shape: f32[16,128], index: 0, kind: input, shape index: {}]
  %s1 = inlined_call_operand.vmem [shape: f32[128,32], index: 1, kind: input, shape index: {}]
  %s2 = inlined_call_operand.vmem [shape: f32[1,32], index: 2, kind: input, shape index: {}]
  %s3 = inlined_call_operand.vmem [shape: f32[1,32], index: 3, kind: input, shape index: {}]
  %s4 = inlined_call_operand.vmem [shape: f32[1,32], index: 4, kind: input, shape index: {}]
  %s5 = inlined_call_operand.vmem [shape: f32[32,256], index: 5, kind: input, shape index: {}]
  %s6 = inlined_call_operand.vmem [shape: f32[1,256], index: 6, kind: input, shape index: {}]
  %s7 = inlined_call_operand.vmem [shape: f32[16,256], index: 7, kind: output, shape index: {}]
  %s8 = sld [smem:[#allocation0]]
  $region38: #{conv_lstm_forward.6} parent=0
    _
  %s10 = ssub.s32 1, %s8
  %s11 = scalar_select 0, %s10, %s8
  // Predicated region
  $region2: #{conv_lstm_forward.6} parent=0 // pred_check
    _
  $region3: #{conv_lstm_forward.6} parent=0 // pred_check_branch
    %13 = sbr.rel (0) target = $region5
  $region4: #{conv_lstm_forward.6} parent=0 // pred_region
    _
  $region5: #{conv_lstm_forward.6} parent=0 // pred_fallthru
    _
  // Predicated region
  $region6: #{conv_lstm_forward.6} parent=0 // pred_check
    _
  $region7: #{conv_lstm_forward.6} parent=0 // pred_check_branch
    %15 = sbr.rel (0) target = $region9
  $region8: #{conv_lstm_forward.6} parent=0 // pred_region
    _
  $region9: #{conv_lstm_forward.6} parent=0 // pred_fallthru
    _
  // Predicated region
  $region10: #{conv_lstm_forward.6} parent=0 // pred_check
    _
  $region11: #{conv_lstm_forward.6} parent=0 // pred_check_branch
    %17 = sbr.rel (0) target = $region13
  $region12: #{conv_lstm_forward.6} parent=0 // pred_region
    _
  $region13: #{conv_lstm_forward.6} parent=0 // pred_fallthru
    _
  // Predicated region
  $region14: #{conv_lstm_forward.6} parent=0 // pred_check
    _
  $region15: #{conv_lstm_forward.6} parent=0 // pred_check_branch
    %19 = sbr.rel (0) target = $region17
  $region16: #{conv_lstm_forward.6} parent=0 // pred_region
    _
  $region17: #{conv_lstm_forward.6} parent=0 // pred_fallthru
    _
  // Predicated region
  $region18: #{conv_lstm_forward.6} parent=0 // pred_check
    _
  $region19: #{conv_lstm_forward.6} parent=0 // pred_check_branch
    %21 = sbr.rel (0) target = $region21
  $region20: #{conv_lstm_forward.6} parent=0 // pred_region
    _
  $region21: #{conv_lstm_forward.6} parent=0 // pred_fallthru
    _
  // Predicated region
  $region22: #{conv_lstm_forward.6} parent=0 // pred_check
    _
  $region23: #{conv_lstm_forward.6} parent=0 // pred_check_branch
    %23 = sbr.rel (0) target = $region25
  $region24: #{conv_lstm_forward.6} parent=0 // pred_region
    _
  $region25: #{conv_lstm_forward.6} parent=0 // pred_fallthru
    _
  // Predicated region
  $region26: #{conv_lstm_forward.6} parent=0 // pred_check
    _
  $region27: #{conv_lstm_forward.6} parent=0 // pred_check_branch
    %25 = sbr.rel (0) target = $region29
  $region28: #{conv_lstm_forward.6} parent=0 // pred_region
    _
  $region29: #{conv_lstm_forward.6} parent=0 // pred_fallthru
    _
  %v26 = vld [vmem:[%s0] sm:$0xff]
  %v27 = vld [vmem:[%s0 + $0x8] sm:$0xff]
  %v28 = vld [vmem:[%s1] sm:$0xff]
  %v29 = vld [vmem:[%s1 + $0x8] sm:$0xff]
  %v30 = vld [vmem:[%s1 + $0x10] sm:$0xff]
  %v31 = vld [vmem:[%s1 + $0x18] sm:$0xff]
  %v32 = vld [vmem:[%s1 + $0x20] sm:$0xff]
  %v33 = vld [vmem:[%s1 + $0x28] sm:$0xff]
  %v34 = vld [vmem:[%s1 + $0x30] sm:$0xff]
  %v35 = vld [vmem:[%s1 + $0x38] sm:$0xff]
  %v36 = vld [vmem:[%s1 + $0x40] sm:$0xff]
  %v37 = vld [vmem:[%s1 + $0x48] sm:$0xff]
  %v38 = vld [vmem:[%s1 + $0x50] sm:$0xff]
  %v39 = vld [vmem:[%s1 + $0x58] sm:$0xff]
  %v40 = vld [vmem:[%s1 + $0x60] sm:$0xff]
  %v41 = vld [vmem:[%s1 + $0x68] sm:$0xff]
  %v42 = vld [vmem:[%s1 + $0x70] sm:$0xff]
  %v43 = vld [vmem:[%s1 + $0x78] sm:$0xff]
  %v44 = vld [vmem:[%s2] sm:$0x1]
  %v46 = vlaneseq
  %v47 = vshrl.u32 %v46, 7
  %v48 = vsub.s32 0, %v47
  %v49 = vrot.slane %v44, %v48
  %51 = vmatprep.subr.mxu0 0.0
  %52 = vmatpush1.msra.mxu0 %v28
  %53 = vmatprep.subr.mxu0 0.0
  %54 = vmatpush1.msra.mxu0 %v29
  %55 = vmatprep.subr.mxu0 0.0
  %56 = vmatpush1.msra.mxu0 %v30
  %57 = vmatprep.subr.mxu0 0.0
  %58 = vmatpush1.msra.mxu0 %v31
  %59 = vmatprep.subr.mxu0 0.0
  %60 = vmatpush1.msra.mxu0 %v32
  %61 = vmatprep.subr.mxu0 0.0
  %62 = vmatpush1.msra.mxu0 %v33
  %63 = vmatprep.subr.mxu0 0.0
  %64 = vmatpush1.msra.mxu0 %v34
  %65 = vmatprep.subr.mxu0 0.0
  %66 = vmatpush1.msra.mxu0 %v35
  %67 = vmatprep.subr.mxu0 0.0
  %68 = vmatpush1.msra.mxu0 %v36
  %69 = vmatprep.subr.mxu0 0.0
  %70 = vmatpush1.msra.mxu0 %v37
  %71 = vmatprep.subr.mxu0 0.0
  %72 = vmatpush1.msra.mxu0 %v38
  %73 = vmatprep.subr.mxu0 0.0
  %74 = vmatpush1.msra.mxu0 %v39
  %75 = vmatprep.subr.mxu0 0.0
  %76 = vmatpush1.msra.mxu0 %v40
  %77 = vmatprep.subr.mxu0 0.0
  %78 = vmatpush1.msra.mxu0 %v41
  %79 = vmatprep.subr.mxu0 0.0
  %80 = vmatpush1.msra.mxu0 %v42
  %81 = vmatprep.subr.mxu0 0.0
  %82 = vmatpush1.msra.mxu0 %v43
  %83 = vmatprep.subr.mxu0 0.0
  %84 = vmatpush1.msra.mxu0 0.0
  %85 = vmatprep.subr.mxu0 0.0
  %86 = vmatpush1.msra.mxu0 0.0
  %87 = vmatprep.subr.mxu0 0.0
  %88 = vmatpush1.msra.mxu0 0.0
  %89 = vmatprep.subr.mxu0 0.0
  %90 = vmatpush1.msra.mxu0 0.0
  %91 = vmatprep.subr.mxu0 0.0
  %92 = vmatpush1.msra.mxu0 0.0
  %93 = vmatprep.subr.mxu0 0.0
  %94 = vmatpush1.msra.mxu0 0.0
  %95 = vmatprep.subr.mxu0 0.0
  %96 = vmatpush1.msra.mxu0 0.0
  %97 = vmatprep.subr.mxu0 0.0
  %98 = vmatpush1.msra.mxu0 0.0
  %99 = vmatprep.subr.mxu0 0.0
  %100 = vmatpush1.msra.mxu0 0.0
  %101 = vmatprep.subr.mxu0 0.0
  %102 = vmatpush1.msra.mxu0 0.0
  %103 = vmatprep.subr.mxu0 0.0
  %104 = vmatpush1.msra.mxu0 0.0
  %105 = vmatprep.subr.mxu0 0.0
  %106 = vmatpush1.msra.mxu0 0.0
  %107 = vmatprep.subr.mxu0 0.0
  %108 = vmatpush1.msra.mxu0 0.0
  %109 = vmatprep.subr.mxu0 0.0
  %110 = vmatpush1.msra.mxu0 0.0
  %111 = vmatprep.subr.mxu0 0.0
  %112 = vmatpush1.msra.mxu0 0.0
  %113 = vmatprep.subr.mxu0 0.0
  %114 = vmatpush1.msra.mxu0 0.0
  %115 = vmatprep.mubr.f32.mxu0 0.0
  %116 = vmatmul.mubr.f32.gmra.mrb[0].mxu0 %v26
  %v117 = vpop.f32.mrb[0].mxu0
  %v118 = vadd.f32 %v49, %v117
  %v119 = vpop.f32.mrb[0].mxu0
  %120 = vmatprep.mubr.f32.mxu0 0.0
  %121 = vmatmul.mubr.f32.gmra.mrb[0].mxu0 %v27
  %v122 = vpop.f32.mrb[0].mxu0
  %v123 = vadd.f32 %v49, %v122
  %v124 = vpop.f32.mrb[0].mxu0
  %125 = vdwg.mxu0
  %vm126 = vcmask 261120
  %v127 = vsel %vm126, %v118, 0.0
  %v128 = vsel %vm126, %v123, 0.0
  %v129 = vadd.f32 %v127, %v128
  %v130 = vrot.slane %v129, 4
  %v131 = vadd.f32 %v129, %v130
  %v132 = vrot.slane %v131, 2
  %v133 = vadd.f32 %v131, %v132
  %v134 = vrot.slane %v133, 1
  %v135 = vadd.f32 %v133, %v134
  %v136 = vrcp.pop 16.0
  %v137 = vmul.f32 %v135, %v136
  %v138 = vsub.f32 %v118, %v137
  %v139 = vsub.f32 %v123, %v137
  %v140 = vmul.f32 %v138, %v138
  %v141 = vmul.f32 %v139, %v139
  %v142 = vsel %vm126, %v140, 0.0
  %v143 = vsel %vm126, %v141, 0.0
  %v144 = vadd.f32 %v142, %v143
  %v145 = vrot.slane %v144, 4
  %v146 = vadd.f32 %v144, %v145
  %v147 = vrot.slane %v146, 2
  %v148 = vadd.f32 %v146, %v147
  %v149 = vrot.slane %v148, 1
  %v150 = vadd.f32 %v148, %v149
  %v151 = vmul.f32 %v150, %v136
  %v152 = vadd.f32 %v151, 1e-05
  %v153 = vrsqrt.pop %v152
  %v154 = vmul.f32 %v138, %v153
  %v155 = vmul.f32 %v139, %v153
  %v156 = vld [vmem:[%s3] sm:$0x1]
  %v158 = vlaneseq
  %v159 = vshrl.u32 %v158, 7
  %v160 = vsub.s32 0, %v159
  %v161 = vrot.slane %v156, %v160
  %v163 = vmul.f32 %v154, %v161
  %v164 = vmul.f32 %v155, %v161
  %v165 = vld [vmem:[%s4] sm:$0x1]
  %v167 = vlaneseq
  %v168 = vshrl.u32 %v167, 7
  %v169 = vsub.s32 0, %v168
  %v170 = vrot.slane %v165, %v169
  %v172 = vadd.f32 %v163, %v170
  %v173 = vadd.f32 %v164, %v170
  %v174 = vld [vmem:[%s5] sm:$0xff]
  %v175 = vld [vmem:[%s5 + $0x8] sm:$0xff]
  %v176 = vld [vmem:[%s5 + $0x10] sm:$0xff]
  %v177 = vld [vmem:[%s5 + $0x18] sm:$0xff]
  %v178 = vld [vmem:[%s5 + $0x20] sm:$0xff]
  %v179 = vld [vmem:[%s5 + $0x28] sm:$0xff]
  %v180 = vld [vmem:[%s5 + $0x30] sm:$0xff]
  %v181 = vld [vmem:[%s5 + $0x38] sm:$0xff]
  %v182 = vld [vmem:[%s6] sm:$0x3]
  %v184 = vlaneseq
  %v185 = vshrl.u32 %v184, 7
  %v186 = vsub.s32 0, %v185
  %v187 = vrot.slane %v182, %v186
  %v188 = vlaneseq
  %v189 = vshrl.u32 %v188, 7
  %v190 = vsub.s32 1, %v189
  %v191 = vrot.slane %v182, %v190
  %v195 = vsel %vm126, %v172, 0
  %v198 = vsel %vm126, %v173, 0
  %200 = vmatprep.subr.mxu0 %v175
  %201 = vmatpush1.msra.mxu0 %v174
  %202 = vmatprep.subr.mxu0 %v177
  %203 = vmatpush1.msra.mxu0 %v176
  %204 = vmatprep.subr.mxu0 %v179
  %205 = vmatpush1.msra.mxu0 %v178
  %206 = vmatprep.subr.mxu0 %v181
  %207 = vmatpush1.msra.mxu0 %v180
  %208 = vmatprep.subr.mxu0 0.0
  %209 = vmatpush1.msra.mxu0 0.0
  %210 = vmatprep.subr.mxu0 0.0
  %211 = vmatpush1.msra.mxu0 0.0
  %212 = vmatprep.subr.mxu0 0.0
  %213 = vmatpush1.msra.mxu0 0.0
  %214 = vmatprep.subr.mxu0 0.0
  %215 = vmatpush1.msra.mxu0 0.0
  %216 = vmatprep.subr.mxu0 0.0
  %217 = vmatpush1.msra.mxu0 0.0
  %218 = vmatprep.subr.mxu0 0.0
  %219 = vmatpush1.msra.mxu0 0.0
  %220 = vmatprep.subr.mxu0 0.0
  %221 = vmatpush1.msra.mxu0 0.0
  %222 = vmatprep.subr.mxu0 0.0
  %223 = vmatpush1.msra.mxu0 0.0
  %224 = vmatprep.subr.mxu0 0.0
  %225 = vmatpush1.msra.mxu0 0.0
  %226 = vmatprep.subr.mxu0 0.0
  %227 = vmatpush1.msra.mxu0 0.0
  %228 = vmatprep.subr.mxu0 0.0
  %229 = vmatpush1.msra.mxu0 0.0
  %230 = vmatprep.subr.mxu0 0.0
  %231 = vmatpush1.msra.mxu0 0.0
  %232 = vmatprep.subr.mxu0 0.0
  %233 = vmatpush1.msra.mxu0 0.0
  %234 = vmatprep.subr.mxu0 0.0
  %235 = vmatpush1.msra.mxu0 0.0
  %236 = vmatprep.subr.mxu0 0.0
  %237 = vmatpush1.msra.mxu0 0.0
  %238 = vmatprep.subr.mxu0 0.0
  %239 = vmatpush1.msra.mxu0 0.0
  %240 = vmatprep.subr.mxu0 0.0
  %241 = vmatpush1.msra.mxu0 0.0
  %242 = vmatprep.subr.mxu0 0.0
  %243 = vmatpush1.msra.mxu0 0.0
  %244 = vmatprep.subr.mxu0 0.0
  %245 = vmatpush1.msra.mxu0 0.0
  %246 = vmatprep.subr.mxu0 0.0
  %247 = vmatpush1.msra.mxu0 0.0
  %248 = vmatprep.subr.mxu0 0.0
  %249 = vmatpush1.msra.mxu0 0.0
  %250 = vmatprep.subr.mxu0 0.0
  %251 = vmatpush1.msra.mxu0 0.0
  %252 = vmatprep.subr.mxu0 0.0
  %253 = vmatpush1.msra.mxu0 0.0
  %254 = vmatprep.subr.mxu0 0.0
  %255 = vmatpush1.msra.mxu0 0.0
  %256 = vmatprep.subr.mxu0 0.0
  %257 = vmatpush1.msra.mxu0 0.0
  %258 = vmatprep.subr.mxu0 0.0
  %259 = vmatpush1.msra.mxu0 0.0
  %260 = vmatprep.subr.mxu0 0.0
  %261 = vmatpush1.msra.mxu0 0.0
  %262 = vmatprep.subr.mxu0 0.0
  %263 = vmatpush1.msra.mxu0 0.0
  %264 = vmatprep.mubr.f32.mxu0 0.0
  %265 = vmatmul.mubr.f32.gmra.mrb[0].mxu0 %v195
  %v266 = vpop.f32.mrb[0].mxu0
  %v267 = vadd.f32 %v187, %v266
  %v268 = vpop.f32.mrb[0].mxu0
  %v269 = vadd.f32 %v191, %v268
  %270 = vmatprep.mubr.f32.mxu0 0.0
  %271 = vmatmul.mubr.f32.gmra.mrb[0].mxu0 %v198
  %v272 = vpop.f32.mrb[0].mxu0
  %v273 = vadd.f32 %v187, %v272
  %v274 = vpop.f32.mrb[0].mxu0
  %v275 = vadd.f32 %v191, %v274
  %276 = vdwg.mxu0
  %277 = vst [vmem:[%s7] sm:$0xff] %v267
  %278 = vst [vmem:[%s7 + $0x8] sm:$0xff] %v269
  %279 = vst [vmem:[%s7 + $0x10] sm:$0xff] %v273
  %280 = vst [vmem:[%s7 + $0x18] sm:$0xff] %v275
  // Predicated region
  $region30: #{conv_lstm_forward.6} parent=0 // pred_check
    _
  $region31: #{conv_lstm_forward.6} parent=0 // pred_check_branch
    %282 = sbr.rel (0) target = $region33
  $region32: #{conv_lstm_forward.6} parent=0 // pred_region
    _
  $region33: #{conv_lstm_forward.6} parent=0 // pred_fallthru
    _
  // Predicated region
  $region34: #{conv_lstm_forward.6} parent=0 // pred_check
    _
  $region35: #{conv_lstm_forward.6} parent=0 // pred_check_branch
    %284 = sbr.rel (0) target = $region37
  $region36: #{conv_lstm_forward.6} parent=0 // pred_region
    _
  $region37: #{conv_lstm_forward.6} parent=0 // pred_fallthru
    _

// kernel: conv_lstm_forward.8
$region0: #{conv_lstm_forward.8}
  #allocation0 [shape = 'u32[]', space=smem, size = 0x4, offset = 0x4, fixed_abs, tag = 'smem constant byte address 0x4 - core index']
  #allocation1 [shape = 'u32[144,128]{1,0:T(1,128)}', space=vmem, size = 0x12000, scoped, tag = 'internal scratch']
  #allocation2 [shape = 'f32[1,1]{1,0:T(1,128)S(1)}', space=vmem, size = 0x200, scoped, tag = 'scoped memory for conv_lstm_forward.8']
  %s0 = inlined_call_operand.vmem [shape: f32[2,8,64], index: 0, kind: input, shape index: {}]
  %s1 = inlined_call_operand.vmem [shape: f32[1,1,64], index: 1, kind: input, shape index: {}]
  %s2 = inlined_call_operand.<no memory space> [shape: f32[1,1], index: 2, kind: input, shape index: {}]
  %s3 = inlined_call_operand.vmem [shape: f32[2,64], index: 3, kind: output, shape index: {}]
  %s4 = sld [smem:[#allocation0]]
  $region22: #{conv_lstm_forward.8} parent=0
    _
  %s6 = ssub.s32 1, %s4
  %s7 = scalar_select 0, %s6, %s4
  %v8 = vstv %s2
  %9 = vst [vmem:[#allocation2] sm:$0x1] %v8
  // Predicated region
  $region2: #{conv_lstm_forward.8} parent=0 // pred_check
    _
  $region3: #{conv_lstm_forward.8} parent=0 // pred_check_branch
    %11 = sbr.rel (0) target = $region5
  $region4: #{conv_lstm_forward.8} parent=0 // pred_region
    _
  $region5: #{conv_lstm_forward.8} parent=0 // pred_fallthru
    _
  // Predicated region
  $region6: #{conv_lstm_forward.8} parent=0 // pred_check
    _
  $region7: #{conv_lstm_forward.8} parent=0 // pred_check_branch
    %13 = sbr.rel (0) target = $region9
  $region8: #{conv_lstm_forward.8} parent=0 // pred_region
    _
  $region9: #{conv_lstm_forward.8} parent=0 // pred_fallthru
    _
  // Predicated region
  $region10: #{conv_lstm_forward.8} parent=0 // pred_check
    _
  $region11: #{conv_lstm_forward.8} parent=0 // pred_check_branch
    %15 = sbr.rel (0) target = $region13
  $region12: #{conv_lstm_forward.8} parent=0 // pred_region
    _
  $region13: #{conv_lstm_forward.8} parent=0 // pred_fallthru
    _
  %v16 = vld [vmem:[%s0] sm:$0xff]
  %v17 = vld [vmem:[%s0 + $0x8] sm:$0xff]
  %v18 = vld [vmem:[%s1] sm:$0x1]
  %v20 = vlaneseq
  %v21 = vshrl.u32 %v20, 7
  %v22 = vsub.s32 0, %v21
  %v23 = vrot.slane %v18, %v22
  %v25 = vmul.f32 %v16, %v23
  %v26 = vmul.f32 %v17, %v23
  %vm27 = vcmask 523264
  %v28 = vsel %vm27, %v25, 0.0
  %29 = vadd.xlane.f32.xlu0 %v28
  %v30 = vpop.xlane.xlu0 %29
  %v31 = vsel %vm27, %v26, 0.0
  %32 = vadd.xlane.f32.xlu0 %v31
  %v33 = vpop.xlane.xlu0 %32
  %v34 = vld [vmem:[#allocation2] sm:$0x1]
  %v36 = vlaneseq
  %v37 = vshrl.u32 %v36, 7
  %v38 = vsub.s32 0, %v37
  %v39 = vrot.slane %v34, %v38
  %40 = vset.pattern.permute.xlu0 0
  %41 = vperm.xlu0 %40, %v39
  %v42 = vpop.permute.xlu0 %41
  %v44 = vadd.f32 %v30, %v42
  %v45 = vadd.f32 %v33, %v42
  %v48 = vlaneseq
  %v49 = vand.u32 %v48, 127
  %v50 = vlaneseq
  %v51 = vshrl.u32 %v50, 7
  %v52 = vsub.s32 %v49, %v51
  %v53 = vrot.slane %v44, %v52
  %v54 = vlaneseq
  %v55 = vshrl.u32 %v54, 7
  %v56 = vsub.s32 %v49, %v55
  %v57 = vrot.slane %v45, %v56
  %vm58 = vcmask 1041409
  %v59 = vsel %vm58, %v57, %v53
  %vm61 = vcmask 58368
  %v62 = vsel %vm61, %v59, -inf
  %63 = vmax.xlane.f32.xlu0 %v62
  %v64 = vpop.xlane.xlu0 %63
  %v66 = vlaneseq
  %v67 = vshrl.u32 %v66, 7
  %v68 = vsub.s32 0, %v67
  %v69 = vrot.slane %v64, %v68
  %v70 = vlaneseq
  %v71 = vshrl.u32 %v70, 7
  %v72 = vsub.s32 1, %v71
  %v73 = vrot.slane %v64, %v72
  %v76 = vsub.f32 %v44, %v69
  %v77 = vsub.f32 %v45, %v73
  %v78 = vmul.f32 %v76, 1.442695
  %v79 = vpow.pop %v78
  %v80 = vmul.f32 %v77, 1.442695
  %v81 = vpow.pop %v80
  %84 = vset.pattern.permute.xlu0 0
  %85 = vperm.xlu0 %84, %v79
  %v86 = vpop.permute.xlu0 %85
  %87 = vset.pattern.permute.xlu0 0
  %88 = vperm.xlu0 %87, %v81
  %v89 = vpop.permute.xlu0 %88
  %v90 = vlaneseq
  %v91 = vshrl.u32 %v90, 7
  %v92 = vsub.s32 %v49, %v91
  %v93 = vrot.slane %v86, %v92
  %v94 = vlaneseq
  %v95 = vshrl.u32 %v94, 7
  %v96 = vsub.s32 %v49, %v95
  %v97 = vrot.slane %v89, %v96
  %v98 = vsel %vm58, %v97, %v93
  %v100 = vsel %vm61, %v98, 0.0
  %101 = vadd.xlane.f32.xlu0 %v100
  %v102 = vpop.xlane.xlu0 %101
  %v104 = vlaneseq
  %v105 = vshrl.u32 %v104, 7
  %v106 = vsub.s32 0, %v105
  %v107 = vrot.slane %v102, %v106
  %v108 = vlaneseq
  %v109 = vshrl.u32 %v108, 7
  %v110 = vsub.s32 1, %v109
  %v111 = vrot.slane %v102, %v110
  %v114 = vrcp.pop %v107
  %v115 = vmul.f32 %v79, %v114
  %v116 = vrcp.pop %v111
  %v117 = vmul.f32 %v81, %v116
  %119 = vset.pattern.permute.xlu0 0
  %120 = vperm.xlu0 %119, %v115
  %v121 = vpop.permute.xlu0 %120
  %124 = vset.pattern.permute.xlu0 0
  %125 = vperm.xlu0 %124, %v117
  %v126 = vpop.permute.xlu0 %125
  %v128 = vmul.f32 %v121, %v16
  %v129 = vmul.f32 %v126, %v17
  %v130 = vsel %vm27, %v128, 0.0
  %v131 = vrot.slane %v130, 4
  %v132 = vadd.f32 %v130, %v131
  %v133 = vrot.slane %v132, 2
  %v134 = vadd.f32 %v132, %v133
  %v135 = vrot.slane %v134, 1
  %v136 = vadd.f32 %v134, %v135
  %v137 = vsel %vm27, %v129, 0.0
  %v138 = vrot.slane %v137, 4
  %v139 = vadd.f32 %v137, %v138
  %v140 = vrot.slane %v139, 2
  %v141 = vadd.f32 %v139, %v140
  %v142 = vrot.slane %v141, 1
  %v143 = vadd.f32 %v141, %v142
  %v146 = vsel %vm58, %v143, %v136
  %vm148 = vcmask 517120
  %149 = vst.msk [vmem:[%s3] sm:$0x3] %vm148, %v146
  // Predicated region
  $region14: #{conv_lstm_forward.8} parent=0 // pred_check
    _
  $region15: #{conv_lstm_forward.8} parent=0 // pred_check_branch
    %151 = sbr.rel (0) target = $region17
  $region16: #{conv_lstm_forward.8} parent=0 // pred_region
    _
  $region17: #{conv_lstm_forward.8} parent=0 // pred_fallthru
    _
  // Predicated region
  $region18: #{conv_lstm_forward.8} parent=0 // pred_check
    _
  $region19: #{conv_lstm_forward.8} parent=0 // pred_check_branch
    %153 = sbr.rel (0) target = $region21
  $region20: #{conv_lstm_forward.8} parent=0 // pred_region
    _
  $region21: #{conv_lstm_forward.8} parent=0 // pred_fallthru
    _

// kernel: conv_lstm_forward.7
$region0: #{conv_lstm_forward.7}
  #allocation0 [shape = 'u32[]', space=smem, size = 0x4, offset = 0x4, fixed_abs, tag = 'smem constant byte address 0x4 - core index']
  #allocation1 [shape = 'u32[144,128]{1,0:T(1,128)}', space=vmem, size = 0x12000, scoped, tag = 'internal scratch']
  %s0 = inlined_call_operand.vmem [shape: f32[8,2,256], index: 0, kind: input, shape index: {}]
  %s1 = inlined_call_operand.vmem [shape: f32[64,256], index: 1, kind: input, shape index: {}]
  %s2 = inlined_call_operand.vmem [shape: f32[8,2,64], index: 2, kind: output, shape index: {}]
  %s3 = sld [smem:[#allocation0]]
  $region18: #{conv_lstm_forward.7} parent=0
    _
  %s5 = ssub.s32 1, %s3
  %s6 = scalar_select 0, %s5, %s3
  // Predicated region
  $region2: #{conv_lstm_forward.7} parent=0 // pred_check
    _
  $region3: #{conv_lstm_forward.7} parent=0 // pred_check_branch
    %8 = sbr.rel (0) target = $region5
  $region4: #{conv_lstm_forward.7} parent=0 // pred_region
    _
  $region5: #{conv_lstm_forward.7} parent=0 // pred_fallthru
    _
  // Predicated region
  $region6: #{conv_lstm_forward.7} parent=0 // pred_check
    _
  $region7: #{conv_lstm_forward.7} parent=0 // pred_check_branch
    %10 = sbr.rel (0) target = $region9
  $region8: #{conv_lstm_forward.7} parent=0 // pred_region
    _
  $region9: #{conv_lstm_forward.7} parent=0 // pred_fallthru
    _
  %v11 = vld [vmem:[%s1] sm:$0xff]
  %v12 = vld [vmem:[%s1 + $0x8] sm:$0xff]
  %v13 = vld [vmem:[%s1 + $0x10] sm:$0xff]
  %v14 = vld [vmem:[%s1 + $0x18] sm:$0xff]
  %v15 = vld [vmem:[%s1 + $0x20] sm:$0xff]
  %v16 = vld [vmem:[%s1 + $0x28] sm:$0xff]
  %v17 = vld [vmem:[%s1 + $0x30] sm:$0xff]
  %v18 = vld [vmem:[%s1 + $0x38] sm:$0xff]
  %v19 = vld [vmem:[%s1 + $0x40] sm:$0xff]
  %v20 = vld [vmem:[%s1 + $0x48] sm:$0xff]
  %v21 = vld [vmem:[%s1 + $0x50] sm:$0xff]
  %v22 = vld [vmem:[%s1 + $0x58] sm:$0xff]
  %v23 = vld [vmem:[%s1 + $0x60] sm:$0xff]
  %v24 = vld [vmem:[%s1 + $0x68] sm:$0xff]
  %v25 = vld [vmem:[%s1 + $0x70] sm:$0xff]
  %v26 = vld [vmem:[%s1 + $0x78] sm:$0xff]
  %v27 = vld [vmem:[%s0] sm:$0xf]
  %vm28 = vcmask 523264
  %v30 = vsel %vm28, 0.0, 0
  %32 = vmatprep.subr.mxu0 %v12
  %33 = vmatpush1.msra.mxu0 %v11
  %34 = vmatprep.subr.mxu0 %v14
  %35 = vmatpush1.msra.mxu0 %v13
  %36 = vmatprep.subr.mxu0 %v16
  %37 = vmatpush1.msra.mxu0 %v15
  %38 = vmatprep.subr.mxu0 %v18
  %39 = vmatpush1.msra.mxu0 %v17
  %40 = vmatprep.subr.mxu0 %v20
  %41 = vmatpush1.msra.mxu0 %v19
  %42 = vmatprep.subr.mxu0 %v22
  %43 = vmatpush1.msra.mxu0 %v21
  %44 = vmatprep.subr.mxu0 %v24
  %45 = vmatpush1.msra.mxu0 %v23
  %46 = vmatprep.subr.mxu0 %v26
  %47 = vmatpush1.msra.mxu0 %v25
  %48 = vmatprep.subr.mxu0 0.0
  %49 = vmatpush1.msra.mxu0 0.0
  %50 = vmatprep.subr.mxu0 0.0
  %51 = vmatpush1.msra.mxu0 0.0
  %52 = vmatprep.subr.mxu0 0.0
  %53 = vmatpush1.msra.mxu0 0.0
  %54 = vmatprep.subr.mxu0 0.0
  %55 = vmatpush1.msra.mxu0 0.0
  %56 = vmatprep.subr.mxu0 0.0
  %57 = vmatpush1.msra.mxu0 0.0
  %58 = vmatprep.subr.mxu0 0.0
  %59 = vmatpush1.msra.mxu0 0.0
  %60 = vmatprep.subr.mxu0 0.0
  %61 = vmatpush1.msra.mxu0 0.0
  %62 = vmatprep.subr.mxu0 0.0
  %63 = vmatpush1.msra.mxu0 0.0
  %64 = vmatprep.subr.mxu0 0.0
  %65 = vmatpush1.msra.mxu0 0.0
  %66 = vmatprep.subr.mxu0 0.0
  %67 = vmatpush1.msra.mxu0 0.0
  %68 = vmatprep.subr.mxu0 0.0
  %69 = vmatpush1.msra.mxu0 0.0
  %70 = vmatprep.subr.mxu0 0.0
  %71 = vmatpush1.msra.mxu0 0.0
  %72 = vmatprep.subr.mxu0 0.0
  %73 = vmatpush1.msra.mxu0 0.0
  %74 = vmatprep.subr.mxu0 0.0
  %75 = vmatpush1.msra.mxu0 0.0
  %76 = vmatprep.subr.mxu0 0.0
  %77 = vmatpush1.msra.mxu0 0.0
  %78 = vmatprep.subr.mxu0 0.0
  %79 = vmatpush1.msra.mxu0 0.0
  %80 = vmatprep.subr.mxu0 0.0
  %81 = vmatpush1.msra.mxu0 0.0
  %82 = vmatprep.subr.mxu0 0.0
  %83 = vmatpush1.msra.mxu0 0.0
  %84 = vmatprep.subr.mxu0 0.0
  %85 = vmatpush1.msra.mxu0 0.0
  %86 = vmatprep.subr.mxu0 0.0
  %87 = vmatpush1.msra.mxu0 0.0
  %88 = vmatprep.subr.mxu0 0.0
  %89 = vmatpush1.msra.mxu0 0.0
  %90 = vmatprep.subr.mxu0 0.0
  %91 = vmatpush1.msra.mxu0 0.0
  %92 = vmatprep.subr.mxu0 0.0
  %93 = vmatpush1.msra.mxu0 0.0
  %94 = vmatprep.subr.mxu0 0.0
  %95 = vmatpush1.msra.mxu0 0.0
  %96 = vmatprep.mubr.f32.mxu0 0.0
  %97 = vmatmul.mubr.f32.gmra.mrb[0].mxu0 %v30
  %v98 = vpop.f32.mrb[0].mxu0
  %v99 = vadd.f32 0.0, %v98
  %v100 = vpop.f32.mrb[0].mxu0
  %v101 = vadd.f32 0.0, %v100
  %102 = vdwg.mxu0
  %v105 = vcombine.low %v99, %v101
  %v107 = vunpack.c.l.s4 1983009808
  %v108 = vunpack.c.0.s8 %v107
  %v109 = vlaneseq
  %v110 = vshrl.u32 %v109, 7
  %v111 = vsub.s32 %v108, %v110
  %v112 = vrot.slane %v105, %v111
  %v114 = vadd.f32 %v27, %v112
  %v115 = vxor.u32 %v114, 2147483648
  %v116 = vmul.f32 %v115, 1.442695
  %v117 = vpow.pop %v116
  %v118 = vadd.f32 %v117, 1.0
  %v119 = vrcp.pop %v118
  %v120 = vmul.f32 1.0, %v119
  %v122 = vrot.slane %v114, 2
  %v124 = vtanh.pop %v122
  %125 = vrot.lane.b32.xlu0 %v114, 64
  %v126 = vpop.permute.xlu0 %125
  %v127 = vrot.slane %v126, 2
  %v129 = vxor.u32 %v127, 2147483648
  %v130 = vmul.f32 %v129, 1.442695
  %v131 = vpow.pop %v130
  %v132 = vadd.f32 %v131, 1.0
  %v133 = vrcp.pop %v132
  %v134 = vmul.f32 1.0, %v133
  %v135 = vmul.f32 %v120, 0.0
  %v136 = vmul.f32 %v120, %v124
  %138 = vrot.lane.b32.xlu0 %v136, 64
  %v139 = vpop.permute.xlu0 %138
  %v141 = vadd.f32 %v135, %v139
  %v142 = vtanh.pop %v141
  %144 = vrot.lane.b32.xlu0 %v142, 64
  %v145 = vpop.permute.xlu0 %144
  %v147 = vmul.f32 %v134, %v145
  %vm148 = vcmask 517120
  %149 = vst.msk [vmem:[%s2] sm:$0x3] %vm148, %v147
  %s150 = scalar_lea.vmem %s0, 4
  %v151 = vld [vmem:[%s150] sm:$0xf]
  %v153 = vsel %vm28, %v147, 0
  %155 = vmatprep.subr.mxu0 %v12
  %156 = vmatpush1.msra.mxu0 %v11
  %157 = vmatprep.subr.mxu0 %v14
  %158 = vmatpush1.msra.mxu0 %v13
  %159 = vmatprep.subr.mxu0 %v16
  %160 = vmatpush1.msra.mxu0 %v15
  %161 = vmatprep.subr.mxu0 %v18
  %162 = vmatpush1.msra.mxu0 %v17
  %163 = vmatprep.subr.mxu0 %v20
  %164 = vmatpush1.msra.mxu0 %v19
  %165 = vmatprep.subr.mxu0 %v22
  %166 = vmatpush1.msra.mxu0 %v21
  %167 = vmatprep.subr.mxu0 %v24
  %168 = vmatpush1.msra.mxu0 %v23
  %169 = vmatprep.subr.mxu0 %v26
  %170 = vmatpush1.msra.mxu0 %v25
  %171 = vmatprep.subr.mxu0 0.0
  %172 = vmatpush1.msra.mxu0 0.0
  %173 = vmatprep.subr.mxu0 0.0
  %174 = vmatpush1.msra.mxu0 0.0
  %175 = vmatprep.subr.mxu0 0.0
  %176 = vmatpush1.msra.mxu0 0.0
  %177 = vmatprep.subr.mxu0 0.0
  %178 = vmatpush1.msra.mxu0 0.0
  %179 = vmatprep.subr.mxu0 0.0
  %180 = vmatpush1.msra.mxu0 0.0
  %181 = vmatprep.subr.mxu0 0.0
  %182 = vmatpush1.msra.mxu0 0.0
  %183 = vmatprep.subr.mxu0 0.0
  %184 = vmatpush1.msra.mxu0 0.0
  %185 = vmatprep.subr.mxu0 0.0
  %186 = vmatpush1.msra.mxu0 0.0
  %187 = vmatprep.subr.mxu0 0.0
  %188 = vmatpush1.msra.mxu0 0.0
  %189 = vmatprep.subr.mxu0 0.0
  %190 = vmatpush1.msra.mxu0 0.0
  %191 = vmatprep.subr.mxu0 0.0
  %192 = vmatpush1.msra.mxu0 0.0
  %193 = vmatprep.subr.mxu0 0.0
  %194 = vmatpush1.msra.mxu0 0.0
  %195 = vmatprep.subr.mxu0 0.0
  %196 = vmatpush1.msra.mxu0 0.0
  %197 = vmatprep.subr.mxu0 0.0
  %198 = vmatpush1.msra.mxu0 0.0
  %199 = vmatprep.subr.mxu0 0.0
  %200 = vmatpush1.msra.mxu0 0.0
  %201 = vmatprep.subr.mxu0 0.0
  %202 = vmatpush1.msra.mxu0 0.0
  %203 = vmatprep.subr.mxu0 0.0
  %204 = vmatpush1.msra.mxu0 0.0
  %205 = vmatprep.subr.mxu0 0.0
  %206 = vmatpush1.msra.mxu0 0.0
  %207 = vmatprep.subr.mxu0 0.0
  %208 = vmatpush1.msra.mxu0 0.0
  %209 = vmatprep.subr.mxu0 0.0
  %210 = vmatpush1.msra.mxu0 0.0
  %211 = vmatprep.subr.mxu0 0.0
  %212 = vmatpush1.msra.mxu0 0.0
  %213 = vmatprep.subr.mxu0 0.0
  %214 = vmatpush1.msra.mxu0 0.0
  %215 = vmatprep.subr.mxu0 0.0
  %216 = vmatpush1.msra.mxu0 0.0
  %217 = vmatprep.subr.mxu0 0.0
  %218 = vmatpush1.msra.mxu0 0.0
  %219 = vmatprep.mubr.f32.mxu0 0.0
  %220 = vmatmul.mubr.f32.gmra.mrb[0].mxu0 %v153
  %v221 = vpop.f32.mrb[0].mxu0
  %v222 = vadd.f32 0.0, %v221
  %v223 = vpop.f32.mrb[0].mxu0
  %v224 = vadd.f32 0.0, %v223
  %225 = vdwg.mxu0
  %v228 = vcombine.low %v222, %v224
  %v230 = vunpack.c.l.s4 1983009808
  %v231 = vunpack.c.0.s8 %v230
  %v232 = vlaneseq
  %v233 = vshrl.u32 %v232, 7
  %v234 = vsub.s32 %v231, %v233
  %v235 = vrot.slane %v228, %v234
  %v237 = vadd.f32 %v151, %v235
  %v238 = vxor.u32 %v237, 2147483648
  %v239 = vmul.f32 %v238, 1.442695
  %v240 = vpow.pop %v239
  %v241 = vadd.f32 %v240, 1.0
  %v242 = vrcp.pop %v241
  %v243 = vmul.f32 1.0, %v242
  %v245 = vrot.slane %v237, 2
  %v247 = vtanh.pop %v245
  %248 = vrot.lane.b32.xlu0 %v237, 64
  %v249 = vpop.permute.xlu0 %248
  %v250 = vrot.slane %v249, 2
  %v252 = vxor.u32 %v250, 2147483648
  %v253 = vmul.f32 %v252, 1.442695
  %v254 = vpow.pop %v253
  %v255 = vadd.f32 %v254, 1.0
  %v256 = vrcp.pop %v255
  %v257 = vmul.f32 1.0, %v256
  %v258 = vmul.f32 %v243, %v141
  %v259 = vmul.f32 %v243, %v247
  %261 = vrot.lane.b32.xlu0 %v259, 64
  %v262 = vpop.permute.xlu0 %261
  %v264 = vadd.f32 %v258, %v262
  %v265 = vtanh.pop %v264
  %267 = vrot.lane.b32.xlu0 %v265, 64
  %v268 = vpop.permute.xlu0 %267
  %v270 = vmul.f32 %v257, %v268
  %s271 = scalar_lea.vmem %s2, 2
  %272 = vst.msk [vmem:[%s271] sm:$0x3] %vm148, %v270
  %s273 = scalar_lea.vmem %s0, 8
  %v274 = vld [vmem:[%s273] sm:$0xf]
  %v276 = vsel %vm28, %v270, 0
  %278 = vmatprep.subr.mxu0 %v12
  %279 = vmatpush1.msra.mxu0 %v11
  %280 = vmatprep.subr.mxu0 %v14
  %281 = vmatpush1.msra.mxu0 %v13
  %282 = vmatprep.subr.mxu0 %v16
  %283 = vmatpush1.msra.mxu0 %v15
  %284 = vmatprep.subr.mxu0 %v18
  %285 = vmatpush1.msra.mxu0 %v17
  %286 = vmatprep.subr.mxu0 %v20
  %287 = vmatpush1.msra.mxu0 %v19
  %288 = vmatprep.subr.mxu0 %v22
  %289 = vmatpush1.msra.mxu0 %v21
  %290 = vmatprep.subr.mxu0 %v24
  %291 = vmatpush1.msra.mxu0 %v23
  %292 = vmatprep.subr.mxu0 %v26
  %293 = vmatpush1.msra.mxu0 %v25
  %294 = vmatprep.subr.mxu0 0.0
  %295 = vmatpush1.msra.mxu0 0.0
  %296 = vmatprep.subr.mxu0 0.0
  %297 = vmatpush1.msra.mxu0 0.0
  %298 = vmatprep.subr.mxu0 0.0
  %299 = vmatpush1.msra.mxu0 0.0
  %300 = vmatprep.subr.mxu0 0.0
  %301 = vmatpush1.msra.mxu0 0.0
  %302 = vmatprep.subr.mxu0 0.0
  %303 = vmatpush1.msra.mxu0 0.0
  %304 = vmatprep.subr.mxu0 0.0
  %305 = vmatpush1.msra.mxu0 0.0
  %306 = vmatprep.subr.mxu0 0.0
  %307 = vmatpush1.msra.mxu0 0.0
  %308 = vmatprep.subr.mxu0 0.0
  %309 = vmatpush1.msra.mxu0 0.0
  %310 = vmatprep.subr.mxu0 0.0
  %311 = vmatpush1.msra.mxu0 0.0
  %312 = vmatprep.subr.mxu0 0.0
  %313 = vmatpush1.msra.mxu0 0.0
  %314 = vmatprep.subr.mxu0 0.0
  %315 = vmatpush1.msra.mxu0 0.0
  %316 = vmatprep.subr.mxu0 0.0
  %317 = vmatpush1.msra.mxu0 0.0
  %318 = vmatprep.subr.mxu0 0.0
  %319 = vmatpush1.msra.mxu0 0.0
  %320 = vmatprep.subr.mxu0 0.0
  %321 = vmatpush1.msra.mxu0 0.0
  %322 = vmatprep.subr.mxu0 0.0
  %323 = vmatpush1.msra.mxu0 0.0
  %324 = vmatprep.subr.mxu0 0.0
  %325 = vmatpush1.msra.mxu0 0.0
  %326 = vmatprep.subr.mxu0 0.0
  %327 = vmatpush1.msra.mxu0 0.0
  %328 = vmatprep.subr.mxu0 0.0
  %329 = vmatpush1.msra.mxu0 0.0
  %330 = vmatprep.subr.mxu0 0.0
  %331 = vmatpush1.msra.mxu0 0.0
  %332 = vmatprep.subr.mxu0 0.0
  %333 = vmatpush1.msra.mxu0 0.0
  %334 = vmatprep.subr.mxu0 0.0
  %335 = vmatpush1.msra.mxu0 0.0
  %336 = vmatprep.subr.mxu0 0.0
  %337 = vmatpush1.msra.mxu0 0.0
  %338 = vmatprep.subr.mxu0 0.0
  %339 = vmatpush1.msra.mxu0 0.0
  %340 = vmatprep.subr.mxu0 0.0
  %341 = vmatpush1.msra.mxu0 0.0
  %342 = vmatprep.mubr.f32.mxu0 0.0
  %343 = vmatmul.mubr.f32.gmra.mrb[0].mxu0 %v276
  %v344 = vpop.f32.mrb[0].mxu0
  %v345 = vadd.f32 0.0, %v344
  %v346 = vpop.f32.mrb[0].mxu0
  %v347 = vadd.f32 0.0, %v346
  %348 = vdwg.mxu0
  %v351 = vcombine.low %v345, %v347
  %v353 = vunpack.c.l.s4 1983009808
  %v354 = vunpack.c.0.s8 %v353
  %v355 = vlaneseq
  %v356 = vshrl.u32 %v355, 7
  %v357 = vsub.s32 %v354, %v356
  %v358 = vrot.slane %v351, %v357
  %v360 = vadd.f32 %v274, %v358
  %v361 = vxor.u32 %v360, 2147483648
  %v362 = vmul.f32 %v361, 1.442695
  %v363 = vpow.pop %v362
  %v364 = vadd.f32 %v363, 1.0
  %v365 = vrcp.pop %v364
  %v366 = vmul.f32 1.0, %v365
  %v368 = vrot.slane %v360, 2
  %v370 = vtanh.pop %v368
  %371 = vrot.lane.b32.xlu0 %v360, 64
  %v372 = vpop.permute.xlu0 %371
  %v373 = vrot.slane %v372, 2
  %v375 = vxor.u32 %v373, 2147483648
  %v376 = vmul.f32 %v375, 1.442695
  %v377 = vpow.pop %v376
  %v378 = vadd.f32 %v377, 1.0
  %v379 = vrcp.pop %v378
  %v380 = vmul.f32 1.0, %v379
  %v381 = vmul.f32 %v366, %v264
  %v382 = vmul.f32 %v366, %v370
  %384 = vrot.lane.b32.xlu0 %v382, 64
  %v385 = vpop.permute.xlu0 %384
  %v387 = vadd.f32 %v381, %v385
  %v388 = vtanh.pop %v387
  %390 = vrot.lane.b32.xlu0 %v388, 64
  %v391 = vpop.permute.xlu0 %390
  %v393 = vmul.f32 %v380, %v391
  %s394 = scalar_lea.vmem %s2, 4
  %395 = vst.msk [vmem:[%s394] sm:$0x3] %vm148, %v393
  %s396 = scalar_lea.vmem %s0, 12
  %v397 = vld [vmem:[%s396] sm:$0xf]
  %v399 = vsel %vm28, %v393, 0
  %401 = vmatprep.subr.mxu0 %v12
  %402 = vmatpush1.msra.mxu0 %v11
  %403 = vmatprep.subr.mxu0 %v14
  %404 = vmatpush1.msra.mxu0 %v13
  %405 = vmatprep.subr.mxu0 %v16
  %406 = vmatpush1.msra.mxu0 %v15
  %407 = vmatprep.subr.mxu0 %v18
  %408 = vmatpush1.msra.mxu0 %v17
  %409 = vmatprep.subr.mxu0 %v20
  %410 = vmatpush1.msra.mxu0 %v19
  %411 = vmatprep.subr.mxu0 %v22
  %412 = vmatpush1.msra.mxu0 %v21
  %413 = vmatprep.subr.mxu0 %v24
  %414 = vmatpush1.msra.mxu0 %v23
  %415 = vmatprep.subr.mxu0 %v26
  %416 = vmatpush1.msra.mxu0 %v25
  %417 = vmatprep.subr.mxu0 0.0
  %418 = vmatpush1.msra.mxu0 0.0
  %419 = vmatprep.subr.mxu0 0.0
  %420 = vmatpush1.msra.mxu0 0.0
  %421 = vmatprep.subr.mxu0 0.0
  %422 = vmatpush1.msra.mxu0 0.0
  %423 = vmatprep.subr.mxu0 0.0
  %424 = vmatpush1.msra.mxu0 0.0
  %425 = vmatprep.subr.mxu0 0.0
  %426 = vmatpush1.msra.mxu0 0.0
  %427 = vmatprep.subr.mxu0 0.0
  %428 = vmatpush1.msra.mxu0 0.0
  %429 = vmatprep.subr.mxu0 0.0
  %430 = vmatpush1.msra.mxu0 0.0
  %431 = vmatprep.subr.mxu0 0.0
  %432 = vmatpush1.msra.mxu0 0.0
  %433 = vmatprep.subr.mxu0 0.0
  %434 = vmatpush1.msra.mxu0 0.0
  %435 = vmatprep.subr.mxu0 0.0
  %436 = vmatpush1.msra.mxu0 0.0
  %437 = vmatprep.subr.mxu0 0.0
  %438 = vmatpush1.msra.mxu0 0.0
  %439 = vmatprep.subr.mxu0 0.0
  %440 = vmatpush1.msra.mxu0 0.0
  %441 = vmatprep.subr.mxu0 0.0
  %442 = vmatpush1.msra.mxu0 0.0
  %443 = vmatprep.subr.mxu0 0.0
  %444 = vmatpush1.msra.mxu0 0.0
  %445 = vmatprep.subr.mxu0 0.0
  %446 = vmatpush1.msra.mxu0 0.0
  %447 = vmatprep.subr.mxu0 0.0
  %448 = vmatpush1.msra.mxu0 0.0
  %449 = vmatprep.subr.mxu0 0.0
  %450 = vmatpush1.msra.mxu0 0.0
  %451 = vmatprep.subr.mxu0 0.0
  %452 = vmatpush1.msra.mxu0 0.0
  %453 = vmatprep.subr.mxu0 0.0
  %454 = vmatpush1.msra.mxu0 0.0
  %455 = vmatprep.subr.mxu0 0.0
  %456 = vmatpush1.msra.mxu0 0.0
  %457 = vmatprep.subr.mxu0 0.0
  %458 = vmatpush1.msra.mxu0 0.0
  %459 = vmatprep.subr.mxu0 0.0
  %460 = vmatpush1.msra.mxu0 0.0
  %461 = vmatprep.subr.mxu0 0.0
  %462 = vmatpush1.msra.mxu0 0.0
  %463 = vmatprep.subr.mxu0 0.0
  %464 = vmatpush1.msra.mxu0 0.0
  %465 = vmatprep.mubr.f32.mxu0 0.0
  %466 = vmatmul.mubr.f32.gmra.mrb[0].mxu0 %v399
  %v467 = vpop.f32.mrb[0].mxu0
  %v468 = vadd.f32 0.0, %v467
  %v469 = vpop.f32.mrb[0].mxu0
  %v470 = vadd.f32 0.0, %v469
  %471 = vdwg.mxu0
  %v474 = vcombine.low %v468, %v470
  %v476 = vunpack.c.l.s4 1983009808
  %v477 = vunpack.c.0.s8 %v476
  %v478 = vlaneseq
  %v479 = vshrl.u32 %v478, 7
  %v480 = vsub.s32 %v477, %v479
  %v481 = vrot.slane %v474, %v480
  %v483 = vadd.f32 %v397, %v481
  %v484 = vxor.u32 %v483, 2147483648
  %v485 = vmul.f32 %v484, 1.442695
  %v486 = vpow.pop %v485
  %v487 = vadd.f32 %v486, 1.0
  %v488 = vrcp.pop %v487
  %v489 = vmul.f32 1.0, %v488
  %v491 = vrot.slane %v483, 2
  %v493 = vtanh.pop %v491
  %494 = vrot.lane.b32.xlu0 %v483, 64
  %v495 = vpop.permute.xlu0 %494
  %v496 = vrot.slane %v495, 2
  %v498 = vxor.u32 %v496, 2147483648
  %v499 = vmul.f32 %v498, 1.442695
  %v500 = vpow.pop %v499
  %v501 = vadd.f32 %v500, 1.0
  %v502 = vrcp.pop %v501
  %v503 = vmul.f32 1.0, %v502
  %v504 = vmul.f32 %v489, %v387
  %v505 = vmul.f32 %v489, %v493
  %507 = vrot.lane.b32.xlu0 %v505, 64
  %v508 = vpop.permute.xlu0 %507
  %v510 = vadd.f32 %v504, %v508
  %v511 = vtanh.pop %v510
  %513 = vrot.lane.b32.xlu0 %v511, 64
  %v514 = vpop.permute.xlu0 %513
  %v516 = vmul.f32 %v503, %v514
  %s517 = scalar_lea.vmem %s2, 6
  %518 = vst.msk [vmem:[%s517] sm:$0x3] %vm148, %v516
  %s519 = scalar_lea.vmem %s0, 16
  %v520 = vld [vmem:[%s519] sm:$0xf]
  %v522 = vsel %vm28, %v516, 0
  %524 = vmatprep.subr.mxu0 %v12
  %525 = vmatpush1.msra.mxu0 %v11
  %526 = vmatprep.subr.mxu0 %v14
  %527 = vmatpush1.msra.mxu0 %v13
  %528 = vmatprep.subr.mxu0 %v16
  %529 = vmatpush1.msra.mxu0 %v15
  %530 = vmatprep.subr.mxu0 %v18
  %531 = vmatpush1.msra.mxu0 %v17
  %532 = vmatprep.subr.mxu0 %v20
  %533 = vmatpush1.msra.mxu0 %v19
  %534 = vmatprep.subr.mxu0 %v22
  %535 = vmatpush1.msra.mxu0 %v21
  %536 = vmatprep.subr.mxu0 %v24
  %537 = vmatpush1.msra.mxu0 %v23
  %538 = vmatprep.subr.mxu0 %v26
  %539 = vmatpush1.msra.mxu0 %v25
  %540 = vmatprep.subr.mxu0 0.0
  %541 = vmatpush1.msra.mxu0 0.0
  %542 = vmatprep.subr.mxu0 0.0
  %543 = vmatpush1.msra.mxu0 0.0
  %544 = vmatprep.subr.mxu0 0.0
  %545 = vmatpush1.msra.mxu0 0.0
  %546 = vmatprep.subr.mxu0 0.0
  %547 = vmatpush1.msra.mxu0 0.0
  %548 = vmatprep.subr.mxu0 0.0
  %549 = vmatpush1.msra.mxu0 0.0
  %550 = vmatprep.subr.mxu0 0.0
  %551 = vmatpush1.msra.mxu0 0.0
  %552 = vmatprep.subr.mxu0 0.0
  %553 = vmatpush1.msra.mxu0 0.0
  %554 = vmatprep.subr.mxu0 0.0
  %555 = vmatpush1.msra.mxu0 0.0
  %556 = vmatprep.subr.mxu0 0.0
  %557 = vmatpush1.msra.mxu0 0.0
  %558 = vmatprep.subr.mxu0 0.0
  %559 = vmatpush1.msra.mxu0 0.0
  %560 = vmatprep.subr.mxu0 0.0
  %561 = vmatpush1.msra.mxu0 0.0
  %562 = vmatprep.subr.mxu0 0.0
  %563 = vmatpush1.msra.mxu0 0.0
  %564 = vmatprep.subr.mxu0 0.0
  %565 = vmatpush1.msra.mxu0 0.0
  %566 = vmatprep.subr.mxu0 0.0
  %567 = vmatpush1.msra.mxu0 0.0
  %568 = vmatprep.subr.mxu0 0.0
  %569 = vmatpush1.msra.mxu0 0.0
  %570 = vmatprep.subr.mxu0 0.0
  %571 = vmatpush1.msra.mxu0 0.0
  %572 = vmatprep.subr.mxu0 0.0
  %573 = vmatpush1.msra.mxu0 0.0
  %574 = vmatprep.subr.mxu0 0.0
  %575 = vmatpush1.msra.mxu0 0.0
  %576 = vmatprep.subr.mxu0 0.0
  %577 = vmatpush1.msra.mxu0 0.0
  %578 = vmatprep.subr.mxu0 0.0
  %579 = vmatpush1.msra.mxu0 0.0
  %580 = vmatprep.subr.mxu0 0.0
  %581 = vmatpush1.msra.mxu0 0.0
  %582 = vmatprep.subr.mxu0 0.0
  %583 = vmatpush1.msra.mxu0 0.0
  %584 = vmatprep.subr.mxu0 0.0
  %585 = vmatpush1.msra.mxu0 0.0
  %586 = vmatprep.subr.mxu0 0.0
  %587 = vmatpush1.msra.mxu0 0.0
  %588 = vmatprep.mubr.f32.mxu0 0.0
  %589 = vmatmul.mubr.f32.gmra.mrb[0].mxu0 %v522
  %v590 = vpop.f32.mrb[0].mxu0
  %v591 = vadd.f32 0.0, %v590
  %v592 = vpop.f32.mrb[0].mxu0
  %v593 = vadd.f32 0.0, %v592
  %594 = vdwg.mxu0
  %v597 = vcombine.low %v591, %v593
  %v599 = vunpack.c.l.s4 1983009808
  %v600 = vunpack.c.0.s8 %v599
  %v601 = vlaneseq
  %v602 = vshrl.u32 %v601, 7
  %v603 = vsub.s32 %v600, %v602
  %v604 = vrot.slane %v597, %v603
  %v606 = vadd.f32 %v520, %v604
  %v607 = vxor.u32 %v606, 2147483648
  %v608 = vmul.f32 %v607, 1.442695
  %v609 = vpow.pop %v608
  %v610 = vadd.f32 %v609, 1.0
  %v611 = vrcp.pop %v610
  %v612 = vmul.f32 1.0, %v611
  %v614 = vrot.slane %v606, 2
  %v616 = vtanh.pop %v614
  %617 = vrot.lane.b32.xlu0 %v606, 64
  %v618 = vpop.permute.xlu0 %617
  %v619 = vrot.slane %v618, 2
  %v621 = vxor.u32 %v619, 2147483648
  %v622 = vmul.f32 %v621, 1.442695
  %v623 = vpow.pop %v622
  %v624 = vadd.f32 %v623, 1.0
  %v625 = vrcp.pop %v624
  %v626 = vmul.f32 1.0, %v625
  %v627 = vmul.f32 %v612, %v510
  %v628 = vmul.f32 %v612, %v616
  %630 = vrot.lane.b32.xlu0 %v628, 64
  %v631 = vpop.permute.xlu0 %630
  %v633 = vadd.f32 %v627, %v631
  %v634 = vtanh.pop %v633
  %636 = vrot.lane.b32.xlu0 %v634, 64
  %v637 = vpop.permute.xlu0 %636
  %v639 = vmul.f32 %v626, %v637
  %s640 = scalar_lea.vmem %s2, 8
  %641 = vst.msk [vmem:[%s640] sm:$0x3] %vm148, %v639
  %s642 = scalar_lea.vmem %s0, 20
  %v643 = vld [vmem:[%s642] sm:$0xf]
  %v645 = vsel %vm28, %v639, 0
  %647 = vmatprep.subr.mxu0 %v12
  %648 = vmatpush1.msra.mxu0 %v11
  %649 = vmatprep.subr.mxu0 %v14
  %650 = vmatpush1.msra.mxu0 %v13
  %651 = vmatprep.subr.mxu0 %v16
  %652 = vmatpush1.msra.mxu0 %v15
  %653 = vmatprep.subr.mxu0 %v18
  %654 = vmatpush1.msra.mxu0 %v17
  %655 = vmatprep.subr.mxu0 %v20
  %656 = vmatpush1.msra.mxu0 %v19
  %657 = vmatprep.subr.mxu0 %v22
  %658 = vmatpush1.msra.mxu0 %v21
  %659 = vmatprep.subr.mxu0 %v24
  %660 = vmatpush1.msra.mxu0 %v23
  %661 = vmatprep.subr.mxu0 %v26
  %662 = vmatpush1.msra.mxu0 %v25
  %663 = vmatprep.subr.mxu0 0.0
  %664 = vmatpush1.msra.mxu0 0.0
  %665 = vmatprep.subr.mxu0 0.0
  %666 = vmatpush1.msra.mxu0 0.0
  %667 = vmatprep.subr.mxu0 0.0
  %668 = vmatpush1.msra.mxu0 0.0
  %669 = vmatprep.subr.mxu0 0.0
  %670 = vmatpush1.msra.mxu0 0.0
  %671 = vmatprep.subr.mxu0 0.0
  %672 = vmatpush1.msra.mxu0 0.0
  %673 = vmatprep.subr.mxu0 0.0
  %674 = vmatpush1.msra.mxu0 0.0
  %675 = vmatprep.subr.mxu0 0.0
  %676 = vmatpush1.msra.mxu0 0.0
  %677 = vmatprep.subr.mxu0 0.0
  %678 = vmatpush1.msra.mxu0 0.0
  %679 = vmatprep.subr.mxu0 0.0
  %680 = vmatpush1.msra.mxu0 0.0
  %681 = vmatprep.subr.mxu0 0.0
  %682 = vmatpush1.msra.mxu0 0.0
  %683 = vmatprep.subr.mxu0 0.0
  %684 = vmatpush1.msra.mxu0 0.0
  %685 = vmatprep.subr.mxu0 0.0
  %686 = vmatpush1.msra.mxu0 0.0
  %687 = vmatprep.subr.mxu0 0.0
  %688 = vmatpush1.msra.mxu0 0.0
  %689 = vmatprep.subr.mxu0 0.0
  %690 = vmatpush1.msra.mxu0 0.0
  %691 = vmatprep.subr.mxu0 0.0
  %692 = vmatpush1.msra.mxu0 0.0
  %693 = vmatprep.subr.mxu0 0.0
  %694 = vmatpush1.msra.mxu0 0.0
  %695 = vmatprep.subr.mxu0 0.0
  %696 = vmatpush1.msra.mxu0 0.0
  %697 = vmatprep.subr.mxu0 0.0
  %698 = vmatpush1.msra.mxu0 0.0
  %699 = vmatprep.subr.mxu0 0.0
  %700 = vmatpush1.msra.mxu0 0.0
  %701 = vmatprep.subr.mxu0 0.0
  %702 = vmatpush1.msra.mxu0 0.0
  %703 = vmatprep.subr.mxu0 0.0
  %704 = vmatpush1.msra.mxu0 0.0
  %705 = vmatprep.subr.mxu0 0.0
  %706 = vmatpush1.msra.mxu0 0.0
  %707 = vmatprep.subr.mxu0 0.0
  %708 = vmatpush1.msra.mxu0 0.0
  %709 = vmatprep.subr.mxu0 0.0
  %710 = vmatpush1.msra.mxu0 0.0
  %711 = vmatprep.mubr.f32.mxu0 0.0
  %712 = vmatmul.mubr.f32.gmra.mrb[0].mxu0 %v645
  %v713 = vpop.f32.mrb[0].mxu0
  %v714 = vadd.f32 0.0, %v713
  %v715 = vpop.f32.mrb[0].mxu0
  %v716 = vadd.f32 0.0, %v715
  %717 = vdwg.mxu0
  %v720 = vcombine.low %v714, %v716
  %v722 = vunpack.c.l.s4 1983009808
  %v723 = vunpack.c.0.s8 %v722
  %v724 = vlaneseq
  %v725 = vshrl.u32 %v724, 7
  %v726 = vsub.s32 %v723, %v725
  %v727 = vrot.slane %v720, %v726
  %v729 = vadd.f32 %v643, %v727
  %v730 = vxor.u32 %v729, 2147483648
  %v731 = vmul.f32 %v730, 1.442695
  %v732 = vpow.pop %v731
  %v733 = vadd.f32 %v732, 1.0
  %v734 = vrcp.pop %v733
  %v735 = vmul.f32 1.0, %v734
  %v737 = vrot.slane %v729, 2
  %v739 = vtanh.pop %v737
  %740 = vrot.lane.b32.xlu0 %v729, 64
  %v741 = vpop.permute.xlu0 %740
  %v742 = vrot.slane %v741, 2
  %v744 = vxor.u32 %v742, 2147483648
  %v745 = vmul.f32 %v744, 1.442695
  %v746 = vpow.pop %v745
  %v747 = vadd.f32 %v746, 1.0
  %v748 = vrcp.pop %v747
  %v749 = vmul.f32 1.0, %v748
  %v750 = vmul.f32 %v735, %v633
  %v751 = vmul.f32 %v735, %v739
  %753 = vrot.lane.b32.xlu0 %v751, 64
  %v754 = vpop.permute.xlu0 %753
  %v756 = vadd.f32 %v750, %v754
  %v757 = vtanh.pop %v756
  %759 = vrot.lane.b32.xlu0 %v757, 64
  %v760 = vpop.permute.xlu0 %759
  %v762 = vmul.f32 %v749, %v760
  %s763 = scalar_lea.vmem %s2, 10
  %764 = vst.msk [vmem:[%s763] sm:$0x3] %vm148, %v762
  %s765 = scalar_lea.vmem %s0, 24
  %v766 = vld [vmem:[%s765] sm:$0xf]
  %v768 = vsel %vm28, %v762, 0
  %770 = vmatprep.subr.mxu0 %v12
  %771 = vmatpush1.msra.mxu0 %v11
  %772 = vmatprep.subr.mxu0 %v14
  %773 = vmatpush1.msra.mxu0 %v13
  %774 = vmatprep.subr.mxu0 %v16
  %775 = vmatpush1.msra.mxu0 %v15
  %776 = vmatprep.subr.mxu0 %v18
  %777 = vmatpush1.msra.mxu0 %v17
  %778 = vmatprep.subr.mxu0 %v20
  %779 = vmatpush1.msra.mxu0 %v19
  %780 = vmatprep.subr.mxu0 %v22
  %781 = vmatpush1.msra.mxu0 %v21
  %782 = vmatprep.subr.mxu0 %v24
  %783 = vmatpush1.msra.mxu0 %v23
  %784 = vmatprep.subr.mxu0 %v26
  %785 = vmatpush1.msra.mxu0 %v25
  %786 = vmatprep.subr.mxu0 0.0
  %787 = vmatpush1.msra.mxu0 0.0
  %788 = vmatprep.subr.mxu0 0.0
  %789 = vmatpush1.msra.mxu0 0.0
  %790 = vmatprep.subr.mxu0 0.0
  %791 = vmatpush1.msra.mxu0 0.0
  %792 = vmatprep.subr.mxu0 0.0
  %793 = vmatpush1.msra.mxu0 0.0
  %794 = vmatprep.subr.mxu0 0.0
  %795 = vmatpush1.msra.mxu0 0.0
  %796 = vmatprep.subr.mxu0 0.0
  %797 = vmatpush1.msra.mxu0 0.0
  %798 = vmatprep.subr.mxu0 0.0
  %799 = vmatpush1.msra.mxu0 0.0
  %800 = vmatprep.subr.mxu0 0.0
  %801 = vmatpush1.msra.mxu0 0.0
  %802 = vmatprep.subr.mxu0 0.0
  %803 = vmatpush1.msra.mxu0 0.0
  %804 = vmatprep.subr.mxu0 0.0
  %805 = vmatpush1.msra.mxu0 0.0
  %806 = vmatprep.subr.mxu0 0.0
  %807 = vmatpush1.msra.mxu0 0.0
  %808 = vmatprep.subr.mxu0 0.0
  %809 = vmatpush1.msra.mxu0 0.0
  %810 = vmatprep.subr.mxu0 0.0
  %811 = vmatpush1.msra.mxu0 0.0
  %812 = vmatprep.subr.mxu0 0.0
  %813 = vmatpush1.msra.mxu0 0.0
  %814 = vmatprep.subr.mxu0 0.0
  %815 = vmatpush1.msra.mxu0 0.0
  %816 = vmatprep.subr.mxu0 0.0
  %817 = vmatpush1.msra.mxu0 0.0
  %818 = vmatprep.subr.mxu0 0.0
  %819 = vmatpush1.msra.mxu0 0.0
  %820 = vmatprep.subr.mxu0 0.0
  %821 = vmatpush1.msra.mxu0 0.0
  %822 = vmatprep.subr.mxu0 0.0
  %823 = vmatpush1.msra.mxu0 0.0
  %824 = vmatprep.subr.mxu0 0.0
  %825 = vmatpush1.msra.mxu0 0.0
  %826 = vmatprep.subr.mxu0 0.0
  %827 = vmatpush1.msra.mxu0 0.0
  %828 = vmatprep.subr.mxu0 0.0
  %829 = vmatpush1.msra.mxu0 0.0
  %830 = vmatprep.subr.mxu0 0.0
  %831 = vmatpush1.msra.mxu0 0.0
  %832 = vmatprep.subr.mxu0 0.0
  %833 = vmatpush1.msra.mxu0 0.0
  %834 = vmatprep.mubr.f32.mxu0 0.0
  %835 = vmatmul.mubr.f32.gmra.mrb[0].mxu0 %v768
  %v836 = vpop.f32.mrb[0].mxu0
  %v837 = vadd.f32 0.0, %v836
  %v838 = vpop.f32.mrb[0].mxu0
  %v839 = vadd.f32 0.0, %v838
  %840 = vdwg.mxu0
  %v843 = vcombine.low %v837, %v839
  %v845 = vunpack.c.l.s4 1983009808
  %v846 = vunpack.c.0.s8 %v845
  %v847 = vlaneseq
  %v848 = vshrl.u32 %v847, 7
  %v849 = vsub.s32 %v846, %v848
  %v850 = vrot.slane %v843, %v849
  %v852 = vadd.f32 %v766, %v850
  %v853 = vxor.u32 %v852, 2147483648
  %v854 = vmul.f32 %v853, 1.442695
  %v855 = vpow.pop %v854
  %v856 = vadd.f32 %v855, 1.0
  %v857 = vrcp.pop %v856
  %v858 = vmul.f32 1.0, %v857
  %v860 = vrot.slane %v852, 2
  %v862 = vtanh.pop %v860
  %863 = vrot.lane.b32.xlu0 %v852, 64
  %v864 = vpop.permute.xlu0 %863
  %v865 = vrot.slane %v864, 2
  %v867 = vxor.u32 %v865, 2147483648
  %v868 = vmul.f32 %v867, 1.442695
  %v869 = vpow.pop %v868
  %v870 = vadd.f32 %v869, 1.0
  %v871 = vrcp.pop %v870
  %v872 = vmul.f32 1.0, %v871
  %v873 = vmul.f32 %v858, %v756
  %v874 = vmul.f32 %v858, %v862
  %876 = vrot.lane.b32.xlu0 %v874, 64
  %v877 = vpop.permute.xlu0 %876
  %v879 = vadd.f32 %v873, %v877
  %v880 = vtanh.pop %v879
  %882 = vrot.lane.b32.xlu0 %v880, 64
  %v883 = vpop.permute.xlu0 %882
  %v885 = vmul.f32 %v872, %v883
  %s886 = scalar_lea.vmem %s2, 12
  %887 = vst.msk [vmem:[%s886] sm:$0x3] %vm148, %v885
  %s888 = scalar_lea.vmem %s0, 28
  %v889 = vld [vmem:[%s888] sm:$0xf]
  %v891 = vsel %vm28, %v885, 0
  %893 = vmatprep.subr.mxu0 %v12
  %894 = vmatpush1.msra.mxu0 %v11
  %895 = vmatprep.subr.mxu0 %v14
  %896 = vmatpush1.msra.mxu0 %v13
  %897 = vmatprep.subr.mxu0 %v16
  %898 = vmatpush1.msra.mxu0 %v15
  %899 = vmatprep.subr.mxu0 %v18
  %900 = vmatpush1.msra.mxu0 %v17
  %901 = vmatprep.subr.mxu0 %v20
  %902 = vmatpush1.msra.mxu0 %v19
  %903 = vmatprep.subr.mxu0 %v22
  %904 = vmatpush1.msra.mxu0 %v21
  %905 = vmatprep.subr.mxu0 %v24
  %906 = vmatpush1.msra.mxu0 %v23
  %907 = vmatprep.subr.mxu0 %v26
  %908 = vmatpush1.msra.mxu0 %v25
  %909 = vmatprep.subr.mxu0 0.0
  %910 = vmatpush1.msra.mxu0 0.0
  %911 = vmatprep.subr.mxu0 0.0
  %912 = vmatpush1.msra.mxu0 0.0
  %913 = vmatprep.subr.mxu0 0.0
  %914 = vmatpush1.msra.mxu0 0.0
  %915 = vmatprep.subr.mxu0 0.0
  %916 = vmatpush1.msra.mxu0 0.0
  %917 = vmatprep.subr.mxu0 0.0
  %918 = vmatpush1.msra.mxu0 0.0
  %919 = vmatprep.subr.mxu0 0.0
  %920 = vmatpush1.msra.mxu0 0.0
  %921 = vmatprep.subr.mxu0 0.0
  %922 = vmatpush1.msra.mxu0 0.0
  %923 = vmatprep.subr.mxu0 0.0
  %924 = vmatpush1.msra.mxu0 0.0
  %925 = vmatprep.subr.mxu0 0.0
  %926 = vmatpush1.msra.mxu0 0.0
  %927 = vmatprep.subr.mxu0 0.0
  %928 = vmatpush1.msra.mxu0 0.0
  %929 = vmatprep.subr.mxu0 0.0
  %930 = vmatpush1.msra.mxu0 0.0
  %931 = vmatprep.subr.mxu0 0.0
  %932 = vmatpush1.msra.mxu0 0.0
  %933 = vmatprep.subr.mxu0 0.0
  %934 = vmatpush1.msra.mxu0 0.0
  %935 = vmatprep.subr.mxu0 0.0
  %936 = vmatpush1.msra.mxu0 0.0
  %937 = vmatprep.subr.mxu0 0.0
  %938 = vmatpush1.msra.mxu0 0.0
  %939 = vmatprep.subr.mxu0 0.0
  %940 = vmatpush1.msra.mxu0 0.0
  %941 = vmatprep.subr.mxu0 0.0
  %942 = vmatpush1.msra.mxu0 0.0
  %943 = vmatprep.subr.mxu0 0.0
  %944 = vmatpush1.msra.mxu0 0.0
  %945 = vmatprep.subr.mxu0 0.0
  %946 = vmatpush1.msra.mxu0 0.0
  %947 = vmatprep.subr.mxu0 0.0
  %948 = vmatpush1.msra.mxu0 0.0
  %949 = vmatprep.subr.mxu0 0.0
  %950 = vmatpush1.msra.mxu0 0.0
  %951 = vmatprep.subr.mxu0 0.0
  %952 = vmatpush1.msra.mxu0 0.0
  %953 = vmatprep.subr.mxu0 0.0
  %954 = vmatpush1.msra.mxu0 0.0
  %955 = vmatprep.subr.mxu0 0.0
  %956 = vmatpush1.msra.mxu0 0.0
  %957 = vmatprep.mubr.f32.mxu0 0.0
  %958 = vmatmul.mubr.f32.gmra.mrb[0].mxu0 %v891
  %v959 = vpop.f32.mrb[0].mxu0
  %v960 = vadd.f32 0.0, %v959
  %v961 = vpop.f32.mrb[0].mxu0
  %v962 = vadd.f32 0.0, %v961
  %963 = vdwg.mxu0
  %v966 = vcombine.low %v960, %v962
  %v968 = vunpack.c.l.s4 1983009808
  %v969 = vunpack.c.0.s8 %v968
  %v970 = vlaneseq
  %v971 = vshrl.u32 %v970, 7
  %v972 = vsub.s32 %v969, %v971
  %v973 = vrot.slane %v966, %v972
  %v975 = vadd.f32 %v889, %v973
  %v976 = vxor.u32 %v975, 2147483648
  %v977 = vmul.f32 %v976, 1.442695
  %v978 = vpow.pop %v977
  %v979 = vadd.f32 %v978, 1.0
  %v980 = vrcp.pop %v979
  %v981 = vmul.f32 1.0, %v980
  %v983 = vrot.slane %v975, 2
  %v985 = vtanh.pop %v983
  %986 = vrot.lane.b32.xlu0 %v975, 64
  %v987 = vpop.permute.xlu0 %986
  %v988 = vrot.slane %v987, 2
  %v990 = vxor.u32 %v988, 2147483648
  %v991 = vmul.f32 %v990, 1.442695
  %v992 = vpow.pop %v991
  %v993 = vadd.f32 %v992, 1.0
  %v994 = vrcp.pop %v993
  %v995 = vmul.f32 1.0, %v994
  %v996 = vmul.f32 %v981, %v879
  %v997 = vmul.f32 %v981, %v985
  %999 = vrot.lane.b32.xlu0 %v997, 64
  %v1000 = vpop.permute.xlu0 %999
  %v1002 = vadd.f32 %v996, %v1000
  %v1003 = vtanh.pop %v1002
  %1005 = vrot.lane.b32.xlu0 %v1003, 64
  %v1006 = vpop.permute.xlu0 %1005
  %v1008 = vmul.f32 %v995, %v1006
  %s1009 = scalar_lea.vmem %s2, 14
  %1010 = vst.msk [vmem:[%s1009] sm:$0x3] %vm148, %v1008
  // Predicated region
  $region10: #{conv_lstm_forward.7} parent=0 // pred_check
    _
  $region11: #{conv_lstm_forward.7} parent=0 // pred_check_branch
    %1012 = sbr.rel (0) target = $region13
  $region12: #{conv_lstm_forward.7} parent=0 // pred_region
    _
  $region13: #{conv_lstm_forward.7} parent=0 // pred_fallthru
    _
  // Predicated region
  $region14: #{conv_lstm_forward.7} parent=0 // pred_check
    _
  $region15: #{conv_lstm_forward.7} parent=0 // pred_check_branch
    %1014 = sbr.rel (0) target = $region17
  $region16: #{conv_lstm_forward.7} parent=0 // pred_region
    _
  $region17: #{conv_lstm_forward.7} parent=0 // pred_fallthru
    _

// kernel: conv_lstm_forward.9
$region0: #{conv_lstm_forward.9}
  #allocation0 [shape = 'u32[]', space=smem, size = 0x4, offset = 0x4, fixed_abs, tag = 'smem constant byte address 0x4 - core index']
  #allocation1 [shape = 'u32[144,128]{1,0:T(1,128)}', space=vmem, size = 0x12000, scoped, tag = 'internal scratch']
  %s0 = inlined_call_operand.vmem [shape: f32[2,64], index: 0, kind: input, shape index: {}]
  %s1 = inlined_call_operand.vmem [shape: f32[64,32], index: 1, kind: input, shape index: {}]
  %s2 = inlined_call_operand.vmem [shape: f32[1,32], index: 2, kind: input, shape index: {}]
  %s3 = inlined_call_operand.vmem [shape: f32[1,32], index: 3, kind: input, shape index: {}]
  %s4 = inlined_call_operand.vmem [shape: f32[1,32], index: 4, kind: input, shape index: {}]
  %s5 = inlined_call_operand.vmem [shape: f32[32,64], index: 5, kind: input, shape index: {}]
  %s6 = inlined_call_operand.vmem [shape: f32[1,64], index: 6, kind: input, shape index: {}]
  %s7 = inlined_call_operand.hbm [shape: f32[2,64], index: 7, kind: output, shape index: {}]
  %s8 = sld [smem:[#allocation0]]
  $region38: #{conv_lstm_forward.9} parent=0
    _
  %s10 = ssub.s32 1, %s8
  %s11 = scalar_select 0, %s10, %s8
  $region1: #{conv_lstm_forward.9} parent=0
    #allocation2 [shape = 'u8[1024]{0}', space=vmem, size = 0x400, scoped, tag = 'output window, operand 0, single buffered']
    #allocation3 [shape = 's32[1]{0}', space=sflag, size = 0x4, scoped, tag = 'scoped memory for conv_lstm_forward.9']
    %12 = vsyncpa [#allocation3], 0
    // Predicated region
    $region2: #{conv_lstm_forward.9} parent=1 // pred_check
      _
    $region3: #{conv_lstm_forward.9} parent=1 // pred_check_branch
      %14 = sbr.rel (0) target = $region5
    $region4: #{conv_lstm_forward.9} parent=1 // pred_region
      _
    $region5: #{conv_lstm_forward.9} parent=1 // pred_fallthru
      _
    // Predicated region
    $region6: #{conv_lstm_forward.9} parent=1 // pred_check
      _
    $region7: #{conv_lstm_forward.9} parent=1 // pred_check_branch
      %16 = sbr.rel (0) target = $region9
    $region8: #{conv_lstm_forward.9} parent=1 // pred_region
      _
    $region9: #{conv_lstm_forward.9} parent=1 // pred_fallthru
      _
    // Predicated region
    $region10: #{conv_lstm_forward.9} parent=1 // pred_check
      _
    $region11: #{conv_lstm_forward.9} parent=1 // pred_check_branch
      %18 = sbr.rel (0) target = $region13
    $region12: #{conv_lstm_forward.9} parent=1 // pred_region
      _
    $region13: #{conv_lstm_forward.9} parent=1 // pred_fallthru
      _
    // Predicated region
    $region14: #{conv_lstm_forward.9} parent=1 // pred_check
      _
    $region15: #{conv_lstm_forward.9} parent=1 // pred_check_branch
      %20 = sbr.rel (0) target = $region17
    $region16: #{conv_lstm_forward.9} parent=1 // pred_region
      _
    $region17: #{conv_lstm_forward.9} parent=1 // pred_fallthru
      _
    // Predicated region
    $region18: #{conv_lstm_forward.9} parent=1 // pred_check
      _
    $region19: #{conv_lstm_forward.9} parent=1 // pred_check_branch
      %22 = sbr.rel (0) target = $region21
    $region20: #{conv_lstm_forward.9} parent=1 // pred_region
      _
    $region21: #{conv_lstm_forward.9} parent=1 // pred_fallthru
      _
    // Predicated region
    $region22: #{conv_lstm_forward.9} parent=1 // pred_check
      _
    $region23: #{conv_lstm_forward.9} parent=1 // pred_check_branch
      %24 = sbr.rel (0) target = $region25
    $region24: #{conv_lstm_forward.9} parent=1 // pred_region
      _
    $region25: #{conv_lstm_forward.9} parent=1 // pred_fallthru
      _
    // Predicated region
    $region26: #{conv_lstm_forward.9} parent=1 // pred_check
      _
    $region27: #{conv_lstm_forward.9} parent=1 // pred_check_branch
      %26 = sbr.rel (0) target = $region29
    $region28: #{conv_lstm_forward.9} parent=1 // pred_region
      _
    $region29: #{conv_lstm_forward.9} parent=1 // pred_fallthru
      _
    %v27 = vld [vmem:[%s0] sm:$0x3]
    %v28 = vld [vmem:[%s1] sm:$0xff]
    %v29 = vld [vmem:[%s1 + $0x8] sm:$0xff]
    %v30 = vld [vmem:[%s1 + $0x10] sm:$0xff]
    %v31 = vld [vmem:[%s1 + $0x18] sm:$0xff]
    %v32 = vld [vmem:[%s1 + $0x20] sm:$0xff]
    %v33 = vld [vmem:[%s1 + $0x28] sm:$0xff]
    %v34 = vld [vmem:[%s1 + $0x30] sm:$0xff]
    %v35 = vld [vmem:[%s1 + $0x38] sm:$0xff]
    %v36 = vld [vmem:[%s2] sm:$0x1]
    %v38 = vlaneseq
    %v39 = vshrl.u32 %v38, 7
    %v40 = vsub.s32 0, %v39
    %v41 = vrot.slane %v36, %v40
    %vm43 = vcmask 523264
    %v45 = vsel %vm43, %v27, 0
    %47 = vmatprep.subr.mxu0 0.0
    %48 = vmatpush1.msra.mxu0 %v28
    %49 = vmatprep.subr.mxu0 0.0
    %50 = vmatpush1.msra.mxu0 %v29
    %51 = vmatprep.subr.mxu0 0.0
    %52 = vmatpush1.msra.mxu0 %v30
    %53 = vmatprep.subr.mxu0 0.0
    %54 = vmatpush1.msra.mxu0 %v31
    %55 = vmatprep.subr.mxu0 0.0
    %56 = vmatpush1.msra.mxu0 %v32
    %57 = vmatprep.subr.mxu0 0.0
    %58 = vmatpush1.msra.mxu0 %v33
    %59 = vmatprep.subr.mxu0 0.0
    %60 = vmatpush1.msra.mxu0 %v34
    %61 = vmatprep.subr.mxu0 0.0
    %62 = vmatpush1.msra.mxu0 %v35
    %63 = vmatprep.subr.mxu0 0.0
    %64 = vmatpush1.msra.mxu0 0.0
    %65 = vmatprep.subr.mxu0 0.0
    %66 = vmatpush1.msra.mxu0 0.0
    %67 = vmatprep.subr.mxu0 0.0
    %68 = vmatpush1.msra.mxu0 0.0
    %69 = vmatprep.subr.mxu0 0.0
    %70 = vmatpush1.msra.mxu0 0.0
    %71 = vmatprep.subr.mxu0 0.0
    %72 = vmatpush1.msra.mxu0 0.0
    %73 = vmatprep.subr.mxu0 0.0
    %74 = vmatpush1.msra.mxu0 0.0
    %75 = vmatprep.subr.mxu0 0.0
    %76 = vmatpush1.msra.mxu0 0.0
    %77 = vmatprep.subr.mxu0 0.0
    %78 = vmatpush1.msra.mxu0 0.0
    %79 = vmatprep.subr.mxu0 0.0
    %80 = vmatpush1.msra.mxu0 0.0
    %81 = vmatprep.subr.mxu0 0.0
    %82 = vmatpush1.msra.mxu0 0.0
    %83 = vmatprep.subr.mxu0 0.0
    %84 = vmatpush1.msra.mxu0 0.0
    %85 = vmatprep.subr.mxu0 0.0
    %86 = vmatpush1.msra.mxu0 0.0
    %87 = vmatprep.subr.mxu0 0.0
    %88 = vmatpush1.msra.mxu0 0.0
    %89 = vmatprep.subr.mxu0 0.0
    %90 = vmatpush1.msra.mxu0 0.0
    %91 = vmatprep.subr.mxu0 0.0
    %92 = vmatpush1.msra.mxu0 0.0
    %93 = vmatprep.subr.mxu0 0.0
    %94 = vmatpush1.msra.mxu0 0.0
    %95 = vmatprep.subr.mxu0 0.0
    %96 = vmatpush1.msra.mxu0 0.0
    %97 = vmatprep.subr.mxu0 0.0
    %98 = vmatpush1.msra.mxu0 0.0
    %99 = vmatprep.subr.mxu0 0.0
    %100 = vmatpush1.msra.mxu0 0.0
    %101 = vmatprep.subr.mxu0 0.0
    %102 = vmatpush1.msra.mxu0 0.0
    %103 = vmatprep.subr.mxu0 0.0
    %104 = vmatpush1.msra.mxu0 0.0
    %105 = vmatprep.subr.mxu0 0.0
    %106 = vmatpush1.msra.mxu0 0.0
    %107 = vmatprep.subr.mxu0 0.0
    %108 = vmatpush1.msra.mxu0 0.0
    %109 = vmatprep.subr.mxu0 0.0
    %110 = vmatpush1.msra.mxu0 0.0
    %111 = vmatprep.mubr.f32.mxu0 0.0
    %112 = vmatmul.mubr.f32.gmra.mrb[0].mxu0 %v45
    %v113 = vpop.f32.mrb[0].mxu0
    %v114 = vadd.f32 %v41, %v113
    %v115 = vpop.f32.mrb[0].mxu0
    %116 = vdwg.mxu0
    %vm117 = vcmask 254976
    %v118 = vsel %vm117, %v114, 0.0
    %v119 = vrot.slane %v118, 4
    %v120 = vadd.f32 %v118, %v119
    %v121 = vrot.slane %v120, 2
    %v122 = vadd.f32 %v120, %v121
    %v123 = vrot.slane %v122, 1
    %v124 = vadd.f32 %v122, %v123
    %v125 = vrcp.pop 2.0
    %v126 = vmul.f32 %v124, %v125
    %v127 = vsub.f32 %v114, %v126
    %v128 = vmul.f32 %v127, %v127
    %v129 = vsel %vm117, %v128, 0.0
    %v130 = vrot.slane %v129, 4
    %v131 = vadd.f32 %v129, %v130
    %v132 = vrot.slane %v131, 2
    %v133 = vadd.f32 %v131, %v132
    %v134 = vrot.slane %v133, 1
    %v135 = vadd.f32 %v133, %v134
    %v136 = vmul.f32 %v135, %v125
    %v137 = vadd.f32 %v136, 1e-05
    %v138 = vrsqrt.pop %v137
    %v139 = vmul.f32 %v127, %v138
    %v140 = vld [vmem:[%s3] sm:$0x1]
    %v142 = vlaneseq
    %v143 = vshrl.u32 %v142, 7
    %v144 = vsub.s32 0, %v143
    %v145 = vrot.slane %v140, %v144
    %v147 = vmul.f32 %v139, %v145
    %v148 = vld [vmem:[%s4] sm:$0x1]
    %v150 = vlaneseq
    %v151 = vshrl.u32 %v150, 7
    %v152 = vsub.s32 0, %v151
    %v153 = vrot.slane %v148, %v152
    %v155 = vadd.f32 %v147, %v153
    %v156 = vmax.f32 %v155, 0.0
    %v157 = vld [vmem:[%s5] sm:$0xff]
    %v158 = vld [vmem:[%s5 + $0x8] sm:$0xff]
    %v159 = vld [vmem:[%s5 + $0x10] sm:$0xff]
    %v160 = vld [vmem:[%s5 + $0x18] sm:$0xff]
    %v161 = vld [vmem:[%s6] sm:$0x1]
    %v163 = vlaneseq
    %v164 = vshrl.u32 %v163, 7
    %v165 = vsub.s32 0, %v164
    %v166 = vrot.slane %v161, %v165
    %vm168 = vcmask 261120
    %v170 = vsel %vm168, %v156, 0
    %172 = vmatprep.subr.mxu0 0.0
    %173 = vmatpush1.msra.mxu0 %v157
    %174 = vmatprep.subr.mxu0 0.0
    %175 = vmatpush1.msra.mxu0 %v158
    %176 = vmatprep.subr.mxu0 0.0
    %177 = vmatpush1.msra.mxu0 %v159
    %178 = vmatprep.subr.mxu0 0.0
    %179 = vmatpush1.msra.mxu0 %v160
    %180 = vmatprep.subr.mxu0 0.0
    %181 = vmatpush1.msra.mxu0 0.0
    %182 = vmatprep.subr.mxu0 0.0
    %183 = vmatpush1.msra.mxu0 0.0
    %184 = vmatprep.subr.mxu0 0.0
    %185 = vmatpush1.msra.mxu0 0.0
    %186 = vmatprep.subr.mxu0 0.0
    %187 = vmatpush1.msra.mxu0 0.0
    %188 = vmatprep.subr.mxu0 0.0
    %189 = vmatpush1.msra.mxu0 0.0
    %190 = vmatprep.subr.mxu0 0.0
    %191 = vmatpush1.msra.mxu0 0.0
    %192 = vmatprep.subr.mxu0 0.0
    %193 = vmatpush1.msra.mxu0 0.0
    %194 = vmatprep.subr.mxu0 0.0
    %195 = vmatpush1.msra.mxu0 0.0
    %196 = vmatprep.subr.mxu0 0.0
    %197 = vmatpush1.msra.mxu0 0.0
    %198 = vmatprep.subr.mxu0 0.0
    %199 = vmatpush1.msra.mxu0 0.0
    %200 = vmatprep.subr.mxu0 0.0
    %201 = vmatpush1.msra.mxu0 0.0
    %202 = vmatprep.subr.mxu0 0.0
    %203 = vmatpush1.msra.mxu0 0.0
    %204 = vmatprep.subr.mxu0 0.0
    %205 = vmatpush1.msra.mxu0 0.0
    %206 = vmatprep.subr.mxu0 0.0
    %207 = vmatpush1.msra.mxu0 0.0
    %208 = vmatprep.subr.mxu0 0.0
    %209 = vmatpush1.msra.mxu0 0.0
    %210 = vmatprep.subr.mxu0 0.0
    %211 = vmatpush1.msra.mxu0 0.0
    %212 = vmatprep.subr.mxu0 0.0
    %213 = vmatpush1.msra.mxu0 0.0
    %214 = vmatprep.subr.mxu0 0.0
    %215 = vmatpush1.msra.mxu0 0.0
    %216 = vmatprep.subr.mxu0 0.0
    %217 = vmatpush1.msra.mxu0 0.0
    %218 = vmatprep.subr.mxu0 0.0
    %219 = vmatpush1.msra.mxu0 0.0
    %220 = vmatprep.subr.mxu0 0.0
    %221 = vmatpush1.msra.mxu0 0.0
    %222 = vmatprep.subr.mxu0 0.0
    %223 = vmatpush1.msra.mxu0 0.0
    %224 = vmatprep.subr.mxu0 0.0
    %225 = vmatpush1.msra.mxu0 0.0
    %226 = vmatprep.subr.mxu0 0.0
    %227 = vmatpush1.msra.mxu0 0.0
    %228 = vmatprep.subr.mxu0 0.0
    %229 = vmatpush1.msra.mxu0 0.0
    %230 = vmatprep.subr.mxu0 0.0
    %231 = vmatpush1.msra.mxu0 0.0
    %232 = vmatprep.subr.mxu0 0.0
    %233 = vmatpush1.msra.mxu0 0.0
    %234 = vmatprep.subr.mxu0 0.0
    %235 = vmatpush1.msra.mxu0 0.0
    %236 = vmatprep.mubr.f32.mxu0 0.0
    %237 = vmatmul.mubr.f32.gmra.mrb[0].mxu0 %v170
    %v238 = vpop.f32.mrb[0].mxu0
    %v239 = vadd.f32 %v166, %v238
    %v240 = vpop.f32.mrb[0].mxu0
    %241 = vdwg.mxu0
    %vm242 = vcmask 517120
    %243 = vst.msk [vmem:[#allocation2] sm:$0x3] %vm242, %v239
    // Predicated region
    $region30: #{conv_lstm_forward.9} parent=1 // pred_check
      _
    $region31: #{conv_lstm_forward.9} parent=1 // pred_check_branch
      %245 = sbr.rel (0) target = $region33
    $region32: #{conv_lstm_forward.9} parent=1 // pred_region
      %s247 = ssub.s32 32, 32
      %248 = vsyncadd [#allocation3], %s247
      %s250 = sshll.u32 [#allocation2], 4
      %s251 = int_to_ptr.vmem [resolvable:$true] %s250
      %253 = dma.vmem_to_hbm [thread:$0]  %s251, 32, %s7, [#allocation3]
    $region33: #{conv_lstm_forward.9} parent=1 // pred_fallthru
      _
    // Predicated region
    $region34: #{conv_lstm_forward.9} parent=1 // pred_check
      _
    $region35: #{conv_lstm_forward.9} parent=1 // pred_check_branch
      %255 = sbr.rel (0) target = $region37
    $region36: #{conv_lstm_forward.9} parent=1 // pred_region
      %256 = dma.done [#allocation3], 32
    $region37: #{conv_lstm_forward.9} parent=1 // pred_fallthru
      _
    %257 = vsyncpa [#allocation3], 1

</llo_original>
